<compile_context>
chip_gen: v7x
topology: tpu7x:2x2x1
jax: 0.10.0
libtpu: 0.0.40
codegen_flags: <defaults>
</compile_context>

<pallas_src>
import jax
import jax.numpy as jnp
from jax.experimental import pallas as pl
from jax.experimental.pallas import tpu as pltpu


INPUT_SIZE = 784
RNN1_HIDDEN = 100
RNN1_LAYERS = 3
RNN2_HIDDEN = 10


def _round_up(n, m):
    return ((n + m - 1) // m) * m


def _make_fused_kernel(T, L1, BP, HP):
    """Kernel closure over static sizes: T time steps, L1 stacked rnn1 layers,
    BP padded batch (sublane multiple of 8), HP padded hidden (128 lanes)."""
    assert L1 == 3
    f32 = jnp.float32
    bf16 = jnp.bfloat16

    def kernel(x_ref,
               wih1_ref, whh1_ref, b1_ref,
               wih2_ref, whh2_ref, b2_ref,
               wih3_ref, whh3_ref, b3_ref,
               wih4_ref, whh4_ref, b4_ref,
               out2_ref, hn2_ref, pre_ref):

        # Hoisted layer-1 input projection for ALL time steps: one big MXU
        # matmul, streamed straight into VMEM scratch (bounded live range).
        pre_ref[...] = (
            jnp.dot(x_ref[...], wih1_ref[...], preferred_element_type=f32)
            + b1_ref[...])

        whh1 = whh1_ref[...]
        wih2 = wih2_ref[...]; whh2 = whh2_ref[...]; b2 = b2_ref[...]
        wih3 = wih3_ref[...]; whh3 = whh3_ref[...]; b3 = b3_ref[...]

        def step(pre, h, w_hh, first):
            # First step of a layer: h == 0, skip the pointless h @ W_hh.
            if first:
                return jnp.maximum(pre, 0.0)
            rec = jnp.dot(h.astype(bf16), w_hh, preferred_element_type=f32)
            return jnp.maximum(pre + rec, 0.0)

        zero = jnp.zeros((BP, HP), f32)
        h1 = h2 = h3 = zero

        # Wavefront over the 3 stacked rnn1 layers.  Every read below uses the
        # pre-update h1/h2/h3, so the per-wavefront matmuls are independent.
        for s in range(T + 2):
            t1, t2, t3 = s, s - 1, s - 2
            n1 = n2 = n3 = None
            if 0 <= t2 < T:      # layer 2 step t2 consumes h1_{t2}
                pre2 = jnp.dot(h1.astype(bf16), wih2,
                               preferred_element_type=f32) + b2
                n2 = step(pre2, h2, whh2, first=(t2 == 0))
            if 0 <= t3 < T:      # layer 3 step t3 consumes h2_{t3}
                pre3 = jnp.dot(h2.astype(bf16), wih3,
                               preferred_element_type=f32) + b3
                n3 = step(pre3, h3, whh3, first=(t3 == 0))
            if 0 <= t1 < T:      # layer 1 step t1 consumes hoisted pre1[t1]
                pre1 = pre_ref[t1 * BP:(t1 + 1) * BP, :]
                n1 = step(pre1, h1, whh1, first=(t1 == 0))
            if n1 is not None:
                h1 = n1
            if n2 is not None:
                h2 = n2
            if n3 is not None:
                h3 = n3

        # rnn2: single layer over the length-3 "sequence" h_n1 = (h1, h2, h3)
        # (matches torch: rnn2(rnn1(x)[1])).  The 3 input projections are
        # independent; only the tiny recurrence is serial.  Outputs and the
        # final hidden state are written exactly once.
        wih4 = wih4_ref[...]; whh4 = whh4_ref[...]; b4 = b4_ref[...]
        p0 = jnp.dot(h1.astype(bf16), wih4, preferred_element_type=f32) + b4
        p1 = jnp.dot(h2.astype(bf16), wih4, preferred_element_type=f32) + b4
        p2 = jnp.dot(h3.astype(bf16), wih4, preferred_element_type=f32) + b4
        o0 = jnp.maximum(p0, 0.0)
        o1 = jnp.maximum(
            p1 + jnp.dot(o0.astype(bf16), whh4, preferred_element_type=f32), 0.0)
        o2 = jnp.maximum(
            p2 + jnp.dot(o1.astype(bf16), whh4, preferred_element_type=f32), 0.0)
        out2_ref[0 * BP:1 * BP, :] = o0
        out2_ref[1 * BP:2 * BP, :] = o1
        out2_ref[2 * BP:3 * BP, :] = o2
        hn2_ref[...] = o2

    return kernel


def _prep_layer(w_ih, w_hh, b_ih, b_hh, d_pad, h_pad):
    """Transpose torch-layout RNN weights, zero-pad to lane-dense shapes, and
    cast the MXU operands to bf16 (padding is exact 0, so padded lanes of the
    relu recurrence stay exactly 0)."""
    h, d_in = w_ih.shape
    wih = (jnp.zeros((d_pad, h_pad), jnp.float32)
           .at[:d_in, :h].set(w_ih.T).astype(jnp.bfloat16))
    whh = (jnp.zeros((h_pad, h_pad), jnp.float32)
           .at[:h, :h].set(w_hh.T).astype(jnp.bfloat16))
    b = jnp.zeros((1, h_pad), jnp.float32).at[0, :h].set(b_ih + b_hh)
    return [wih, whh, b]


def prepare_rnn_params(rnn1_params, rnn2_params, input_size=INPUT_SIZE, h_pad=128):
    """Materialize padded / transposed / bf16 kernel weights ONCE at init."""
    d_pad = _round_up(input_size, 128)           # 784 -> 896 (lane-dense K)
    prepped = []
    prepped += _prep_layer(*rnn1_params[0], d_pad=d_pad, h_pad=h_pad)
    prepped += _prep_layer(*rnn1_params[1], d_pad=h_pad, h_pad=h_pad)
    prepped += _prep_layer(*rnn1_params[2], d_pad=h_pad, h_pad=h_pad)
    prepped += _prep_layer(*rnn2_params[0], d_pad=h_pad, h_pad=h_pad)
    return tuple(prepped)


def _vmem_limit_bytes(T, BP, HP, DP, L1):
    x_b = T * BP * DP * 2                                   # bf16 input
    w_b = (DP * HP + 7 * HP * HP) * 2 + 4 * HP * 4          # bf16 W, f32 b
    pre_b = T * BP * HP * 4                                  # f32 scratch
    out_b = (L1 + 1) * BP * HP * 4                           # f32 outputs
    total = x_b + w_b + pre_b + out_b
    # Generous headroom; floor at v5e's scoped default, cap under v7x's
    # 64 MiB physical VMEM.
    return int(min(48 * 2**20, max(16 * 2**20, 2 * total)))


def rnn_model_forward(x, prepared_params):
    """x: (T, B, 784) time-major (torch nn.RNN default layout).
    Returns (out2 (3, B, 10), h_n2 (1, B, 10)) == rnn2(rnn1(x)[1])."""
    T, B, D = x.shape
    L1, H2, HP = RNN1_LAYERS, RNN2_HIDDEN, 128
    DP = _round_up(D, 128)
    BP = _round_up(max(B, 8), 8)
    assert prepared_params[0].shape[0] == DP

    # Pad batch -> sublane-dense, input dim -> lane-dense, cast to bf16, and
    # flatten time into rows: row index = t * BP + b.
    x_p = (jnp.zeros((T, BP, DP), jnp.bfloat16)
           .at[:, :B, :D].set(x.astype(jnp.bfloat16)))
    x_flat = x_p.reshape(T * BP, DP)

    kernel = _make_fused_kernel(T, L1, BP, HP)
    vmem = pltpu.MemorySpace.VMEM

    # TODO(synk): for B >= ~16 on v7x, add a batch-parallel grid axis
    # (dimension_semantics=("parallel",)) so both TensorCores are used.
    # TODO(synk): for large T*B, tile the layer-1 input projection over a
    # time-chunked grid with BlockSpec auto-pipelining on x instead of
    # keeping all of x resident in VMEM.
    out2_flat, hn2_flat = pl.pallas_call(
        kernel,
        out_shape=(jax.ShapeDtypeStruct((L1 * BP, HP), jnp.float32),
                   jax.ShapeDtypeStruct((BP, HP), jnp.float32)),
        in_specs=[pl.BlockSpec(memory_space=vmem) for _ in range(13)],
        out_specs=(pl.BlockSpec(memory_space=vmem),
                   pl.BlockSpec(memory_space=vmem)),
        scratch_shapes=[pltpu.VMEM((T * BP, HP), jnp.float32)],  # layer-1 pre
        compiler_params=pltpu.CompilerParams(
            vmem_limit_bytes=_vmem_limit_bytes(T, BP, HP, DP, L1)),
    )(x_flat, *prepared_params)

    out2 = out2_flat.reshape(L1, BP, HP)[:, :B, :H2]
    h_n2 = hn2_flat[:B, :H2][None]
    return out2, h_n2


def init_rnn_params(key, input_size, hidden_size, num_layers):
    """Matches torch.nn.RNN param shapes; uniform(-1/sqrt(H), 1/sqrt(H))."""
    bound = 1.0 / jnp.sqrt(jnp.float32(hidden_size))
    layers = []
    for l in range(num_layers):
        d_in = input_size if l == 0 else hidden_size
        key, k1, k2, k3, k4 = jax.random.split(key, 5)
        w_ih = jax.random.uniform(k1, (hidden_size, d_in), jnp.float32, -bound, bound)
        w_hh = jax.random.uniform(k2, (hidden_size, hidden_size), jnp.float32, -bound, bound)
        b_ih = jax.random.uniform(k3, (hidden_size,), jnp.float32, -bound, bound)
        b_hh = jax.random.uniform(k4, (hidden_size,), jnp.float32, -bound, bound)
        layers.append((w_ih, w_hh, b_ih, b_hh))
    return key, layers


# ------------------- pure-JAX references (correctness checks) -------------------
def _rnn_layer_ref_f32(x, w_ih, w_hh, b_ih, b_hh):
    T, B, _ = x.shape
    H = w_ih.shape[0]
    h = jnp.zeros((B, H), jnp.float32)
    outs = []
    for t in range(T):
        h = jax.nn.relu(
            jnp.dot(x[t], w_ih.T, precision=jax.lax.Precision.HIGHEST) + b_ih
            + jnp.dot(h, w_hh.T, precision=jax.lax.Precision.HIGHEST) + b_hh)
        outs.append(h)
    return jnp.stack(outs), h


def rnn_model_ref_f32(x, rnn1_params, rnn2_params):
    inp = x
    h_fin = []
    for p in rnn1_params:
        inp, h = _rnn_layer_ref_f32(inp, *p)
        h_fin.append(h)
    hn1 = jnp.stack(h_fin)
    out2, h4 = _rnn_layer_ref_f32(hn1, *rnn2_params[0])
    return out2, h4[None]


def _bf16_mm(a, b):
    return jnp.dot(a.astype(jnp.bfloat16), b.astype(jnp.bfloat16),
                   preferred_element_type=jnp.float32)


def _rnn_layer_ref_bf16(x, w_ih, w_hh, b_ih, b_hh):
    # Mirrors the kernel's numeric pipeline: bf16 MXU operands, f32
    # accumulation, f32 bias / relu / recurrent state.
    T, B, _ = x.shape
    H = w_ih.shape[0]
    b = (b_ih + b_hh).astype(jnp.float32)
    h = jnp.zeros((B, H), jnp.float32)
    outs = []
    for t in range(T):
        h = jax.nn.relu(_bf16_mm(x[t], w_ih.T) + b + _bf16_mm(h, w_hh.T))
        outs.append(h)
    return jnp.stack(outs), h


def rnn_model_ref_bf16(x, rnn1_params, rnn2_params):
    inp = x
    h_fin = []
    for p in rnn1_params:
        inp, h = _rnn_layer_ref_bf16(inp, *p)
        h_fin.append(h)
    hn1 = jnp.stack(h_fin)
    out2, h4 = _rnn_layer_ref_bf16(hn1, *rnn2_params[0])
    return out2, h4[None]


if __name__ == "__main__":
    key = jax.random.PRNGKey(0)

    # Time-major input consistent with nn.RNN(784, ...): (seq, batch, 784)
    T, B = 8, 2
    key, kx = jax.random.split(key)
    x = jax.random.normal(kx, (T, B, INPUT_SIZE), jnp.float32)

    key, rnn1_params = init_rnn_params(key, INPUT_SIZE, RNN1_HIDDEN, RNN1_LAYERS)
    key, rnn2_params = init_rnn_params(key, RNN1_HIDDEN, RNN2_HIDDEN, 1)

    # Weight prep (transpose + pad + bf16 cast) happens exactly once.
    prepared = prepare_rnn_params(rnn1_params, rnn2_params, INPUT_SIZE)

    fwd = jax.jit(rnn_model_forward)
    out2, h_n2 = fwd(x, prepared)
    jax.block_until_ready((out2, h_n2))

    assert out2.shape == (RNN1_LAYERS, B, RNN2_HIDDEN), out2.shape
    assert h_n2.shape == (1, B, RNN2_HIDDEN), h_n2.shape

    # Tight check vs. a reference using the SAME numeric pipeline (bf16 MXU
    # operands, f32 accumulation) -- validates the kernel structure.
    rb_out2, rb_hn2 = rnn_model_ref_bf16(x, rnn1_params, rnn2_params)
    assert jnp.allclose(out2, rb_out2, rtol=5e-3, atol=5e-3)
    assert jnp.allclose(h_n2, rb_hn2, rtol=5e-3, atol=5e-3)

    # Looser sanity check vs. the full-f32 reference (bf16 operand rounding
    # accumulates through 4 stacked relu-RNN layers).
    rf_out2, rf_hn2 = rnn_model_ref_f32(x, rnn1_params, rnn2_params)
    assert jnp.allclose(out2, rf_out2, rtol=1e-1, atol=1e-1)
    assert jnp.allclose(h_n2, rf_hn2, rtol=1e-1, atol=1e-1)

    print("KERNEL_OK")
</pallas_src>

<mosaic_0001>
module attributes {stable_mosaic.version = 11 : i64} {
  func.func @kernel(%arg0: memref<64x896xbf16, #tpu.memory_space<vmem>>, %arg1: memref<896x128xbf16, #tpu.memory_space<vmem>>, %arg2: memref<128x128xbf16, #tpu.memory_space<vmem>>, %arg3: memref<1x128xf32, #tpu.memory_space<vmem>>, %arg4: memref<128x128xbf16, #tpu.memory_space<vmem>>, %arg5: memref<128x128xbf16, #tpu.memory_space<vmem>>, %arg6: memref<1x128xf32, #tpu.memory_space<vmem>>, %arg7: memref<128x128xbf16, #tpu.memory_space<vmem>>, %arg8: memref<128x128xbf16, #tpu.memory_space<vmem>>, %arg9: memref<1x128xf32, #tpu.memory_space<vmem>>, %arg10: memref<128x128xbf16, #tpu.memory_space<vmem>>, %arg11: memref<128x128xbf16, #tpu.memory_space<vmem>>, %arg12: memref<1x128xf32, #tpu.memory_space<vmem>>, %arg13: memref<24x128xf32, #tpu.memory_space<vmem>>, %arg14: memref<8x128xf32, #tpu.memory_space<vmem>>, %arg15: memref<64x128xf32, #tpu.memory_space<vmem>>) attributes {dimension_semantics = [], scalar_prefetch = 0 : i64, scratch_operands = 1 : i64, tpu.core_type = #tpu.core_type<tc>} {
    %c0 = arith.constant 0 : index
    %c0_0 = arith.constant 0 : index
    %0 = vector.load %arg0[%c0, %c0_0] : memref<64x896xbf16, #tpu.memory_space<vmem>>, vector<64x896xbf16>
    %c0_1 = arith.constant 0 : index
    %c0_2 = arith.constant 0 : index
    %1 = vector.load %arg1[%c0_1, %c0_2] : memref<896x128xbf16, #tpu.memory_space<vmem>>, vector<896x128xbf16>
    %cst = arith.constant dense<0.000000e+00> : vector<64x128xf32>
    %2 = tpu.matmul %0, %1, %cst {dimension_numbers = #tpu.dot_dimension_numbers<[1], [0], [0], [1], [0, 0, 1, 1], [], []>} : vector<64x896xbf16>, vector<896x128xbf16>, vector<64x128xf32> -> vector<64x128xf32>
    %c0_3 = arith.constant 0 : index
    %c0_4 = arith.constant 0 : index
    %3 = vector.load %arg3[%c0_3, %c0_4] : memref<1x128xf32, #tpu.memory_space<vmem>>, vector<1x128xf32>
    %4 = vector.broadcast %3 : vector<1x128xf32> to vector<64x128xf32>
    %5 = arith.addf %2, %4 : vector<64x128xf32>
    %c0_5 = arith.constant 0 : index
    %c0_6 = arith.constant 0 : index
    %6 = vector.load %arg15[%c0_5, %c0_6] : memref<64x128xf32, #tpu.memory_space<vmem>>, vector<64x128xf32>
    tpu.vector_store %arg15[%c0_5, %c0_6], %5 {strides = array<i32>} : memref<64x128xf32, #tpu.memory_space<vmem>>, vector<64x128xf32>,
    %c0_7 = arith.constant 0 : index
    %c0_8 = arith.constant 0 : index
    %7 = vector.load %arg2[%c0_7, %c0_8] : memref<128x128xbf16, #tpu.memory_space<vmem>>, vector<128x128xbf16>
    %c0_9 = arith.constant 0 : index
    %c0_10 = arith.constant 0 : index
    %8 = vector.load %arg4[%c0_9, %c0_10] : memref<128x128xbf16, #tpu.memory_space<vmem>>, vector<128x128xbf16>
    %c0_11 = arith.constant 0 : index
    %c0_12 = arith.constant 0 : index
    %9 = vector.load %arg5[%c0_11, %c0_12] : memref<128x128xbf16, #tpu.memory_space<vmem>>, vector<128x128xbf16>
    %c0_13 = arith.constant 0 : index
    %c0_14 = arith.constant 0 : index
    %10 = vector.load %arg6[%c0_13, %c0_14] : memref<1x128xf32, #tpu.memory_space<vmem>>, vector<1x128xf32>
    %c0_15 = arith.constant 0 : index
    %c0_16 = arith.constant 0 : index
    %11 = vector.load %arg7[%c0_15, %c0_16] : memref<128x128xbf16, #tpu.memory_space<vmem>>, vector<128x128xbf16>
    %c0_17 = arith.constant 0 : index
    %c0_18 = arith.constant 0 : index
    %12 = vector.load %arg8[%c0_17, %c0_18] : memref<128x128xbf16, #tpu.memory_space<vmem>>, vector<128x128xbf16>
    %c0_19 = arith.constant 0 : index
    %c0_20 = arith.constant 0 : index
    %13 = vector.load %arg9[%c0_19, %c0_20] : memref<1x128xf32, #tpu.memory_space<vmem>>, vector<1x128xf32>
    %c0_21 = arith.constant 0 : index
    %c0_22 = arith.constant 0 : index
    %14 = vector.load %arg15[%c0_21, %c0_22] : memref<64x128xf32, #tpu.memory_space<vmem>>, vector<8x128xf32>
    %cst_23 = arith.constant 0.000000e+00 : f32
    %15 = vector.broadcast %cst_23 : f32 to vector<8x128xf32>
    %16 = arith.maximumf %14, %15 : vector<8x128xf32>
    %17 = arith.truncf %16 : vector<8x128xf32> to vector<8x128xbf16>
    %cst_24 = arith.constant dense<0.000000e+00> : vector<8x128xf32>
    %18 = tpu.matmul %17, %8, %cst_24 {dimension_numbers = #tpu.dot_dimension_numbers<[1], [0], [0], [1], [0, 0, 1, 1], [], []>} : vector<8x128xbf16>, vector<128x128xbf16>, vector<8x128xf32> -> vector<8x128xf32>
    %19 = vector.broadcast %10 : vector<1x128xf32> to vector<8x128xf32>
    %20 = arith.addf %18, %19 : vector<8x128xf32>
    %cst_25 = arith.constant 0.000000e+00 : f32
    %21 = vector.broadcast %cst_25 : f32 to vector<8x128xf32>
    %22 = arith.maximumf %20, %21 : vector<8x128xf32>
    %c8 = arith.constant 8 : index
    %c0_26 = arith.constant 0 : index
    %23 = vector.load %arg15[%c8, %c0_26] : memref<64x128xf32, #tpu.memory_space<vmem>>, vector<8x128xf32>
    %24 = arith.truncf %16 : vector<8x128xf32> to vector<8x128xbf16>
    %cst_27 = arith.constant dense<0.000000e+00> : vector<8x128xf32>
    %25 = tpu.matmul %24, %7, %cst_27 {dimension_numbers = #tpu.dot_dimension_numbers<[1], [0], [0], [1], [0, 0, 1, 1], [], []>} : vector<8x128xbf16>, vector<128x128xbf16>, vector<8x128xf32> -> vector<8x128xf32>
    %26 = arith.addf %23, %25 : vector<8x128xf32>
    %cst_28 = arith.constant 0.000000e+00 : f32
    %27 = vector.broadcast %cst_28 : f32 to vector<8x128xf32>
    %28 = arith.maximumf %26, %27 : vector<8x128xf32>
    %29 = arith.truncf %28 : vector<8x128xf32> to vector<8x128xbf16>
    %cst_29 = arith.constant dense<0.000000e+00> : vector<8x128xf32>
    %30 = tpu.matmul %29, %8, %cst_29 {dimension_numbers = #tpu.dot_dimension_numbers<[1], [0], [0], [1], [0, 0, 1, 1], [], []>} : vector<8x128xbf16>, vector<128x128xbf16>, vector<8x128xf32> -> vector<8x128xf32>
    %31 = vector.broadcast %10 : vector<1x128xf32> to vector<8x128xf32>
    %32 = arith.addf %30, %31 : vector<8x128xf32>
    %33 = arith.truncf %22 : vector<8x128xf32> to vector<8x128xbf16>
    %cst_30 = arith.constant dense<0.000000e+00> : vector<8x128xf32>
    %34 = tpu.matmul %33, %9, %cst_30 {dimension_numbers = #tpu.dot_dimension_numbers<[1], [0], [0], [1], [0, 0, 1, 1], [], []>} : vector<8x128xbf16>, vector<128x128xbf16>, vector<8x128xf32> -> vector<8x128xf32>
    %35 = arith.addf %32, %34 : vector<8x128xf32>
    %cst_31 = arith.constant 0.000000e+00 : f32
    %36 = vector.broadcast %cst_31 : f32 to vector<8x128xf32>
    %37 = arith.maximumf %35, %36 : vector<8x128xf32>
    %38 = arith.truncf %22 : vector<8x128xf32> to vector<8x128xbf16>
    %cst_32 = arith.constant dense<0.000000e+00> : vector<8x128xf32>
    %39 = tpu.matmul %38, %11, %cst_32 {dimension_numbers = #tpu.dot_dimension_numbers<[1], [0], [0], [1], [0, 0, 1, 1], [], []>} : vector<8x128xbf16>, vector<128x128xbf16>, vector<8x128xf32> -> vector<8x128xf32>
    %40 = vector.broadcast %13 : vector<1x128xf32> to vector<8x128xf32>
    %41 = arith.addf %39, %40 : vector<8x128xf32>
    %cst_33 = arith.constant 0.000000e+00 : f32
    %42 = vector.broadcast %cst_33 : f32 to vector<8x128xf32>
    %43 = arith.maximumf %41, %42 : vector<8x128xf32>
    %c16 = arith.constant 16 : index
    %c0_34 = arith.constant 0 : index
    %44 = vector.load %arg15[%c16, %c0_34] : memref<64x128xf32, #tpu.memory_space<vmem>>, vector<8x128xf32>
    %45 = arith.truncf %28 : vector<8x128xf32> to vector<8x128xbf16>
    %cst_35 = arith.constant dense<0.000000e+00> : vector<8x128xf32>
    %46 = tpu.matmul %45, %7, %cst_35 {dimension_numbers = #tpu.dot_dimension_numbers<[1], [0], [0], [1], [0, 0, 1, 1], [], []>} : vector<8x128xbf16>, vector<128x128xbf16>, vector<8x128xf32> -> vector<8x128xf32>
    %47 = arith.addf %44, %46 : vector<8x128xf32>
    %cst_36 = arith.constant 0.000000e+00 : f32
    %48 = vector.broadcast %cst_36 : f32 to vector<8x128xf32>
    %49 = arith.maximumf %47, %48 : vector<8x128xf32>
    %50 = arith.truncf %49 : vector<8x128xf32> to vector<8x128xbf16>
    %cst_37 = arith.constant dense<0.000000e+00> : vector<8x128xf32>
    %51 = tpu.matmul %50, %8, %cst_37 {dimension_numbers = #tpu.dot_dimension_numbers<[1], [0], [0], [1], [0, 0, 1, 1], [], []>} : vector<8x128xbf16>, vector<128x128xbf16>, vector<8x128xf32> -> vector<8x128xf32>
    %52 = vector.broadcast %10 : vector<1x128xf32> to vector<8x128xf32>
    %53 = arith.addf %51, %52 : vector<8x128xf32>
    %54 = arith.truncf %37 : vector<8x128xf32> to vector<8x128xbf16>
    %cst_38 = arith.constant dense<0.000000e+00> : vector<8x128xf32>
    %55 = tpu.matmul %54, %9, %cst_38 {dimension_numbers = #tpu.dot_dimension_numbers<[1], [0], [0], [1], [0, 0, 1, 1], [], []>} : vector<8x128xbf16>, vector<128x128xbf16>, vector<8x128xf32> -> vector<8x128xf32>
    %56 = arith.addf %53, %55 : vector<8x128xf32>
    %cst_39 = arith.constant 0.000000e+00 : f32
    %57 = vector.broadcast %cst_39 : f32 to vector<8x128xf32>
    %58 = arith.maximumf %56, %57 : vector<8x128xf32>
    %59 = arith.truncf %37 : vector<8x128xf32> to vector<8x128xbf16>
    %cst_40 = arith.constant dense<0.000000e+00> : vector<8x128xf32>
    %60 = tpu.matmul %59, %11, %cst_40 {dimension_numbers = #tpu.dot_dimension_numbers<[1], [0], [0], [1], [0, 0, 1, 1], [], []>} : vector<8x128xbf16>, vector<128x128xbf16>, vector<8x128xf32> -> vector<8x128xf32>
    %61 = vector.broadcast %13 : vector<1x128xf32> to vector<8x128xf32>
    %62 = arith.addf %60, %61 : vector<8x128xf32>
    %63 = arith.truncf %43 : vector<8x128xf32> to vector<8x128xbf16>
    %cst_41 = arith.constant dense<0.000000e+00> : vector<8x128xf32>
    %64 = tpu.matmul %63, %12, %cst_41 {dimension_numbers = #tpu.dot_dimension_numbers<[1], [0], [0], [1], [0, 0, 1, 1], [], []>} : vector<8x128xbf16>, vector<128x128xbf16>, vector<8x128xf32> -> vector<8x128xf32>
    %65 = arith.addf %62, %64 : vector<8x128xf32>
    %cst_42 = arith.constant 0.000000e+00 : f32
    %66 = vector.broadcast %cst_42 : f32 to vector<8x128xf32>
    %67 = arith.maximumf %65, %66 : vector<8x128xf32>
    %c24 = arith.constant 24 : index
    %c0_43 = arith.constant 0 : index
    %68 = vector.load %arg15[%c24, %c0_43] : memref<64x128xf32, #tpu.memory_space<vmem>>, vector<8x128xf32>
    %69 = arith.truncf %49 : vector<8x128xf32> to vector<8x128xbf16>
    %cst_44 = arith.constant dense<0.000000e+00> : vector<8x128xf32>
    %70 = tpu.matmul %69, %7, %cst_44 {dimension_numbers = #tpu.dot_dimension_numbers<[1], [0], [0], [1], [0, 0, 1, 1], [], []>} : vector<8x128xbf16>, vector<128x128xbf16>, vector<8x128xf32> -> vector<8x128xf32>
    %71 = arith.addf %68, %70 : vector<8x128xf32>
    %cst_45 = arith.constant 0.000000e+00 : f32
    %72 = vector.broadcast %cst_45 : f32 to vector<8x128xf32>
    %73 = arith.maximumf %71, %72 : vector<8x128xf32>
    %74 = arith.truncf %73 : vector<8x128xf32> to vector<8x128xbf16>
    %cst_46 = arith.constant dense<0.000000e+00> : vector<8x128xf32>
    %75 = tpu.matmul %74, %8, %cst_46 {dimension_numbers = #tpu.dot_dimension_numbers<[1], [0], [0], [1], [0, 0, 1, 1], [], []>} : vector<8x128xbf16>, vector<128x128xbf16>, vector<8x128xf32> -> vector<8x128xf32>
    %76 = vector.broadcast %10 : vector<1x128xf32> to vector<8x128xf32>
    %77 = arith.addf %75, %76 : vector<8x128xf32>
    %78 = arith.truncf %58 : vector<8x128xf32> to vector<8x128xbf16>
    %cst_47 = arith.constant dense<0.000000e+00> : vector<8x128xf32>
    %79 = tpu.matmul %78, %9, %cst_47 {dimension_numbers = #tpu.dot_dimension_numbers<[1], [0], [0], [1], [0, 0, 1, 1], [], []>} : vector<8x128xbf16>, vector<128x128xbf16>, vector<8x128xf32> -> vector<8x128xf32>
    %80 = arith.addf %77, %79 : vector<8x128xf32>
    %cst_48 = arith.constant 0.000000e+00 : f32
    %81 = vector.broadcast %cst_48 : f32 to vector<8x128xf32>
    %82 = arith.maximumf %80, %81 : vector<8x128xf32>
    %83 = arith.truncf %58 : vector<8x128xf32> to vector<8x128xbf16>
    %cst_49 = arith.constant dense<0.000000e+00> : vector<8x128xf32>
    %84 = tpu.matmul %83, %11, %cst_49 {dimension_numbers = #tpu.dot_dimension_numbers<[1], [0], [0], [1], [0, 0, 1, 1], [], []>} : vector<8x128xbf16>, vector<128x128xbf16>, vector<8x128xf32> -> vector<8x128xf32>
    %85 = vector.broadcast %13 : vector<1x128xf32> to vector<8x128xf32>
    %86 = arith.addf %84, %85 : vector<8x128xf32>
    %87 = arith.truncf %67 : vector<8x128xf32> to vector<8x128xbf16>
    %cst_50 = arith.constant dense<0.000000e+00> : vector<8x128xf32>
    %88 = tpu.matmul %87, %12, %cst_50 {dimension_numbers = #tpu.dot_dimension_numbers<[1], [0], [0], [1], [0, 0, 1, 1], [], []>} : vector<8x128xbf16>, vector<128x128xbf16>, vector<8x128xf32> -> vector<8x128xf32>
    %89 = arith.addf %86, %88 : vector<8x128xf32>
    %cst_51 = arith.constant 0.000000e+00 : f32
    %90 = vector.broadcast %cst_51 : f32 to vector<8x128xf32>
    %91 = arith.maximumf %89, %90 : vector<8x128xf32>
    %c32 = arith.constant 32 : index
    %c0_52 = arith.constant 0 : index
    %92 = vector.load %arg15[%c32, %c0_52] : memref<64x128xf32, #tpu.memory_space<vmem>>, vector<8x128xf32>
    %93 = arith.truncf %73 : vector<8x128xf32> to vector<8x128xbf16>
    %cst_53 = arith.constant dense<0.000000e+00> : vector<8x128xf32>
    %94 = tpu.matmul %93, %7, %cst_53 {dimension_numbers = #tpu.dot_dimension_numbers<[1], [0], [0], [1], [0, 0, 1, 1], [], []>} : vector<8x128xbf16>, vector<128x128xbf16>, vector<8x128xf32> -> vector<8x128xf32>
    %95 = arith.addf %92, %94 : vector<8x128xf32>
    %cst_54 = arith.constant 0.000000e+00 : f32
    %96 = vector.broadcast %cst_54 : f32 to vector<8x128xf32>
    %97 = arith.maximumf %95, %96 : vector<8x128xf32>
    %98 = arith.truncf %97 : vector<8x128xf32> to vector<8x128xbf16>
    %cst_55 = arith.constant dense<0.000000e+00> : vector<8x128xf32>
    %99 = tpu.matmul %98, %8, %cst_55 {dimension_numbers = #tpu.dot_dimension_numbers<[1], [0], [0], [1], [0, 0, 1, 1], [], []>} : vector<8x128xbf16>, vector<128x128xbf16>, vector<8x128xf32> -> vector<8x128xf32>
    %100 = vector.broadcast %10 : vector<1x128xf32> to vector<8x128xf32>
    %101 = arith.addf %99, %100 : vector<8x128xf32>
    %102 = arith.truncf %82 : vector<8x128xf32> to vector<8x128xbf16>
    %cst_56 = arith.constant dense<0.000000e+00> : vector<8x128xf32>
    %103 = tpu.matmul %102, %9, %cst_56 {dimension_numbers = #tpu.dot_dimension_numbers<[1], [0], [0], [1], [0, 0, 1, 1], [], []>} : vector<8x128xbf16>, vector<128x128xbf16>, vector<8x128xf32> -> vector<8x128xf32>
    %104 = arith.addf %101, %103 : vector<8x128xf32>
    %cst_57 = arith.constant 0.000000e+00 : f32
    %105 = vector.broadcast %cst_57 : f32 to vector<8x128xf32>
    %106 = arith.maximumf %104, %105 : vector<8x128xf32>
    %107 = arith.truncf %82 : vector<8x128xf32> to vector<8x128xbf16>
    %cst_58 = arith.constant dense<0.000000e+00> : vector<8x128xf32>
    %108 = tpu.matmul %107, %11, %cst_58 {dimension_numbers = #tpu.dot_dimension_numbers<[1], [0], [0], [1], [0, 0, 1, 1], [], []>} : vector<8x128xbf16>, vector<128x128xbf16>, vector<8x128xf32> -> vector<8x128xf32>
    %109 = vector.broadcast %13 : vector<1x128xf32> to vector<8x128xf32>
    %110 = arith.addf %108, %109 : vector<8x128xf32>
    %111 = arith.truncf %91 : vector<8x128xf32> to vector<8x128xbf16>
    %cst_59 = arith.constant dense<0.000000e+00> : vector<8x128xf32>
    %112 = tpu.matmul %111, %12, %cst_59 {dimension_numbers = #tpu.dot_dimension_numbers<[1], [0], [0], [1], [0, 0, 1, 1], [], []>} : vector<8x128xbf16>, vector<128x128xbf16>, vector<8x128xf32> -> vector<8x128xf32>
    %113 = arith.addf %110, %112 : vector<8x128xf32>
    %cst_60 = arith.constant 0.000000e+00 : f32
    %114 = vector.broadcast %cst_60 : f32 to vector<8x128xf32>
    %115 = arith.maximumf %113, %114 : vector<8x128xf32>
    %c40 = arith.constant 40 : index
    %c0_61 = arith.constant 0 : index
    %116 = vector.load %arg15[%c40, %c0_61] : memref<64x128xf32, #tpu.memory_space<vmem>>, vector<8x128xf32>
    %117 = arith.truncf %97 : vector<8x128xf32> to vector<8x128xbf16>
    %cst_62 = arith.constant dense<0.000000e+00> : vector<8x128xf32>
    %118 = tpu.matmul %117, %7, %cst_62 {dimension_numbers = #tpu.dot_dimension_numbers<[1], [0], [0], [1], [0, 0, 1, 1], [], []>} : vector<8x128xbf16>, vector<128x128xbf16>, vector<8x128xf32> -> vector<8x128xf32>
    %119 = arith.addf %116, %118 : vector<8x128xf32>
    %cst_63 = arith.constant 0.000000e+00 : f32
    %120 = vector.broadcast %cst_63 : f32 to vector<8x128xf32>
    %121 = arith.maximumf %119, %120 : vector<8x128xf32>
    %122 = arith.truncf %121 : vector<8x128xf32> to vector<8x128xbf16>
    %cst_64 = arith.constant dense<0.000000e+00> : vector<8x128xf32>
    %123 = tpu.matmul %122, %8, %cst_64 {dimension_numbers = #tpu.dot_dimension_numbers<[1], [0], [0], [1], [0, 0, 1, 1], [], []>} : vector<8x128xbf16>, vector<128x128xbf16>, vector<8x128xf32> -> vector<8x128xf32>
    %124 = vector.broadcast %10 : vector<1x128xf32> to vector<8x128xf32>
    %125 = arith.addf %123, %124 : vector<8x128xf32>
    %126 = arith.truncf %106 : vector<8x128xf32> to vector<8x128xbf16>
    %cst_65 = arith.constant dense<0.000000e+00> : vector<8x128xf32>
    %127 = tpu.matmul %126, %9, %cst_65 {dimension_numbers = #tpu.dot_dimension_numbers<[1], [0], [0], [1], [0, 0, 1, 1], [], []>} : vector<8x128xbf16>, vector<128x128xbf16>, vector<8x128xf32> -> vector<8x128xf32>
    %128 = arith.addf %125, %127 : vector<8x128xf32>
    %cst_66 = arith.constant 0.000000e+00 : f32
    %129 = vector.broadcast %cst_66 : f32 to vector<8x128xf32>
    %130 = arith.maximumf %128, %129 : vector<8x128xf32>
    %131 = arith.truncf %106 : vector<8x128xf32> to vector<8x128xbf16>
    %cst_67 = arith.constant dense<0.000000e+00> : vector<8x128xf32>
    %132 = tpu.matmul %131, %11, %cst_67 {dimension_numbers = #tpu.dot_dimension_numbers<[1], [0], [0], [1], [0, 0, 1, 1], [], []>} : vector<8x128xbf16>, vector<128x128xbf16>, vector<8x128xf32> -> vector<8x128xf32>
    %133 = vector.broadcast %13 : vector<1x128xf32> to vector<8x128xf32>
    %134 = arith.addf %132, %133 : vector<8x128xf32>
    %135 = arith.truncf %115 : vector<8x128xf32> to vector<8x128xbf16>
    %cst_68 = arith.constant dense<0.000000e+00> : vector<8x128xf32>
    %136 = tpu.matmul %135, %12, %cst_68 {dimension_numbers = #tpu.dot_dimension_numbers<[1], [0], [0], [1], [0, 0, 1, 1], [], []>} : vector<8x128xbf16>, vector<128x128xbf16>, vector<8x128xf32> -> vector<8x128xf32>
    %137 = arith.addf %134, %136 : vector<8x128xf32>
    %cst_69 = arith.constant 0.000000e+00 : f32
    %138 = vector.broadcast %cst_69 : f32 to vector<8x128xf32>
    %139 = arith.maximumf %137, %138 : vector<8x128xf32>
    %c48 = arith.constant 48 : index
    %c0_70 = arith.constant 0 : index
    %140 = vector.load %arg15[%c48, %c0_70] : memref<64x128xf32, #tpu.memory_space<vmem>>, vector<8x128xf32>
    %141 = arith.truncf %121 : vector<8x128xf32> to vector<8x128xbf16>
    %cst_71 = arith.constant dense<0.000000e+00> : vector<8x128xf32>
    %142 = tpu.matmul %141, %7, %cst_71 {dimension_numbers = #tpu.dot_dimension_numbers<[1], [0], [0], [1], [0, 0, 1, 1], [], []>} : vector<8x128xbf16>, vector<128x128xbf16>, vector<8x128xf32> -> vector<8x128xf32>
    %143 = arith.addf %140, %142 : vector<8x128xf32>
    %cst_72 = arith.constant 0.000000e+00 : f32
    %144 = vector.broadcast %cst_72 : f32 to vector<8x128xf32>
    %145 = arith.maximumf %143, %144 : vector<8x128xf32>
    %146 = arith.truncf %145 : vector<8x128xf32> to vector<8x128xbf16>
    %cst_73 = arith.constant dense<0.000000e+00> : vector<8x128xf32>
    %147 = tpu.matmul %146, %8, %cst_73 {dimension_numbers = #tpu.dot_dimension_numbers<[1], [0], [0], [1], [0, 0, 1, 1], [], []>} : vector<8x128xbf16>, vector<128x128xbf16>, vector<8x128xf32> -> vector<8x128xf32>
    %148 = vector.broadcast %10 : vector<1x128xf32> to vector<8x128xf32>
    %149 = arith.addf %147, %148 : vector<8x128xf32>
    %150 = arith.truncf %130 : vector<8x128xf32> to vector<8x128xbf16>
    %cst_74 = arith.constant dense<0.000000e+00> : vector<8x128xf32>
    %151 = tpu.matmul %150, %9, %cst_74 {dimension_numbers = #tpu.dot_dimension_numbers<[1], [0], [0], [1], [0, 0, 1, 1], [], []>} : vector<8x128xbf16>, vector<128x128xbf16>, vector<8x128xf32> -> vector<8x128xf32>
    %152 = arith.addf %149, %151 : vector<8x128xf32>
    %cst_75 = arith.constant 0.000000e+00 : f32
    %153 = vector.broadcast %cst_75 : f32 to vector<8x128xf32>
    %154 = arith.maximumf %152, %153 : vector<8x128xf32>
    %155 = arith.truncf %130 : vector<8x128xf32> to vector<8x128xbf16>
    %cst_76 = arith.constant dense<0.000000e+00> : vector<8x128xf32>
    %156 = tpu.matmul %155, %11, %cst_76 {dimension_numbers = #tpu.dot_dimension_numbers<[1], [0], [0], [1], [0, 0, 1, 1], [], []>} : vector<8x128xbf16>, vector<128x128xbf16>, vector<8x128xf32> -> vector<8x128xf32>
    %157 = vector.broadcast %13 : vector<1x128xf32> to vector<8x128xf32>
    %158 = arith.addf %156, %157 : vector<8x128xf32>
    %159 = arith.truncf %139 : vector<8x128xf32> to vector<8x128xbf16>
    %cst_77 = arith.constant dense<0.000000e+00> : vector<8x128xf32>
    %160 = tpu.matmul %159, %12, %cst_77 {dimension_numbers = #tpu.dot_dimension_numbers<[1], [0], [0], [1], [0, 0, 1, 1], [], []>} : vector<8x128xbf16>, vector<128x128xbf16>, vector<8x128xf32> -> vector<8x128xf32>
    %161 = arith.addf %158, %160 : vector<8x128xf32>
    %cst_78 = arith.constant 0.000000e+00 : f32
    %162 = vector.broadcast %cst_78 : f32 to vector<8x128xf32>
    %163 = arith.maximumf %161, %162 : vector<8x128xf32>
    %c56 = arith.constant 56 : index
    %c0_79 = arith.constant 0 : index
    %164 = vector.load %arg15[%c56, %c0_79] : memref<64x128xf32, #tpu.memory_space<vmem>>, vector<8x128xf32>
    %165 = arith.truncf %145 : vector<8x128xf32> to vector<8x128xbf16>
    %cst_80 = arith.constant dense<0.000000e+00> : vector<8x128xf32>
    %166 = tpu.matmul %165, %7, %cst_80 {dimension_numbers = #tpu.dot_dimension_numbers<[1], [0], [0], [1], [0, 0, 1, 1], [], []>} : vector<8x128xbf16>, vector<128x128xbf16>, vector<8x128xf32> -> vector<8x128xf32>
    %167 = arith.addf %164, %166 : vector<8x128xf32>
    %cst_81 = arith.constant 0.000000e+00 : f32
    %168 = vector.broadcast %cst_81 : f32 to vector<8x128xf32>
    %169 = arith.maximumf %167, %168 : vector<8x128xf32>
    %170 = arith.truncf %169 : vector<8x128xf32> to vector<8x128xbf16>
    %cst_82 = arith.constant dense<0.000000e+00> : vector<8x128xf32>
    %171 = tpu.matmul %170, %8, %cst_82 {dimension_numbers = #tpu.dot_dimension_numbers<[1], [0], [0], [1], [0, 0, 1, 1], [], []>} : vector<8x128xbf16>, vector<128x128xbf16>, vector<8x128xf32> -> vector<8x128xf32>
    %172 = vector.broadcast %10 : vector<1x128xf32> to vector<8x128xf32>
    %173 = arith.addf %171, %172 : vector<8x128xf32>
    %174 = arith.truncf %154 : vector<8x128xf32> to vector<8x128xbf16>
    %cst_83 = arith.constant dense<0.000000e+00> : vector<8x128xf32>
    %175 = tpu.matmul %174, %9, %cst_83 {dimension_numbers = #tpu.dot_dimension_numbers<[1], [0], [0], [1], [0, 0, 1, 1], [], []>} : vector<8x128xbf16>, vector<128x128xbf16>, vector<8x128xf32> -> vector<8x128xf32>
    %176 = arith.addf %173, %175 : vector<8x128xf32>
    %cst_84 = arith.constant 0.000000e+00 : f32
    %177 = vector.broadcast %cst_84 : f32 to vector<8x128xf32>
    %178 = arith.maximumf %176, %177 : vector<8x128xf32>
    %179 = arith.truncf %154 : vector<8x128xf32> to vector<8x128xbf16>
    %cst_85 = arith.constant dense<0.000000e+00> : vector<8x128xf32>
    %180 = tpu.matmul %179, %11, %cst_85 {dimension_numbers = #tpu.dot_dimension_numbers<[1], [0], [0], [1], [0, 0, 1, 1], [], []>} : vector<8x128xbf16>, vector<128x128xbf16>, vector<8x128xf32> -> vector<8x128xf32>
    %181 = vector.broadcast %13 : vector<1x128xf32> to vector<8x128xf32>
    %182 = arith.addf %180, %181 : vector<8x128xf32>
    %183 = arith.truncf %163 : vector<8x128xf32> to vector<8x128xbf16>
    %cst_86 = arith.constant dense<0.000000e+00> : vector<8x128xf32>
    %184 = tpu.matmul %183, %12, %cst_86 {dimension_numbers = #tpu.dot_dimension_numbers<[1], [0], [0], [1], [0, 0, 1, 1], [], []>} : vector<8x128xbf16>, vector<128x128xbf16>, vector<8x128xf32> -> vector<8x128xf32>
    %185 = arith.addf %182, %184 : vector<8x128xf32>
    %cst_87 = arith.constant 0.000000e+00 : f32
    %186 = vector.broadcast %cst_87 : f32 to vector<8x128xf32>
    %187 = arith.maximumf %185, %186 : vector<8x128xf32>
    %188 = arith.truncf %178 : vector<8x128xf32> to vector<8x128xbf16>
    %cst_88 = arith.constant dense<0.000000e+00> : vector<8x128xf32>
    %189 = tpu.matmul %188, %11, %cst_88 {dimension_numbers = #tpu.dot_dimension_numbers<[1], [0], [0], [1], [0, 0, 1, 1], [], []>} : vector<8x128xbf16>, vector<128x128xbf16>, vector<8x128xf32> -> vector<8x128xf32>
    %190 = vector.broadcast %13 : vector<1x128xf32> to vector<8x128xf32>
    %191 = arith.addf %189, %190 : vector<8x128xf32>
    %192 = arith.truncf %187 : vector<8x128xf32> to vector<8x128xbf16>
    %cst_89 = arith.constant dense<0.000000e+00> : vector<8x128xf32>
    %193 = tpu.matmul %192, %12, %cst_89 {dimension_numbers = #tpu.dot_dimension_numbers<[1], [0], [0], [1], [0, 0, 1, 1], [], []>} : vector<8x128xbf16>, vector<128x128xbf16>, vector<8x128xf32> -> vector<8x128xf32>
    %194 = arith.addf %191, %193 : vector<8x128xf32>
    %cst_90 = arith.constant 0.000000e+00 : f32
    %195 = vector.broadcast %cst_90 : f32 to vector<8x128xf32>
    %196 = arith.maximumf %194, %195 : vector<8x128xf32>
    %c0_91 = arith.constant 0 : index
    %c0_92 = arith.constant 0 : index
    %197 = vector.load %arg10[%c0_91, %c0_92] : memref<128x128xbf16, #tpu.memory_space<vmem>>, vector<128x128xbf16>
    %c0_93 = arith.constant 0 : index
    %c0_94 = arith.constant 0 : index
    %198 = vector.load %arg11[%c0_93, %c0_94] : memref<128x128xbf16, #tpu.memory_space<vmem>>, vector<128x128xbf16>
    %c0_95 = arith.constant 0 : index
    %c0_96 = arith.constant 0 : index
    %199 = vector.load %arg12[%c0_95, %c0_96] : memref<1x128xf32, #tpu.memory_space<vmem>>, vector<1x128xf32>
    %200 = arith.truncf %169 : vector<8x128xf32> to vector<8x128xbf16>
    %cst_97 = arith.constant dense<0.000000e+00> : vector<8x128xf32>
    %201 = tpu.matmul %200, %197, %cst_97 {dimension_numbers = #tpu.dot_dimension_numbers<[1], [0], [0], [1], [0, 0, 1, 1], [], []>} : vector<8x128xbf16>, vector<128x128xbf16>, vector<8x128xf32> -> vector<8x128xf32>
    %202 = vector.broadcast %199 : vector<1x128xf32> to vector<8x128xf32>
    %203 = arith.addf %201, %202 : vector<8x128xf32>
    %204 = arith.truncf %178 : vector<8x128xf32> to vector<8x128xbf16>
    %cst_98 = arith.constant dense<0.000000e+00> : vector<8x128xf32>
    %205 = tpu.matmul %204, %197, %cst_98 {dimension_numbers = #tpu.dot_dimension_numbers<[1], [0], [0], [1], [0, 0, 1, 1], [], []>} : vector<8x128xbf16>, vector<128x128xbf16>, vector<8x128xf32> -> vector<8x128xf32>
    %206 = vector.broadcast %199 : vector<1x128xf32> to vector<8x128xf32>
    %207 = arith.addf %205, %206 : vector<8x128xf32>
    %208 = arith.truncf %196 : vector<8x128xf32> to vector<8x128xbf16>
    %cst_99 = arith.constant dense<0.000000e+00> : vector<8x128xf32>
    %209 = tpu.matmul %208, %197, %cst_99 {dimension_numbers = #tpu.dot_dimension_numbers<[1], [0], [0], [1], [0, 0, 1, 1], [], []>} : vector<8x128xbf16>, vector<128x128xbf16>, vector<8x128xf32> -> vector<8x128xf32>
    %210 = vector.broadcast %199 : vector<1x128xf32> to vector<8x128xf32>
    %211 = arith.addf %209, %210 : vector<8x128xf32>
    %cst_100 = arith.constant 0.000000e+00 : f32
    %212 = vector.broadcast %cst_100 : f32 to vector<8x128xf32>
    %213 = arith.maximumf %203, %212 : vector<8x128xf32>
    %214 = arith.truncf %213 : vector<8x128xf32> to vector<8x128xbf16>
    %cst_101 = arith.constant dense<0.000000e+00> : vector<8x128xf32>
    %215 = tpu.matmul %214, %198, %cst_101 {dimension_numbers = #tpu.dot_dimension_numbers<[1], [0], [0], [1], [0, 0, 1, 1], [], []>} : vector<8x128xbf16>, vector<128x128xbf16>, vector<8x128xf32> -> vector<8x128xf32>
    %216 = arith.addf %207, %215 : vector<8x128xf32>
    %cst_102 = arith.constant 0.000000e+00 : f32
    %217 = vector.broadcast %cst_102 : f32 to vector<8x128xf32>
    %218 = arith.maximumf %216, %217 : vector<8x128xf32>
    %219 = arith.truncf %218 : vector<8x128xf32> to vector<8x128xbf16>
    %cst_103 = arith.constant dense<0.000000e+00> : vector<8x128xf32>
    %220 = tpu.matmul %219, %198, %cst_103 {dimension_numbers = #tpu.dot_dimension_numbers<[1], [0], [0], [1], [0, 0, 1, 1], [], []>} : vector<8x128xbf16>, vector<128x128xbf16>, vector<8x128xf32> -> vector<8x128xf32>
    %221 = arith.addf %211, %220 : vector<8x128xf32>
    %cst_104 = arith.constant 0.000000e+00 : f32
    %222 = vector.broadcast %cst_104 : f32 to vector<8x128xf32>
    %223 = arith.maximumf %221, %222 : vector<8x128xf32>
    %c0_105 = arith.constant 0 : index
    %c0_106 = arith.constant 0 : index
    %224 = vector.load %arg13[%c0_105, %c0_106] : memref<24x128xf32, #tpu.memory_space<vmem>>, vector<8x128xf32>
    tpu.vector_store %arg13[%c0_105, %c0_106], %213 {strides = array<i32>} : memref<24x128xf32, #tpu.memory_space<vmem>>, vector<8x128xf32>,
    %c8_107 = arith.constant 8 : index
    %c0_108 = arith.constant 0 : index
    %225 = vector.load %arg13[%c8_107, %c0_108] : memref<24x128xf32, #tpu.memory_space<vmem>>, vector<8x128xf32>
    tpu.vector_store %arg13[%c8_107, %c0_108], %218 {strides = array<i32>} : memref<24x128xf32, #tpu.memory_space<vmem>>, vector<8x128xf32>,
    %c16_109 = arith.constant 16 : index
    %c0_110 = arith.constant 0 : index
    %226 = vector.load %arg13[%c16_109, %c0_110] : memref<24x128xf32, #tpu.memory_space<vmem>>, vector<8x128xf32>
    tpu.vector_store %arg13[%c16_109, %c0_110], %223 {strides = array<i32>} : memref<24x128xf32, #tpu.memory_space<vmem>>, vector<8x128xf32>,
    %c0_111 = arith.constant 0 : index
    %c0_112 = arith.constant 0 : index
    %227 = vector.load %arg14[%c0_111, %c0_112] : memref<8x128xf32, #tpu.memory_space<vmem>>, vector<8x128xf32>
    tpu.vector_store %arg14[%c0_111, %c0_112], %223 {strides = array<i32>} : memref<8x128xf32, #tpu.memory_space<vmem>>, vector<8x128xf32>,
    return
  }
}

</mosaic_0001>

<llo_original>
// kernel: rnn_model_forward.1
$region0: #{rnn_model_forward.1}
  #allocation0 [shape = 'u32[]', space=smem, size = 0x4, offset = 0x4, fixed_abs, tag = 'smem constant byte address 0x4 - core index']
  #allocation1 [shape = 'u32[144,128]{1,0:T(1,128)}', space=vmem, size = 0x12000, scoped, tag = 'internal scratch']
  #allocation2 [shape = 'f32[64,128]{1,0:T(8,128)}', space=vmem, size = 0x8000, scoped, tag = 'scratch operand']
  %s0 = inlined_call_operand.vmem [shape: bf16[64,896], index: 0, kind: input, shape index: {}]
  %s1 = inlined_call_operand.vmem [shape: bf16[896,128], index: 1, kind: input, shape index: {}]
  %s2 = inlined_call_operand.hbm [shape: bf16[128,128], index: 2, kind: input, shape index: {}]
  %s3 = inlined_call_operand.vmem [shape: f32[1,128], index: 3, kind: input, shape index: {}]
  %s4 = inlined_call_operand.hbm [shape: bf16[128,128], index: 4, kind: input, shape index: {}]
  %s5 = inlined_call_operand.hbm [shape: bf16[128,128], index: 5, kind: input, shape index: {}]
  %s6 = inlined_call_operand.vmem [shape: f32[1,128], index: 6, kind: input, shape index: {}]
  %s7 = inlined_call_operand.hbm [shape: bf16[128,128], index: 7, kind: input, shape index: {}]
  %s8 = inlined_call_operand.hbm [shape: bf16[128,128], index: 8, kind: input, shape index: {}]
  %s9 = inlined_call_operand.vmem [shape: f32[1,128], index: 9, kind: input, shape index: {}]
  %s10 = inlined_call_operand.hbm [shape: bf16[128,128], index: 10, kind: input, shape index: {}]
  %s11 = inlined_call_operand.hbm [shape: bf16[128,128], index: 11, kind: input, shape index: {}]
  %s12 = inlined_call_operand.vmem [shape: f32[1,128], index: 12, kind: input, shape index: {}]
  %s13 = inlined_call_operand.vmem [shape: f32[24,128], index: 13, kind: output, shape index: {0}]
  %s14 = inlined_call_operand.vmem [shape: f32[8,128], index: 14, kind: output, shape index: {1}]
  %15 = xla_tuple %s13, %s14
  %s16 = sld [smem:[#allocation0]]
  $region98: #{rnn_model_forward.1} parent=0
    _
  %s18 = ssub.s32 1, %s16
  %s19 = scalar_select 0, %s18, %s16
  $region1: #{rnn_model_forward.1} parent=0
    #allocation3 [shape = 'u8[32768]{0}', space=vmem, size = 0x8000, scoped, tag = 'input window, operand 2, single buffered']
    #allocation4 [shape = 's32[1]{0}', space=sflag, size = 0x4, scoped, tag = 'scoped memory for rnn_model_forward.1']
    #allocation5 [shape = 'u8[32768]{0}', space=vmem, size = 0x8000, scoped, tag = 'input window, operand 4, single buffered']
    #allocation6 [shape = 's32[1]{0}', space=sflag, size = 0x4, scoped, tag = 'scoped memory for rnn_model_forward.1']
    #allocation7 [shape = 'u8[32768]{0}', space=vmem, size = 0x8000, scoped, tag = 'input window, operand 5, single buffered']
    #allocation8 [shape = 'u8[32768]{0}', space=vmem, size = 0x8000, scoped, tag = 'input window, operand 7, single buffered']
    #allocation9 [shape = 's32[1]{0}', space=sflag, size = 0x4, scoped, tag = 'scoped memory for rnn_model_forward.1']
    #allocation10 [shape = 'u8[32768]{0}', space=vmem, size = 0x8000, scoped, tag = 'input window, operand 8, single buffered']
    #allocation11 [shape = 'u8[32768]{0}', space=vmem, size = 0x8000, scoped, tag = 'input window, operand 10, single buffered']
    #allocation12 [shape = 's32[1]{0}', space=sflag, size = 0x4, scoped, tag = 'scoped memory for rnn_model_forward.1']
    #allocation13 [shape = 'u8[32768]{0}', space=vmem, size = 0x8000, scoped, tag = 'input window, operand 11, single buffered']
    %20 = vsyncpa [#allocation4], 0
    %21 = vsyncpa [#allocation6], 0
    %22 = vsyncpa [#allocation9], 0
    %23 = vsyncpa [#allocation12], 0
    // Predicated region
    $region2: #{rnn_model_forward.1} parent=1 // pred_check
      _
    $region3: #{rnn_model_forward.1} parent=1 // pred_check_branch
      %25 = sbr.rel (0) target = $region5
    $region4: #{rnn_model_forward.1} parent=1 // pred_region
      _
    $region5: #{rnn_model_forward.1} parent=1 // pred_fallthru
      _
    // Predicated region
    $region6: #{rnn_model_forward.1} parent=1 // pred_check
      _
    $region7: #{rnn_model_forward.1} parent=1 // pred_check_branch
      %27 = sbr.rel (0) target = $region9
    $region8: #{rnn_model_forward.1} parent=1 // pred_region
      _
    $region9: #{rnn_model_forward.1} parent=1 // pred_fallthru
      _
    // Predicated region
    $region10: #{rnn_model_forward.1} parent=1 // pred_check
      _
    $region11: #{rnn_model_forward.1} parent=1 // pred_check_branch
      %29 = sbr.rel (0) target = $region13
    $region12: #{rnn_model_forward.1} parent=1 // pred_region
      %s31 = ssub.s32 1024, 1024
      %32 = vsyncadd [#allocation4], %s31
      %s33 = sshll.u32 [#allocation3], 4
      %s34 = int_to_ptr.vmem [resolvable:$true] %s33
      %39 = dma.hbm_to_vmem [thread:$0]  %s2, 1024, %s34, [#allocation4], 64, 64, 4
    $region13: #{rnn_model_forward.1} parent=1 // pred_fallthru
      _
    // Predicated region
    $region14: #{rnn_model_forward.1} parent=1 // pred_check
      _
    $region15: #{rnn_model_forward.1} parent=1 // pred_check_branch
      %41 = sbr.rel (0) target = $region17
    $region16: #{rnn_model_forward.1} parent=1 // pred_region
      _
    $region17: #{rnn_model_forward.1} parent=1 // pred_fallthru
      _
    // Predicated region
    $region18: #{rnn_model_forward.1} parent=1 // pred_check
      _
    $region19: #{rnn_model_forward.1} parent=1 // pred_check_branch
      %43 = sbr.rel (0) target = $region21
    $region20: #{rnn_model_forward.1} parent=1 // pred_region
      %s45 = ssub.s32 1024, 1024
      %46 = vsyncadd [#allocation6], %s45
      %s47 = sshll.u32 [#allocation5], 4
      %s48 = int_to_ptr.vmem [resolvable:$true] %s47
      %53 = dma.hbm_to_vmem [thread:$0]  %s4, 1024, %s48, [#allocation6], 64, 64, 4
    $region21: #{rnn_model_forward.1} parent=1 // pred_fallthru
      _
    // Predicated region
    $region22: #{rnn_model_forward.1} parent=1 // pred_check
      _
    $region23: #{rnn_model_forward.1} parent=1 // pred_check_branch
      %55 = sbr.rel (0) target = $region25
    $region24: #{rnn_model_forward.1} parent=1 // pred_region
      %s57 = ssub.s32 1024, 1024
      %58 = vsyncadd [#allocation6], %s57
      %s59 = sshll.u32 [#allocation7], 4
      %s60 = int_to_ptr.vmem [resolvable:$true] %s59
      %65 = dma.hbm_to_vmem [thread:$0]  %s5, 1024, %s60, [#allocation6], 64, 64, 4
    $region25: #{rnn_model_forward.1} parent=1 // pred_fallthru
      _
    // Predicated region
    $region26: #{rnn_model_forward.1} parent=1 // pred_check
      _
    $region27: #{rnn_model_forward.1} parent=1 // pred_check_branch
      %67 = sbr.rel (0) target = $region29
    $region28: #{rnn_model_forward.1} parent=1 // pred_region
      _
    $region29: #{rnn_model_forward.1} parent=1 // pred_fallthru
      _
    // Predicated region
    $region30: #{rnn_model_forward.1} parent=1 // pred_check
      _
    $region31: #{rnn_model_forward.1} parent=1 // pred_check_branch
      %69 = sbr.rel (0) target = $region33
    $region32: #{rnn_model_forward.1} parent=1 // pred_region
      %s71 = ssub.s32 1024, 1024
      %72 = vsyncadd [#allocation9], %s71
      %s73 = sshll.u32 [#allocation8], 4
      %s74 = int_to_ptr.vmem [resolvable:$true] %s73
      %79 = dma.hbm_to_vmem [thread:$0]  %s7, 1024, %s74, [#allocation9], 64, 64, 4
    $region33: #{rnn_model_forward.1} parent=1 // pred_fallthru
      _
    // Predicated region
    $region34: #{rnn_model_forward.1} parent=1 // pred_check
      _
    $region35: #{rnn_model_forward.1} parent=1 // pred_check_branch
      %81 = sbr.rel (0) target = $region37
    $region36: #{rnn_model_forward.1} parent=1 // pred_region
      %s83 = ssub.s32 1024, 1024
      %84 = vsyncadd [#allocation9], %s83
      %s85 = sshll.u32 [#allocation10], 4
      %s86 = int_to_ptr.vmem [resolvable:$true] %s85
      %91 = dma.hbm_to_vmem [thread:$0]  %s8, 1024, %s86, [#allocation9], 64, 64, 4
    $region37: #{rnn_model_forward.1} parent=1 // pred_fallthru
      _
    // Predicated region
    $region38: #{rnn_model_forward.1} parent=1 // pred_check
      _
    $region39: #{rnn_model_forward.1} parent=1 // pred_check_branch
      %93 = sbr.rel (0) target = $region41
    $region40: #{rnn_model_forward.1} parent=1 // pred_region
      _
    $region41: #{rnn_model_forward.1} parent=1 // pred_fallthru
      _
    // Predicated region
    $region42: #{rnn_model_forward.1} parent=1 // pred_check
      _
    $region43: #{rnn_model_forward.1} parent=1 // pred_check_branch
      %95 = sbr.rel (0) target = $region45
    $region44: #{rnn_model_forward.1} parent=1 // pred_region
      %s97 = ssub.s32 1024, 1024
      %98 = vsyncadd [#allocation12], %s97
      %s99 = sshll.u32 [#allocation11], 4
      %s100 = int_to_ptr.vmem [resolvable:$true] %s99
      %105 = dma.hbm_to_vmem [thread:$0]  %s10, 1024, %s100, [#allocation12], 64, 64, 4
    $region45: #{rnn_model_forward.1} parent=1 // pred_fallthru
      _
    // Predicated region
    $region46: #{rnn_model_forward.1} parent=1 // pred_check
      _
    $region47: #{rnn_model_forward.1} parent=1 // pred_check_branch
      %107 = sbr.rel (0) target = $region49
    $region48: #{rnn_model_forward.1} parent=1 // pred_region
      %s109 = ssub.s32 1024, 1024
      %110 = vsyncadd [#allocation12], %s109
      %s111 = sshll.u32 [#allocation13], 4
      %s112 = int_to_ptr.vmem [resolvable:$true] %s111
      %117 = dma.hbm_to_vmem [thread:$0]  %s11, 1024, %s112, [#allocation12], 64, 64, 4
    $region49: #{rnn_model_forward.1} parent=1 // pred_fallthru
      _
    // Predicated region
    $region50: #{rnn_model_forward.1} parent=1 // pred_check
      _
    $region51: #{rnn_model_forward.1} parent=1 // pred_check_branch
      %119 = sbr.rel (0) target = $region53
    $region52: #{rnn_model_forward.1} parent=1 // pred_region
      _
    $region53: #{rnn_model_forward.1} parent=1 // pred_fallthru
      _
    // Predicated region
    $region54: #{rnn_model_forward.1} parent=1 // pred_check
      _
    $region55: #{rnn_model_forward.1} parent=1 // pred_check_branch
      %121 = sbr.rel (0) target = $region57
    $region56: #{rnn_model_forward.1} parent=1 // pred_region
      %122 = dma.done [#allocation4], 1024
    $region57: #{rnn_model_forward.1} parent=1 // pred_fallthru
      _
    // Predicated region
    $region58: #{rnn_model_forward.1} parent=1 // pred_check
      _
    $region59: #{rnn_model_forward.1} parent=1 // pred_check_branch
      %124 = sbr.rel (0) target = $region61
    $region60: #{rnn_model_forward.1} parent=1 // pred_region
      %125 = dma.done [#allocation6], 1024
    $region61: #{rnn_model_forward.1} parent=1 // pred_fallthru
      _
    // Predicated region
    $region62: #{rnn_model_forward.1} parent=1 // pred_check
      _
    $region63: #{rnn_model_forward.1} parent=1 // pred_check_branch
      %127 = sbr.rel (0) target = $region65
    $region64: #{rnn_model_forward.1} parent=1 // pred_region
      %128 = dma.done [#allocation6], 1024
    $region65: #{rnn_model_forward.1} parent=1 // pred_fallthru
      _
    // Predicated region
    $region66: #{rnn_model_forward.1} parent=1 // pred_check
      _
    $region67: #{rnn_model_forward.1} parent=1 // pred_check_branch
      %130 = sbr.rel (0) target = $region69
    $region68: #{rnn_model_forward.1} parent=1 // pred_region
      %131 = dma.done [#allocation9], 1024
    $region69: #{rnn_model_forward.1} parent=1 // pred_fallthru
      _
    // Predicated region
    $region70: #{rnn_model_forward.1} parent=1 // pred_check
      _
    $region71: #{rnn_model_forward.1} parent=1 // pred_check_branch
      %133 = sbr.rel (0) target = $region73
    $region72: #{rnn_model_forward.1} parent=1 // pred_region
      %134 = dma.done [#allocation9], 1024
    $region73: #{rnn_model_forward.1} parent=1 // pred_fallthru
      _
    // Predicated region
    $region74: #{rnn_model_forward.1} parent=1 // pred_check
      _
    $region75: #{rnn_model_forward.1} parent=1 // pred_check_branch
      %136 = sbr.rel (0) target = $region77
    $region76: #{rnn_model_forward.1} parent=1 // pred_region
      %137 = dma.done [#allocation12], 1024
    $region77: #{rnn_model_forward.1} parent=1 // pred_fallthru
      _
    // Predicated region
    $region78: #{rnn_model_forward.1} parent=1 // pred_check
      _
    $region79: #{rnn_model_forward.1} parent=1 // pred_check_branch
      %139 = sbr.rel (0) target = $region81
    $region80: #{rnn_model_forward.1} parent=1 // pred_region
      %140 = dma.done [#allocation12], 1024
    $region81: #{rnn_model_forward.1} parent=1 // pred_fallthru
      _
    %v142 = vld [vmem:[%s0] sm:$0xff]
    %v143 = vld [vmem:[%s0 + $0x8] sm:$0xff]
    %v144 = vld [vmem:[%s0 + $0x10] sm:$0xff]
    %v145 = vld [vmem:[%s0 + $0x18] sm:$0xf]
    %v146 = vld [vmem:[%s0 + $0x1c] sm:$0xff]
    %v147 = vld [vmem:[%s0 + $0x24] sm:$0xff]
    %v148 = vld [vmem:[%s0 + $0x2c] sm:$0xff]
    %v149 = vld [vmem:[%s0 + $0x34] sm:$0xf]
    %v150 = vld [vmem:[%s0 + $0x38] sm:$0xff]
    %v151 = vld [vmem:[%s0 + $0x40] sm:$0xff]
    %v152 = vld [vmem:[%s0 + $0x48] sm:$0xff]
    %v153 = vld [vmem:[%s0 + $0x50] sm:$0xf]
    %v154 = vld [vmem:[%s0 + $0x54] sm:$0xff]
    %v155 = vld [vmem:[%s0 + $0x5c] sm:$0xff]
    %v156 = vld [vmem:[%s0 + $0x64] sm:$0xff]
    %v157 = vld [vmem:[%s0 + $0x6c] sm:$0xf]
    %v158 = vld [vmem:[%s0 + $0x70] sm:$0xff]
    %v159 = vld [vmem:[%s0 + $0x78] sm:$0xff]
    %v160 = vld [vmem:[%s0 + $0x80] sm:$0xff]
    %v161 = vld [vmem:[%s0 + $0x88] sm:$0xf]
    %v162 = vld [vmem:[%s0 + $0x8c] sm:$0xff]
    %v163 = vld [vmem:[%s0 + $0x94] sm:$0xff]
    %v164 = vld [vmem:[%s0 + $0x9c] sm:$0xff]
    %v165 = vld [vmem:[%s0 + $0xa4] sm:$0xf]
    %v166 = vld [vmem:[%s0 + $0xa8] sm:$0xff]
    %v167 = vld [vmem:[%s0 + $0xb0] sm:$0xff]
    %v168 = vld [vmem:[%s0 + $0xb8] sm:$0xff]
    %v169 = vld [vmem:[%s0 + $0xc0] sm:$0xf]
    %v170 = vld [vmem:[%s0 + $0xc4] sm:$0xff]
    %v171 = vld [vmem:[%s0 + $0xcc] sm:$0xff]
    %v172 = vld [vmem:[%s0 + $0xd4] sm:$0xff]
    %v173 = vld [vmem:[%s0 + $0xdc] sm:$0xf]
    %v174 = vld [vmem:[%s1] sm:$0xf]
    %v175 = vld [vmem:[%s1 + $0x4] sm:$0xf]
    %v176 = vld [vmem:[%s1 + $0x8] sm:$0xf]
    %v177 = vld [vmem:[%s1 + $0xc] sm:$0xf]
    %v178 = vld [vmem:[%s1 + $0x10] sm:$0xf]
    %v179 = vld [vmem:[%s1 + $0x14] sm:$0xf]
    %v180 = vld [vmem:[%s1 + $0x18] sm:$0xf]
    %v181 = vld [vmem:[%s1 + $0x1c] sm:$0xf]
    %v182 = vld [vmem:[%s1 + $0x20] sm:$0xf]
    %v183 = vld [vmem:[%s1 + $0x24] sm:$0xf]
    %v184 = vld [vmem:[%s1 + $0x28] sm:$0xf]
    %v185 = vld [vmem:[%s1 + $0x2c] sm:$0xf]
    %v186 = vld [vmem:[%s1 + $0x30] sm:$0xf]
    %v187 = vld [vmem:[%s1 + $0x34] sm:$0xf]
    %v188 = vld [vmem:[%s1 + $0x38] sm:$0xf]
    %v189 = vld [vmem:[%s1 + $0x3c] sm:$0xf]
    %v190 = vld [vmem:[%s1 + $0x40] sm:$0xf]
    %v191 = vld [vmem:[%s1 + $0x44] sm:$0xf]
    %v192 = vld [vmem:[%s1 + $0x48] sm:$0xf]
    %v193 = vld [vmem:[%s1 + $0x4c] sm:$0xf]
    %v194 = vld [vmem:[%s1 + $0x50] sm:$0xf]
    %v195 = vld [vmem:[%s1 + $0x54] sm:$0xf]
    %v196 = vld [vmem:[%s1 + $0x58] sm:$0xf]
    %v197 = vld [vmem:[%s1 + $0x5c] sm:$0xf]
    %v198 = vld [vmem:[%s1 + $0x60] sm:$0xf]
    %v199 = vld [vmem:[%s1 + $0x64] sm:$0xf]
    %v200 = vld [vmem:[%s1 + $0x68] sm:$0xf]
    %v201 = vld [vmem:[%s1 + $0x6c] sm:$0xf]
    %v202 = vld [vmem:[%s1 + $0x70] sm:$0xf]
    %v203 = vld [vmem:[%s1 + $0x74] sm:$0xf]
    %v204 = vld [vmem:[%s1 + $0x78] sm:$0xf]
    %v205 = vld [vmem:[%s1 + $0x7c] sm:$0xf]
    %v206 = vld [vmem:[%s1 + $0x80] sm:$0xf]
    %v207 = vld [vmem:[%s1 + $0x84] sm:$0xf]
    %v208 = vld [vmem:[%s1 + $0x88] sm:$0xf]
    %v209 = vld [vmem:[%s1 + $0x8c] sm:$0xf]
    %v210 = vld [vmem:[%s1 + $0x90] sm:$0xf]
    %v211 = vld [vmem:[%s1 + $0x94] sm:$0xf]
    %v212 = vld [vmem:[%s1 + $0x98] sm:$0xf]
    %v213 = vld [vmem:[%s1 + $0x9c] sm:$0xf]
    %v214 = vld [vmem:[%s1 + $0xa0] sm:$0xf]
    %v215 = vld [vmem:[%s1 + $0xa4] sm:$0xf]
    %v216 = vld [vmem:[%s1 + $0xa8] sm:$0xf]
    %v217 = vld [vmem:[%s1 + $0xac] sm:$0xf]
    %v218 = vld [vmem:[%s1 + $0xb0] sm:$0xf]
    %v219 = vld [vmem:[%s1 + $0xb4] sm:$0xf]
    %v220 = vld [vmem:[%s1 + $0xb8] sm:$0xf]
    %v221 = vld [vmem:[%s1 + $0xbc] sm:$0xf]
    %v222 = vld [vmem:[%s1 + $0xc0] sm:$0xf]
    %v223 = vld [vmem:[%s1 + $0xc4] sm:$0xf]
    %v224 = vld [vmem:[%s1 + $0xc8] sm:$0xf]
    %v225 = vld [vmem:[%s1 + $0xcc] sm:$0xf]
    %v226 = vld [vmem:[%s1 + $0xd0] sm:$0xf]
    %v227 = vld [vmem:[%s1 + $0xd4] sm:$0xf]
    %v228 = vld [vmem:[%s1 + $0xd8] sm:$0xf]
    %v229 = vld [vmem:[%s1 + $0xdc] sm:$0xf]
    %v230 = vld [vmem:[%s1 + $0xe0] sm:$0xf]
    %v231 = vld [vmem:[%s1 + $0xe4] sm:$0xf]
    %v232 = vld [vmem:[%s1 + $0xe8] sm:$0xf]
    %v233 = vld [vmem:[%s1 + $0xec] sm:$0xf]
    %v234 = vld [vmem:[%s1 + $0xf0] sm:$0xf]
    %v235 = vld [vmem:[%s1 + $0xf4] sm:$0xf]
    %v236 = vld [vmem:[%s1 + $0xf8] sm:$0xf]
    %v237 = vld [vmem:[%s1 + $0xfc] sm:$0xf]
    %v238 = vld [vmem:[%s1 + $0x100] sm:$0xf]
    %v239 = vld [vmem:[%s1 + $0x104] sm:$0xf]
    %v240 = vld [vmem:[%s1 + $0x108] sm:$0xf]
    %v241 = vld [vmem:[%s1 + $0x10c] sm:$0xf]
    %v242 = vld [vmem:[%s1 + $0x110] sm:$0xf]
    %v243 = vld [vmem:[%s1 + $0x114] sm:$0xf]
    %v244 = vld [vmem:[%s1 + $0x118] sm:$0xf]
    %v245 = vld [vmem:[%s1 + $0x11c] sm:$0xf]
    %v246 = vld [vmem:[%s1 + $0x120] sm:$0xf]
    %v247 = vld [vmem:[%s1 + $0x124] sm:$0xf]
    %v248 = vld [vmem:[%s1 + $0x128] sm:$0xf]
    %v249 = vld [vmem:[%s1 + $0x12c] sm:$0xf]
    %v250 = vld [vmem:[%s1 + $0x130] sm:$0xf]
    %v251 = vld [vmem:[%s1 + $0x134] sm:$0xf]
    %v252 = vld [vmem:[%s1 + $0x138] sm:$0xf]
    %v253 = vld [vmem:[%s1 + $0x13c] sm:$0xf]
    %v254 = vld [vmem:[%s1 + $0x140] sm:$0xf]
    %v255 = vld [vmem:[%s1 + $0x144] sm:$0xf]
    %v256 = vld [vmem:[%s1 + $0x148] sm:$0xf]
    %v257 = vld [vmem:[%s1 + $0x14c] sm:$0xf]
    %v258 = vld [vmem:[%s1 + $0x150] sm:$0xf]
    %v259 = vld [vmem:[%s1 + $0x154] sm:$0xf]
    %v260 = vld [vmem:[%s1 + $0x158] sm:$0xf]
    %v261 = vld [vmem:[%s1 + $0x15c] sm:$0xf]
    %v262 = vld [vmem:[%s1 + $0x160] sm:$0xf]
    %v263 = vld [vmem:[%s1 + $0x164] sm:$0xf]
    %v264 = vld [vmem:[%s1 + $0x168] sm:$0xf]
    %v265 = vld [vmem:[%s1 + $0x16c] sm:$0xf]
    %v266 = vld [vmem:[%s1 + $0x170] sm:$0xf]
    %v267 = vld [vmem:[%s1 + $0x174] sm:$0xf]
    %v268 = vld [vmem:[%s1 + $0x178] sm:$0xf]
    %v269 = vld [vmem:[%s1 + $0x17c] sm:$0xf]
    %v270 = vld [vmem:[%s1 + $0x180] sm:$0xf]
    %v271 = vld [vmem:[%s1 + $0x184] sm:$0xf]
    %v272 = vld [vmem:[%s1 + $0x188] sm:$0xf]
    %v273 = vld [vmem:[%s1 + $0x18c] sm:$0xf]
    %v274 = vld [vmem:[%s1 + $0x190] sm:$0xf]
    %v275 = vld [vmem:[%s1 + $0x194] sm:$0xf]
    %v276 = vld [vmem:[%s1 + $0x198] sm:$0xf]
    %v277 = vld [vmem:[%s1 + $0x19c] sm:$0xf]
    %v278 = vld [vmem:[%s1 + $0x1a0] sm:$0xf]
    %v279 = vld [vmem:[%s1 + $0x1a4] sm:$0xf]
    %v280 = vld [vmem:[%s1 + $0x1a8] sm:$0xf]
    %v281 = vld [vmem:[%s1 + $0x1ac] sm:$0xf]
    %v282 = vld [vmem:[%s1 + $0x1b0] sm:$0xf]
    %v283 = vld [vmem:[%s1 + $0x1b4] sm:$0xf]
    %v284 = vld [vmem:[%s1 + $0x1b8] sm:$0xf]
    %v285 = vld [vmem:[%s1 + $0x1bc] sm:$0xf]
    %v286 = vld [vmem:[%s3] sm:$0x1]
    %v288 = vlaneseq
    %v289 = vshrl.u32 %v288, 7
    %v290 = vsub.s32 0, %v289
    %v291 = vrot.slane %v286, %v290
    %v325 = vunpack.c.l.b16 %v142
    %v326 = vunpack.c.h.b16 %v142
    %v327 = vunpack.c.l.b16 %v143
    %v328 = vunpack.c.h.b16 %v143
    %v329 = vunpack.c.l.b16 %v144
    %v330 = vunpack.c.h.b16 %v144
    %v331 = vunpack.c.l.b16 %v145
    %v332 = vunpack.c.l.b16 %v146
    %v333 = vunpack.c.h.b16 %v146
    %v334 = vunpack.c.l.b16 %v147
    %v335 = vunpack.c.h.b16 %v147
    %v336 = vunpack.c.l.b16 %v148
    %v337 = vunpack.c.h.b16 %v148
    %v338 = vunpack.c.l.b16 %v149
    %v339 = vunpack.c.l.b16 %v150
    %v340 = vunpack.c.h.b16 %v150
    %v341 = vunpack.c.l.b16 %v151
    %v342 = vunpack.c.h.b16 %v151
    %v343 = vunpack.c.l.b16 %v152
    %v344 = vunpack.c.h.b16 %v152
    %v345 = vunpack.c.l.b16 %v153
    %v346 = vunpack.c.l.b16 %v154
    %v347 = vunpack.c.h.b16 %v154
    %v348 = vunpack.c.l.b16 %v155
    %v349 = vunpack.c.h.b16 %v155
    %v350 = vunpack.c.l.b16 %v156
    %v351 = vunpack.c.h.b16 %v156
    %v352 = vunpack.c.l.b16 %v157
    %v353 = vunpack.c.l.b16 %v158
    %v354 = vunpack.c.h.b16 %v158
    %v355 = vunpack.c.l.b16 %v159
    %v356 = vunpack.c.h.b16 %v159
    %v357 = vunpack.c.l.b16 %v160
    %v358 = vunpack.c.h.b16 %v160
    %v359 = vunpack.c.l.b16 %v161
    %v360 = vunpack.c.l.b16 %v162
    %v361 = vunpack.c.h.b16 %v162
    %v362 = vunpack.c.l.b16 %v163
    %v363 = vunpack.c.h.b16 %v163
    %v364 = vunpack.c.l.b16 %v164
    %v365 = vunpack.c.h.b16 %v164
    %v366 = vunpack.c.l.b16 %v165
    %v367 = vunpack.c.l.b16 %v166
    %v368 = vunpack.c.h.b16 %v166
    %v369 = vunpack.c.l.b16 %v167
    %v370 = vunpack.c.h.b16 %v167
    %v371 = vunpack.c.l.b16 %v168
    %v372 = vunpack.c.h.b16 %v168
    %v373 = vunpack.c.l.b16 %v169
    %v374 = vunpack.c.l.b16 %v170
    %v375 = vunpack.c.h.b16 %v170
    %v376 = vunpack.c.l.b16 %v171
    %v377 = vunpack.c.h.b16 %v171
    %v378 = vunpack.c.l.b16 %v172
    %v379 = vunpack.c.h.b16 %v172
    %v380 = vunpack.c.l.b16 %v173
    %v381 = vpack.c.b16 %v332, %v325
    %v382 = vpack.c.b16 %v333, %v326
    %v383 = vpack.c.b16 %v334, %v327
    %v384 = vpack.c.b16 %v335, %v328
    %v385 = vpack.c.b16 %v336, %v329
    %v386 = vpack.c.b16 %v337, %v330
    %v387 = vpack.c.b16 %v338, %v331
    %v388 = vpack.c.b16 %v346, %v339
    %v389 = vpack.c.b16 %v347, %v340
    %v390 = vpack.c.b16 %v348, %v341
    %v391 = vpack.c.b16 %v349, %v342
    %v392 = vpack.c.b16 %v350, %v343
    %v393 = vpack.c.b16 %v351, %v344
    %v394 = vpack.c.b16 %v352, %v345
    %v395 = vpack.c.b16 %v360, %v353
    %v396 = vpack.c.b16 %v361, %v354
    %v397 = vpack.c.b16 %v362, %v355
    %v398 = vpack.c.b16 %v363, %v356
    %v399 = vpack.c.b16 %v364, %v357
    %v400 = vpack.c.b16 %v365, %v358
    %v401 = vpack.c.b16 %v366, %v359
    %v402 = vpack.c.b16 %v374, %v367
    %v403 = vpack.c.b16 %v375, %v368
    %v404 = vpack.c.b16 %v376, %v369
    %v405 = vpack.c.b16 %v377, %v370
    %v406 = vpack.c.b16 %v378, %v371
    %v407 = vpack.c.b16 %v379, %v372
    %v408 = vpack.c.b16 %v380, %v373
    %v549 = vunpack.c.l.b16 %v174
    %v550 = vunpack.c.l.b16 %v175
    %v551 = vunpack.c.l.b16 %v176
    %v552 = vunpack.c.l.b16 %v177
    %v553 = vunpack.c.l.b16 %v178
    %v554 = vunpack.c.l.b16 %v179
    %v555 = vunpack.c.l.b16 %v180
    %v556 = vunpack.c.l.b16 %v181
    %v557 = vunpack.c.l.b16 %v182
    %v558 = vunpack.c.l.b16 %v183
    %v559 = vunpack.c.l.b16 %v184
    %v560 = vunpack.c.l.b16 %v185
    %v561 = vunpack.c.l.b16 %v186
    %v562 = vunpack.c.l.b16 %v187
    %v563 = vunpack.c.l.b16 %v188
    %v564 = vunpack.c.l.b16 %v189
    %v565 = vunpack.c.l.b16 %v190
    %v566 = vunpack.c.l.b16 %v191
    %v567 = vunpack.c.l.b16 %v192
    %v568 = vunpack.c.l.b16 %v193
    %v569 = vunpack.c.l.b16 %v194
    %v570 = vunpack.c.l.b16 %v195
    %v571 = vunpack.c.l.b16 %v196
    %v572 = vunpack.c.l.b16 %v197
    %v573 = vunpack.c.l.b16 %v198
    %v574 = vunpack.c.l.b16 %v199
    %v575 = vunpack.c.l.b16 %v200
    %v576 = vunpack.c.l.b16 %v201
    %v577 = vunpack.c.l.b16 %v202
    %v578 = vunpack.c.l.b16 %v203
    %v579 = vunpack.c.l.b16 %v204
    %v580 = vunpack.c.l.b16 %v205
    %v581 = vunpack.c.l.b16 %v206
    %v582 = vunpack.c.l.b16 %v207
    %v583 = vunpack.c.l.b16 %v208
    %v584 = vunpack.c.l.b16 %v209
    %v585 = vunpack.c.l.b16 %v210
    %v586 = vunpack.c.l.b16 %v211
    %v587 = vunpack.c.l.b16 %v212
    %v588 = vunpack.c.l.b16 %v213
    %v589 = vunpack.c.l.b16 %v214
    %v590 = vunpack.c.l.b16 %v215
    %v591 = vunpack.c.l.b16 %v216
    %v592 = vunpack.c.l.b16 %v217
    %v593 = vunpack.c.l.b16 %v218
    %v594 = vunpack.c.l.b16 %v219
    %v595 = vunpack.c.l.b16 %v220
    %v596 = vunpack.c.l.b16 %v221
    %v597 = vunpack.c.l.b16 %v222
    %v598 = vunpack.c.l.b16 %v223
    %v599 = vunpack.c.l.b16 %v224
    %v600 = vunpack.c.l.b16 %v225
    %v601 = vunpack.c.l.b16 %v226
    %v602 = vunpack.c.l.b16 %v227
    %v603 = vunpack.c.l.b16 %v228
    %v604 = vunpack.c.l.b16 %v229
    %v605 = vunpack.c.l.b16 %v230
    %v606 = vunpack.c.l.b16 %v231
    %v607 = vunpack.c.l.b16 %v232
    %v608 = vunpack.c.l.b16 %v233
    %v609 = vunpack.c.l.b16 %v234
    %v610 = vunpack.c.l.b16 %v235
    %v611 = vunpack.c.l.b16 %v236
    %v612 = vunpack.c.l.b16 %v237
    %v613 = vunpack.c.l.b16 %v238
    %v614 = vunpack.c.l.b16 %v239
    %v615 = vunpack.c.l.b16 %v240
    %v616 = vunpack.c.l.b16 %v241
    %v617 = vunpack.c.l.b16 %v242
    %v618 = vunpack.c.l.b16 %v243
    %v619 = vunpack.c.l.b16 %v244
    %v620 = vunpack.c.l.b16 %v245
    %v621 = vunpack.c.l.b16 %v246
    %v622 = vunpack.c.l.b16 %v247
    %v623 = vunpack.c.l.b16 %v248
    %v624 = vunpack.c.l.b16 %v249
    %v625 = vunpack.c.l.b16 %v250
    %v626 = vunpack.c.l.b16 %v251
    %v627 = vunpack.c.l.b16 %v252
    %v628 = vunpack.c.l.b16 %v253
    %v629 = vunpack.c.l.b16 %v254
    %v630 = vunpack.c.l.b16 %v255
    %v631 = vunpack.c.l.b16 %v256
    %v632 = vunpack.c.l.b16 %v257
    %v633 = vunpack.c.l.b16 %v258
    %v634 = vunpack.c.l.b16 %v259
    %v635 = vunpack.c.l.b16 %v260
    %v636 = vunpack.c.l.b16 %v261
    %v637 = vunpack.c.l.b16 %v262
    %v638 = vunpack.c.l.b16 %v263
    %v639 = vunpack.c.l.b16 %v264
    %v640 = vunpack.c.l.b16 %v265
    %v641 = vunpack.c.l.b16 %v266
    %v642 = vunpack.c.l.b16 %v267
    %v643 = vunpack.c.l.b16 %v268
    %v644 = vunpack.c.l.b16 %v269
    %v645 = vunpack.c.l.b16 %v270
    %v646 = vunpack.c.l.b16 %v271
    %v647 = vunpack.c.l.b16 %v272
    %v648 = vunpack.c.l.b16 %v273
    %v649 = vunpack.c.l.b16 %v274
    %v650 = vunpack.c.l.b16 %v275
    %v651 = vunpack.c.l.b16 %v276
    %v652 = vunpack.c.l.b16 %v277
    %v653 = vunpack.c.l.b16 %v278
    %v654 = vunpack.c.l.b16 %v279
    %v655 = vunpack.c.l.b16 %v280
    %v656 = vunpack.c.l.b16 %v281
    %v657 = vunpack.c.l.b16 %v282
    %v658 = vunpack.c.l.b16 %v283
    %v659 = vunpack.c.l.b16 %v284
    %v660 = vunpack.c.l.b16 %v285
    %v661 = vpack.c.b16 %v550, %v549
    %v662 = vpack.c.b16 %v552, %v551
    %v663 = vpack.c.b16 %v554, %v553
    %v664 = vpack.c.b16 %v556, %v555
    %v665 = vpack.c.b16 %v558, %v557
    %v666 = vpack.c.b16 %v560, %v559
    %v667 = vpack.c.b16 %v562, %v561
    %v668 = vpack.c.b16 %v564, %v563
    %v669 = vpack.c.b16 %v566, %v565
    %v670 = vpack.c.b16 %v568, %v567
    %v671 = vpack.c.b16 %v570, %v569
    %v672 = vpack.c.b16 %v572, %v571
    %v673 = vpack.c.b16 %v574, %v573
    %v674 = vpack.c.b16 %v576, %v575
    %v675 = vpack.c.b16 %v578, %v577
    %v676 = vpack.c.b16 %v580, %v579
    %v677 = vpack.c.b16 %v582, %v581
    %v678 = vpack.c.b16 %v584, %v583
    %v679 = vpack.c.b16 %v586, %v585
    %v680 = vpack.c.b16 %v588, %v587
    %v681 = vpack.c.b16 %v590, %v589
    %v682 = vpack.c.b16 %v592, %v591
    %v683 = vpack.c.b16 %v594, %v593
    %v684 = vpack.c.b16 %v596, %v595
    %v685 = vpack.c.b16 %v598, %v597
    %v686 = vpack.c.b16 %v600, %v599
    %v687 = vpack.c.b16 %v602, %v601
    %v688 = vpack.c.b16 %v604, %v603
    %v689 = vpack.c.b16 %v606, %v605
    %v690 = vpack.c.b16 %v608, %v607
    %v691 = vpack.c.b16 %v610, %v609
    %v692 = vpack.c.b16 %v612, %v611
    %v693 = vpack.c.b16 %v614, %v613
    %v694 = vpack.c.b16 %v616, %v615
    %v695 = vpack.c.b16 %v618, %v617
    %v696 = vpack.c.b16 %v620, %v619
    %v697 = vpack.c.b16 %v622, %v621
    %v698 = vpack.c.b16 %v624, %v623
    %v699 = vpack.c.b16 %v626, %v625
    %v700 = vpack.c.b16 %v628, %v627
    %v701 = vpack.c.b16 %v630, %v629
    %v702 = vpack.c.b16 %v632, %v631
    %v703 = vpack.c.b16 %v634, %v633
    %v704 = vpack.c.b16 %v636, %v635
    %v705 = vpack.c.b16 %v638, %v637
    %v706 = vpack.c.b16 %v640, %v639
    %v707 = vpack.c.b16 %v642, %v641
    %v708 = vpack.c.b16 %v644, %v643
    %v709 = vpack.c.b16 %v646, %v645
    %v710 = vpack.c.b16 %v648, %v647
    %v711 = vpack.c.b16 %v650, %v649
    %v712 = vpack.c.b16 %v652, %v651
    %v713 = vpack.c.b16 %v654, %v653
    %v714 = vpack.c.b16 %v656, %v655
    %v715 = vpack.c.b16 %v658, %v657
    %v716 = vpack.c.b16 %v660, %v659
    %773 = vmatprep.subr.bf16.mxu0 0
    %774 = vmatpush1.bf16.msra.mxu0 %v661
    %775 = vmatprep.subr.bf16.mxu0 0
    %776 = vmatpush1.bf16.msra.mxu0 %v662
    %777 = vmatprep.subr.bf16.mxu0 0
    %778 = vmatpush1.bf16.msra.mxu0 %v663
    %779 = vmatprep.subr.bf16.mxu0 0
    %780 = vmatpush1.bf16.msra.mxu0 %v664
    %781 = vmatprep.subr.bf16.mxu0 0
    %782 = vmatpush1.bf16.msra.mxu0 %v665
    %783 = vmatprep.subr.bf16.mxu0 0
    %784 = vmatpush1.bf16.msra.mxu0 %v666
    %785 = vmatprep.subr.bf16.mxu0 0
    %786 = vmatpush1.bf16.msra.mxu0 %v667
    %787 = vmatprep.subr.bf16.mxu0 0
    %788 = vmatpush1.bf16.msra.mxu0 %v668
    %789 = vmatprep.subr.bf16.mxu0 0
    %790 = vmatpush1.bf16.msra.mxu0 %v669
    %791 = vmatprep.subr.bf16.mxu0 0
    %792 = vmatpush1.bf16.msra.mxu0 %v670
    %793 = vmatprep.subr.bf16.mxu0 0
    %794 = vmatpush1.bf16.msra.mxu0 %v671
    %795 = vmatprep.subr.bf16.mxu0 0
    %796 = vmatpush1.bf16.msra.mxu0 %v672
    %797 = vmatprep.subr.bf16.mxu0 0
    %798 = vmatpush1.bf16.msra.mxu0 %v673
    %799 = vmatprep.subr.bf16.mxu0 0
    %800 = vmatpush1.bf16.msra.mxu0 %v674
    %801 = vmatprep.subr.bf16.mxu0 0
    %802 = vmatpush1.bf16.msra.mxu0 %v675
    %803 = vmatprep.subr.bf16.mxu0 0
    %804 = vmatpush1.bf16.msra.mxu0 %v676
    %805 = vmatprep.mubr.bf16.mxu0 %v382
    %806 = vmatmul.mubr.bf16.gmra.mrb[0].mxu0 %v381
    %v807 = vpop.f32.mrb[0].mxu0
    %v808 = vadd.f32 %v291, %v807
    %v809 = vpop.f32.mrb[0].mxu0
    %v810 = vpop.f32.mrb[0].mxu0
    %v811 = vadd.f32 %v291, %v810
    %v812 = vpop.f32.mrb[0].mxu0
    %813 = vmatprep.mubr.bf16.mxu0 %v389
    %814 = vmatmul.mubr.bf16.gmra.mrb[0].mxu0 %v388
    %v815 = vpop.f32.mrb[0].mxu0
    %v816 = vadd.f32 %v291, %v815
    %v817 = vpop.f32.mrb[0].mxu0
    %v818 = vpop.f32.mrb[0].mxu0
    %v819 = vadd.f32 %v291, %v818
    %v820 = vpop.f32.mrb[0].mxu0
    %821 = vmatprep.mubr.bf16.mxu0 %v396
    %822 = vmatmul.mubr.bf16.gmra.mrb[0].mxu0 %v395
    %v823 = vpop.f32.mrb[0].mxu0
    %v824 = vadd.f32 %v291, %v823
    %v825 = vpop.f32.mrb[0].mxu0
    %v826 = vpop.f32.mrb[0].mxu0
    %v827 = vadd.f32 %v291, %v826
    %v828 = vpop.f32.mrb[0].mxu0
    %829 = vmatprep.mubr.bf16.mxu0 %v403
    %830 = vmatmul.mubr.bf16.gmra.mrb[0].mxu0 %v402
    %v831 = vpop.f32.mrb[0].mxu0
    %v832 = vadd.f32 %v291, %v831
    %v833 = vpop.f32.mrb[0].mxu0
    %v834 = vpop.f32.mrb[0].mxu0
    %v835 = vadd.f32 %v291, %v834
    %v836 = vpop.f32.mrb[0].mxu0
    %837 = vdwg.mxu0
    %838 = vmatprep.subr.bf16.mxu0 0
    %839 = vmatpush1.bf16.msra.mxu0 %v677
    %840 = vmatprep.subr.bf16.mxu0 0
    %841 = vmatpush1.bf16.msra.mxu0 %v678
    %842 = vmatprep.subr.bf16.mxu0 0
    %843 = vmatpush1.bf16.msra.mxu0 %v679
    %844 = vmatprep.subr.bf16.mxu0 0
    %845 = vmatpush1.bf16.msra.mxu0 %v680
    %846 = vmatprep.subr.bf16.mxu0 0
    %847 = vmatpush1.bf16.msra.mxu0 %v681
    %848 = vmatprep.subr.bf16.mxu0 0
    %849 = vmatpush1.bf16.msra.mxu0 %v682
    %850 = vmatprep.subr.bf16.mxu0 0
    %851 = vmatpush1.bf16.msra.mxu0 %v683
    %852 = vmatprep.subr.bf16.mxu0 0
    %853 = vmatpush1.bf16.msra.mxu0 %v684
    %854 = vmatprep.subr.bf16.mxu0 0
    %855 = vmatpush1.bf16.msra.mxu0 %v685
    %856 = vmatprep.subr.bf16.mxu0 0
    %857 = vmatpush1.bf16.msra.mxu0 %v686
    %858 = vmatprep.subr.bf16.mxu0 0
    %859 = vmatpush1.bf16.msra.mxu0 %v687
    %860 = vmatprep.subr.bf16.mxu0 0
    %861 = vmatpush1.bf16.msra.mxu0 %v688
    %862 = vmatprep.subr.bf16.mxu0 0
    %863 = vmatpush1.bf16.msra.mxu0 %v689
    %864 = vmatprep.subr.bf16.mxu0 0
    %865 = vmatpush1.bf16.msra.mxu0 %v690
    %866 = vmatprep.subr.bf16.mxu0 0
    %867 = vmatpush1.bf16.msra.mxu0 %v691
    %868 = vmatprep.subr.bf16.mxu0 0
    %869 = vmatpush1.bf16.msra.mxu0 %v692
    %870 = vmatprep.mubr.bf16.mxu0 %v384
    %871 = vmatmul.mubr.bf16.gmra.mrb[0].mxu0 %v383
    %v872 = vpop.f32.mrb[0].mxu0
    %v873 = vadd.f32 %v808, %v872
    %v874 = vpop.f32.mrb[0].mxu0
    %v875 = vpop.f32.mrb[0].mxu0
    %v876 = vadd.f32 %v811, %v875
    %v877 = vpop.f32.mrb[0].mxu0
    %878 = vmatprep.mubr.bf16.mxu0 %v391
    %879 = vmatmul.mubr.bf16.gmra.mrb[0].mxu0 %v390
    %v880 = vpop.f32.mrb[0].mxu0
    %v881 = vadd.f32 %v816, %v880
    %v882 = vpop.f32.mrb[0].mxu0
    %v883 = vpop.f32.mrb[0].mxu0
    %v884 = vadd.f32 %v819, %v883
    %v885 = vpop.f32.mrb[0].mxu0
    %886 = vmatprep.mubr.bf16.mxu0 %v398
    %887 = vmatmul.mubr.bf16.gmra.mrb[0].mxu0 %v397
    %v888 = vpop.f32.mrb[0].mxu0
    %v889 = vadd.f32 %v824, %v888
    %v890 = vpop.f32.mrb[0].mxu0
    %v891 = vpop.f32.mrb[0].mxu0
    %v892 = vadd.f32 %v827, %v891
    %v893 = vpop.f32.mrb[0].mxu0
    %894 = vmatprep.mubr.bf16.mxu0 %v405
    %895 = vmatmul.mubr.bf16.gmra.mrb[0].mxu0 %v404
    %v896 = vpop.f32.mrb[0].mxu0
    %v897 = vadd.f32 %v832, %v896
    %v898 = vpop.f32.mrb[0].mxu0
    %v899 = vpop.f32.mrb[0].mxu0
    %v900 = vadd.f32 %v835, %v899
    %v901 = vpop.f32.mrb[0].mxu0
    %902 = vdwg.mxu0
    %903 = vmatprep.subr.bf16.mxu0 0
    %904 = vmatpush1.bf16.msra.mxu0 %v693
    %905 = vmatprep.subr.bf16.mxu0 0
    %906 = vmatpush1.bf16.msra.mxu0 %v694
    %907 = vmatprep.subr.bf16.mxu0 0
    %908 = vmatpush1.bf16.msra.mxu0 %v695
    %909 = vmatprep.subr.bf16.mxu0 0
    %910 = vmatpush1.bf16.msra.mxu0 %v696
    %911 = vmatprep.subr.bf16.mxu0 0
    %912 = vmatpush1.bf16.msra.mxu0 %v697
    %913 = vmatprep.subr.bf16.mxu0 0
    %914 = vmatpush1.bf16.msra.mxu0 %v698
    %915 = vmatprep.subr.bf16.mxu0 0
    %916 = vmatpush1.bf16.msra.mxu0 %v699
    %917 = vmatprep.subr.bf16.mxu0 0
    %918 = vmatpush1.bf16.msra.mxu0 %v700
    %919 = vmatprep.subr.bf16.mxu0 0
    %920 = vmatpush1.bf16.msra.mxu0 %v701
    %921 = vmatprep.subr.bf16.mxu0 0
    %922 = vmatpush1.bf16.msra.mxu0 %v702
    %923 = vmatprep.subr.bf16.mxu0 0
    %924 = vmatpush1.bf16.msra.mxu0 %v703
    %925 = vmatprep.subr.bf16.mxu0 0
    %926 = vmatpush1.bf16.msra.mxu0 %v704
    %927 = vmatprep.subr.bf16.mxu0 0
    %928 = vmatpush1.bf16.msra.mxu0 %v705
    %929 = vmatprep.subr.bf16.mxu0 0
    %930 = vmatpush1.bf16.msra.mxu0 %v706
    %931 = vmatprep.subr.bf16.mxu0 0
    %932 = vmatpush1.bf16.msra.mxu0 %v707
    %933 = vmatprep.subr.bf16.mxu0 0
    %934 = vmatpush1.bf16.msra.mxu0 %v708
    %935 = vmatprep.mubr.bf16.mxu0 %v386
    %936 = vmatmul.mubr.bf16.gmra.mrb[0].mxu0 %v385
    %v937 = vpop.f32.mrb[0].mxu0
    %v938 = vadd.f32 %v873, %v937
    %v939 = vpop.f32.mrb[0].mxu0
    %v940 = vpop.f32.mrb[0].mxu0
    %v941 = vadd.f32 %v876, %v940
    %v942 = vpop.f32.mrb[0].mxu0
    %943 = vmatprep.mubr.bf16.mxu0 %v393
    %944 = vmatmul.mubr.bf16.gmra.mrb[0].mxu0 %v392
    %v945 = vpop.f32.mrb[0].mxu0
    %v946 = vadd.f32 %v881, %v945
    %v947 = vpop.f32.mrb[0].mxu0
    %v948 = vpop.f32.mrb[0].mxu0
    %v949 = vadd.f32 %v884, %v948
    %v950 = vpop.f32.mrb[0].mxu0
    %951 = vmatprep.mubr.bf16.mxu0 %v400
    %952 = vmatmul.mubr.bf16.gmra.mrb[0].mxu0 %v399
    %v953 = vpop.f32.mrb[0].mxu0
    %v954 = vadd.f32 %v889, %v953
    %v955 = vpop.f32.mrb[0].mxu0
    %v956 = vpop.f32.mrb[0].mxu0
    %v957 = vadd.f32 %v892, %v956
    %v958 = vpop.f32.mrb[0].mxu0
    %959 = vmatprep.mubr.bf16.mxu0 %v407
    %960 = vmatmul.mubr.bf16.gmra.mrb[0].mxu0 %v406
    %v961 = vpop.f32.mrb[0].mxu0
    %v962 = vadd.f32 %v897, %v961
    %v963 = vpop.f32.mrb[0].mxu0
    %v964 = vpop.f32.mrb[0].mxu0
    %v965 = vadd.f32 %v900, %v964
    %v966 = vpop.f32.mrb[0].mxu0
    %967 = vdwg.mxu0
    %968 = vmatprep.subr.bf16.mxu0 0
    %969 = vmatpush1.bf16.msra.mxu0 %v709
    %970 = vmatprep.subr.bf16.mxu0 0
    %971 = vmatpush1.bf16.msra.mxu0 %v710
    %972 = vmatprep.subr.bf16.mxu0 0
    %973 = vmatpush1.bf16.msra.mxu0 %v711
    %974 = vmatprep.subr.bf16.mxu0 0
    %975 = vmatpush1.bf16.msra.mxu0 %v712
    %976 = vmatprep.subr.bf16.mxu0 0
    %977 = vmatpush1.bf16.msra.mxu0 %v713
    %978 = vmatprep.subr.bf16.mxu0 0
    %979 = vmatpush1.bf16.msra.mxu0 %v714
    %980 = vmatprep.subr.bf16.mxu0 0
    %981 = vmatpush1.bf16.msra.mxu0 %v715
    %982 = vmatprep.subr.bf16.mxu0 0
    %983 = vmatpush1.bf16.msra.mxu0 %v716
    %984 = vmatprep.subr.bf16.mxu0 0
    %985 = vmatpush1.bf16.msra.mxu0 0
    %986 = vmatprep.subr.bf16.mxu0 0
    %987 = vmatpush1.bf16.msra.mxu0 0
    %988 = vmatprep.subr.bf16.mxu0 0
    %989 = vmatpush1.bf16.msra.mxu0 0
    %990 = vmatprep.subr.bf16.mxu0 0
    %991 = vmatpush1.bf16.msra.mxu0 0
    %992 = vmatprep.subr.bf16.mxu0 0
    %993 = vmatpush1.bf16.msra.mxu0 0
    %994 = vmatprep.subr.bf16.mxu0 0
    %995 = vmatpush1.bf16.msra.mxu0 0
    %996 = vmatprep.subr.bf16.mxu0 0
    %997 = vmatpush1.bf16.msra.mxu0 0
    %998 = vmatprep.subr.bf16.mxu0 0
    %999 = vmatpush1.bf16.msra.mxu0 0
    %1000 = vmatprep.mubr.bf16.mxu0 0
    %1001 = vmatmul.mubr.bf16.gmra.mrb[0].mxu0 %v387
    %v1002 = vpop.f32.mrb[0].mxu0
    %v1003 = vadd.f32 %v938, %v1002
    %v1004 = vpop.f32.mrb[0].mxu0
    %v1005 = vpop.f32.mrb[0].mxu0
    %v1006 = vadd.f32 %v941, %v1005
    %v1007 = vpop.f32.mrb[0].mxu0
    %1008 = vmatprep.mubr.bf16.mxu0 0
    %1009 = vmatmul.mubr.bf16.gmra.mrb[0].mxu0 %v394
    %v1010 = vpop.f32.mrb[0].mxu0
    %v1011 = vadd.f32 %v946, %v1010
    %v1012 = vpop.f32.mrb[0].mxu0
    %v1013 = vpop.f32.mrb[0].mxu0
    %v1014 = vadd.f32 %v949, %v1013
    %v1015 = vpop.f32.mrb[0].mxu0
    %1016 = vmatprep.mubr.bf16.mxu0 0
    %1017 = vmatmul.mubr.bf16.gmra.mrb[0].mxu0 %v401
    %v1018 = vpop.f32.mrb[0].mxu0
    %v1019 = vadd.f32 %v954, %v1018
    %v1020 = vpop.f32.mrb[0].mxu0
    %v1021 = vpop.f32.mrb[0].mxu0
    %v1022 = vadd.f32 %v957, %v1021
    %v1023 = vpop.f32.mrb[0].mxu0
    %1024 = vmatprep.mubr.bf16.mxu0 0
    %1025 = vmatmul.mubr.bf16.gmra.mrb[0].mxu0 %v408
    %v1026 = vpop.f32.mrb[0].mxu0
    %v1027 = vadd.f32 %v962, %v1026
    %v1028 = vpop.f32.mrb[0].mxu0
    %v1029 = vpop.f32.mrb[0].mxu0
    %v1030 = vadd.f32 %v965, %v1029
    %v1031 = vpop.f32.mrb[0].mxu0
    %1032 = vdwg.mxu0
    %1033 = vst [vmem:[#allocation2] sm:$0xff] %v1003
    %1034 = vst [vmem:[#allocation2 + $0x8] sm:$0xff] %v1006
    %1035 = vst [vmem:[#allocation2 + $0x10] sm:$0xff] %v1011
    %1036 = vst [vmem:[#allocation2 + $0x18] sm:$0xff] %v1014
    %1037 = vst [vmem:[#allocation2 + $0x20] sm:$0xff] %v1019
    %1038 = vst [vmem:[#allocation2 + $0x28] sm:$0xff] %v1022
    %1039 = vst [vmem:[#allocation2 + $0x30] sm:$0xff] %v1027
    %1040 = vst [vmem:[#allocation2 + $0x38] sm:$0xff] %v1030
    %v1041 = vld [vmem:[#allocation3] sm:$0xf]
    %v1042 = vld [vmem:[#allocation3 + $0x4] sm:$0xf]
    %v1043 = vld [vmem:[#allocation3 + $0x8] sm:$0xf]
    %v1044 = vld [vmem:[#allocation3 + $0xc] sm:$0xf]
    %v1045 = vld [vmem:[#allocation3 + $0x10] sm:$0xf]
    %v1046 = vld [vmem:[#allocation3 + $0x14] sm:$0xf]
    %v1047 = vld [vmem:[#allocation3 + $0x18] sm:$0xf]
    %v1048 = vld [vmem:[#allocation3 + $0x1c] sm:$0xf]
    %v1049 = vld [vmem:[#allocation3 + $0x20] sm:$0xf]
    %v1050 = vld [vmem:[#allocation3 + $0x24] sm:$0xf]
    %v1051 = vld [vmem:[#allocation3 + $0x28] sm:$0xf]
    %v1052 = vld [vmem:[#allocation3 + $0x2c] sm:$0xf]
    %v1053 = vld [vmem:[#allocation3 + $0x30] sm:$0xf]
    %v1054 = vld [vmem:[#allocation3 + $0x34] sm:$0xf]
    %v1055 = vld [vmem:[#allocation3 + $0x38] sm:$0xf]
    %v1056 = vld [vmem:[#allocation3 + $0x3c] sm:$0xf]
    %v1057 = vld [vmem:[#allocation5] sm:$0xf]
    %v1058 = vld [vmem:[#allocation5 + $0x4] sm:$0xf]
    %v1059 = vld [vmem:[#allocation5 + $0x8] sm:$0xf]
    %v1060 = vld [vmem:[#allocation5 + $0xc] sm:$0xf]
    %v1061 = vld [vmem:[#allocation5 + $0x10] sm:$0xf]
    %v1062 = vld [vmem:[#allocation5 + $0x14] sm:$0xf]
    %v1063 = vld [vmem:[#allocation5 + $0x18] sm:$0xf]
    %v1064 = vld [vmem:[#allocation5 + $0x1c] sm:$0xf]
    %v1065 = vld [vmem:[#allocation5 + $0x20] sm:$0xf]
    %v1066 = vld [vmem:[#allocation5 + $0x24] sm:$0xf]
    %v1067 = vld [vmem:[#allocation5 + $0x28] sm:$0xf]
    %v1068 = vld [vmem:[#allocation5 + $0x2c] sm:$0xf]
    %v1069 = vld [vmem:[#allocation5 + $0x30] sm:$0xf]
    %v1070 = vld [vmem:[#allocation5 + $0x34] sm:$0xf]
    %v1071 = vld [vmem:[#allocation5 + $0x38] sm:$0xf]
    %v1072 = vld [vmem:[#allocation5 + $0x3c] sm:$0xf]
    %v1073 = vld [vmem:[#allocation7] sm:$0xf]
    %v1074 = vld [vmem:[#allocation7 + $0x4] sm:$0xf]
    %v1075 = vld [vmem:[#allocation7 + $0x8] sm:$0xf]
    %v1076 = vld [vmem:[#allocation7 + $0xc] sm:$0xf]
    %v1077 = vld [vmem:[#allocation7 + $0x10] sm:$0xf]
    %v1078 = vld [vmem:[#allocation7 + $0x14] sm:$0xf]
    %v1079 = vld [vmem:[#allocation7 + $0x18] sm:$0xf]
    %v1080 = vld [vmem:[#allocation7 + $0x1c] sm:$0xf]
    %v1081 = vld [vmem:[#allocation7 + $0x20] sm:$0xf]
    %v1082 = vld [vmem:[#allocation7 + $0x24] sm:$0xf]
    %v1083 = vld [vmem:[#allocation7 + $0x28] sm:$0xf]
    %v1084 = vld [vmem:[#allocation7 + $0x2c] sm:$0xf]
    %v1085 = vld [vmem:[#allocation7 + $0x30] sm:$0xf]
    %v1086 = vld [vmem:[#allocation7 + $0x34] sm:$0xf]
    %v1087 = vld [vmem:[#allocation7 + $0x38] sm:$0xf]
    %v1088 = vld [vmem:[#allocation7 + $0x3c] sm:$0xf]
    %v1089 = vld [vmem:[%s6] sm:$0x1]
    %v1090 = vld [vmem:[#allocation8] sm:$0xf]
    %v1091 = vld [vmem:[#allocation8 + $0x4] sm:$0xf]
    %v1092 = vld [vmem:[#allocation8 + $0x8] sm:$0xf]
    %v1093 = vld [vmem:[#allocation8 + $0xc] sm:$0xf]
    %v1094 = vld [vmem:[#allocation8 + $0x10] sm:$0xf]
    %v1095 = vld [vmem:[#allocation8 + $0x14] sm:$0xf]
    %v1096 = vld [vmem:[#allocation8 + $0x18] sm:$0xf]
    %v1097 = vld [vmem:[#allocation8 + $0x1c] sm:$0xf]
    %v1098 = vld [vmem:[#allocation8 + $0x20] sm:$0xf]
    %v1099 = vld [vmem:[#allocation8 + $0x24] sm:$0xf]
    %v1100 = vld [vmem:[#allocation8 + $0x28] sm:$0xf]
    %v1101 = vld [vmem:[#allocation8 + $0x2c] sm:$0xf]
    %v1102 = vld [vmem:[#allocation8 + $0x30] sm:$0xf]
    %v1103 = vld [vmem:[#allocation8 + $0x34] sm:$0xf]
    %v1104 = vld [vmem:[#allocation8 + $0x38] sm:$0xf]
    %v1105 = vld [vmem:[#allocation8 + $0x3c] sm:$0xf]
    %v1106 = vld [vmem:[#allocation10] sm:$0xf]
    %v1107 = vld [vmem:[#allocation10 + $0x4] sm:$0xf]
    %v1108 = vld [vmem:[#allocation10 + $0x8] sm:$0xf]
    %v1109 = vld [vmem:[#allocation10 + $0xc] sm:$0xf]
    %v1110 = vld [vmem:[#allocation10 + $0x10] sm:$0xf]
    %v1111 = vld [vmem:[#allocation10 + $0x14] sm:$0xf]
    %v1112 = vld [vmem:[#allocation10 + $0x18] sm:$0xf]
    %v1113 = vld [vmem:[#allocation10 + $0x1c] sm:$0xf]
    %v1114 = vld [vmem:[#allocation10 + $0x20] sm:$0xf]
    %v1115 = vld [vmem:[#allocation10 + $0x24] sm:$0xf]
    %v1116 = vld [vmem:[#allocation10 + $0x28] sm:$0xf]
    %v1117 = vld [vmem:[#allocation10 + $0x2c] sm:$0xf]
    %v1118 = vld [vmem:[#allocation10 + $0x30] sm:$0xf]
    %v1119 = vld [vmem:[#allocation10 + $0x34] sm:$0xf]
    %v1120 = vld [vmem:[#allocation10 + $0x38] sm:$0xf]
    %v1121 = vld [vmem:[#allocation10 + $0x3c] sm:$0xf]
    %v1122 = vld [vmem:[%s9] sm:$0x1]
    %v1123 = vld [vmem:[#allocation2] sm:$0xff]
    %v1124 = vmax.f32 %v1123, 0.0
    %v1125 = vpack.c.bf16 %v1124, %v1124
    %v1127 = vlaneseq
    %v1128 = vshrl.u32 %v1127, 7
    %v1129 = vsub.s32 0, %v1128
    %v1130 = vrot.slane %v1089, %v1129
    %v1148 = vunpack.c.l.b16 %v1057
    %v1149 = vunpack.c.l.b16 %v1058
    %v1150 = vunpack.c.l.b16 %v1059
    %v1151 = vunpack.c.l.b16 %v1060
    %v1152 = vunpack.c.l.b16 %v1061
    %v1153 = vunpack.c.l.b16 %v1062
    %v1154 = vunpack.c.l.b16 %v1063
    %v1155 = vunpack.c.l.b16 %v1064
    %v1156 = vunpack.c.l.b16 %v1065
    %v1157 = vunpack.c.l.b16 %v1066
    %v1158 = vunpack.c.l.b16 %v1067
    %v1159 = vunpack.c.l.b16 %v1068
    %v1160 = vunpack.c.l.b16 %v1069
    %v1161 = vunpack.c.l.b16 %v1070
    %v1162 = vunpack.c.l.b16 %v1071
    %v1163 = vunpack.c.l.b16 %v1072
    %v1164 = vpack.c.b16 %v1149, %v1148
    %v1165 = vpack.c.b16 %v1151, %v1150
    %v1166 = vpack.c.b16 %v1153, %v1152
    %v1167 = vpack.c.b16 %v1155, %v1154
    %v1168 = vpack.c.b16 %v1157, %v1156
    %v1169 = vpack.c.b16 %v1159, %v1158
    %v1170 = vpack.c.b16 %v1161, %v1160
    %v1171 = vpack.c.b16 %v1163, %v1162
    %1180 = vmatprep.subr.bf16.mxu0 0
    %1181 = vmatpush1.bf16.msra.mxu0 %v1164
    %1182 = vmatprep.subr.bf16.mxu0 0
    %1183 = vmatpush1.bf16.msra.mxu0 %v1165
    %1184 = vmatprep.subr.bf16.mxu0 0
    %1185 = vmatpush1.bf16.msra.mxu0 %v1166
    %1186 = vmatprep.subr.bf16.mxu0 0
    %1187 = vmatpush1.bf16.msra.mxu0 %v1167
    %1188 = vmatprep.subr.bf16.mxu0 0
    %1189 = vmatpush1.bf16.msra.mxu0 %v1168
    %1190 = vmatprep.subr.bf16.mxu0 0
    %1191 = vmatpush1.bf16.msra.mxu0 %v1169
    %1192 = vmatprep.subr.bf16.mxu0 0
    %1193 = vmatpush1.bf16.msra.mxu0 %v1170
    %1194 = vmatprep.subr.bf16.mxu0 0
    %1195 = vmatpush1.bf16.msra.mxu0 %v1171
    %1196 = vmatprep.subr.bf16.mxu0 0
    %1197 = vmatpush1.bf16.msra.mxu0 0
    %1198 = vmatprep.subr.bf16.mxu0 0
    %1199 = vmatpush1.bf16.msra.mxu0 0
    %1200 = vmatprep.subr.bf16.mxu0 0
    %1201 = vmatpush1.bf16.msra.mxu0 0
    %1202 = vmatprep.subr.bf16.mxu0 0
    %1203 = vmatpush1.bf16.msra.mxu0 0
    %1204 = vmatprep.subr.bf16.mxu0 0
    %1205 = vmatpush1.bf16.msra.mxu0 0
    %1206 = vmatprep.subr.bf16.mxu0 0
    %1207 = vmatpush1.bf16.msra.mxu0 0
    %1208 = vmatprep.subr.bf16.mxu0 0
    %1209 = vmatpush1.bf16.msra.mxu0 0
    %1210 = vmatprep.subr.bf16.mxu0 0
    %1211 = vmatpush1.bf16.msra.mxu0 0
    %1212 = vmatprep.mubr.bf16.mxu0 0
    %1213 = vmatmul.mubr.bf16.gmra.mrb[0].mxu0 %v1125
    %v1214 = vpop.f32.mrb[0].mxu0
    %v1215 = vadd.f32 %v1130, %v1214
    %v1216 = vpop.f32.mrb[0].mxu0
    %v1217 = vpop.f32.mrb[0].mxu0
    %v1218 = vpop.f32.mrb[0].mxu0
    %1219 = vdwg.mxu0
    %v1220 = vmax.f32 %v1215, 0.0
    %v1221 = vld [vmem:[#allocation2 + $0x8] sm:$0xff]
    %v1238 = vunpack.c.l.b16 %v1041
    %v1239 = vunpack.c.l.b16 %v1042
    %v1240 = vunpack.c.l.b16 %v1043
    %v1241 = vunpack.c.l.b16 %v1044
    %v1242 = vunpack.c.l.b16 %v1045
    %v1243 = vunpack.c.l.b16 %v1046
    %v1244 = vunpack.c.l.b16 %v1047
    %v1245 = vunpack.c.l.b16 %v1048
    %v1246 = vunpack.c.l.b16 %v1049
    %v1247 = vunpack.c.l.b16 %v1050
    %v1248 = vunpack.c.l.b16 %v1051
    %v1249 = vunpack.c.l.b16 %v1052
    %v1250 = vunpack.c.l.b16 %v1053
    %v1251 = vunpack.c.l.b16 %v1054
    %v1252 = vunpack.c.l.b16 %v1055
    %v1253 = vunpack.c.l.b16 %v1056
    %v1254 = vpack.c.b16 %v1239, %v1238
    %v1255 = vpack.c.b16 %v1241, %v1240
    %v1256 = vpack.c.b16 %v1243, %v1242
    %v1257 = vpack.c.b16 %v1245, %v1244
    %v1258 = vpack.c.b16 %v1247, %v1246
    %v1259 = vpack.c.b16 %v1249, %v1248
    %v1260 = vpack.c.b16 %v1251, %v1250
    %v1261 = vpack.c.b16 %v1253, %v1252
    %1270 = vmatprep.subr.bf16.mxu0 0
    %1271 = vmatpush1.bf16.msra.mxu0 %v1254
    %1272 = vmatprep.subr.bf16.mxu0 0
    %1273 = vmatpush1.bf16.msra.mxu0 %v1255
    %1274 = vmatprep.subr.bf16.mxu0 0
    %1275 = vmatpush1.bf16.msra.mxu0 %v1256
    %1276 = vmatprep.subr.bf16.mxu0 0
    %1277 = vmatpush1.bf16.msra.mxu0 %v1257
    %1278 = vmatprep.subr.bf16.mxu0 0
    %1279 = vmatpush1.bf16.msra.mxu0 %v1258
    %1280 = vmatprep.subr.bf16.mxu0 0
    %1281 = vmatpush1.bf16.msra.mxu0 %v1259
    %1282 = vmatprep.subr.bf16.mxu0 0
    %1283 = vmatpush1.bf16.msra.mxu0 %v1260
    %1284 = vmatprep.subr.bf16.mxu0 0
    %1285 = vmatpush1.bf16.msra.mxu0 %v1261
    %1286 = vmatprep.subr.bf16.mxu0 0
    %1287 = vmatpush1.bf16.msra.mxu0 0
    %1288 = vmatprep.subr.bf16.mxu0 0
    %1289 = vmatpush1.bf16.msra.mxu0 0
    %1290 = vmatprep.subr.bf16.mxu0 0
    %1291 = vmatpush1.bf16.msra.mxu0 0
    %1292 = vmatprep.subr.bf16.mxu0 0
    %1293 = vmatpush1.bf16.msra.mxu0 0
    %1294 = vmatprep.subr.bf16.mxu0 0
    %1295 = vmatpush1.bf16.msra.mxu0 0
    %1296 = vmatprep.subr.bf16.mxu0 0
    %1297 = vmatpush1.bf16.msra.mxu0 0
    %1298 = vmatprep.subr.bf16.mxu0 0
    %1299 = vmatpush1.bf16.msra.mxu0 0
    %1300 = vmatprep.subr.bf16.mxu0 0
    %1301 = vmatpush1.bf16.msra.mxu0 0
    %1302 = vmatprep.mubr.bf16.mxu0 0
    %1303 = vmatmul.mubr.bf16.gmra.mrb[0].mxu0 %v1125
    %v1304 = vpop.f32.mrb[0].mxu0
    %v1305 = vadd.f32 0.0, %v1304
    %v1306 = vpop.f32.mrb[0].mxu0
    %v1307 = vpop.f32.mrb[0].mxu0
    %v1308 = vpop.f32.mrb[0].mxu0
    %1309 = vdwg.mxu0
    %v1310 = vadd.f32 %v1221, %v1305
    %v1311 = vmax.f32 %v1310, 0.0
    %v1312 = vpack.c.bf16 %v1311, %v1311
    %1313 = vmatprep.subr.bf16.mxu0 0
    %1314 = vmatpush1.bf16.msra.mxu0 %v1164
    %1315 = vmatprep.subr.bf16.mxu0 0
    %1316 = vmatpush1.bf16.msra.mxu0 %v1165
    %1317 = vmatprep.subr.bf16.mxu0 0
    %1318 = vmatpush1.bf16.msra.mxu0 %v1166
    %1319 = vmatprep.subr.bf16.mxu0 0
    %1320 = vmatpush1.bf16.msra.mxu0 %v1167
    %1321 = vmatprep.subr.bf16.mxu0 0
    %1322 = vmatpush1.bf16.msra.mxu0 %v1168
    %1323 = vmatprep.subr.bf16.mxu0 0
    %1324 = vmatpush1.bf16.msra.mxu0 %v1169
    %1325 = vmatprep.subr.bf16.mxu0 0
    %1326 = vmatpush1.bf16.msra.mxu0 %v1170
    %1327 = vmatprep.subr.bf16.mxu0 0
    %1328 = vmatpush1.bf16.msra.mxu0 %v1171
    %1329 = vmatprep.subr.bf16.mxu0 0
    %1330 = vmatpush1.bf16.msra.mxu0 0
    %1331 = vmatprep.subr.bf16.mxu0 0
    %1332 = vmatpush1.bf16.msra.mxu0 0
    %1333 = vmatprep.subr.bf16.mxu0 0
    %1334 = vmatpush1.bf16.msra.mxu0 0
    %1335 = vmatprep.subr.bf16.mxu0 0
    %1336 = vmatpush1.bf16.msra.mxu0 0
    %1337 = vmatprep.subr.bf16.mxu0 0
    %1338 = vmatpush1.bf16.msra.mxu0 0
    %1339 = vmatprep.subr.bf16.mxu0 0
    %1340 = vmatpush1.bf16.msra.mxu0 0
    %1341 = vmatprep.subr.bf16.mxu0 0
    %1342 = vmatpush1.bf16.msra.mxu0 0
    %1343 = vmatprep.subr.bf16.mxu0 0
    %1344 = vmatpush1.bf16.msra.mxu0 0
    %1345 = vmatprep.mubr.bf16.mxu0 0
    %1346 = vmatmul.mubr.bf16.gmra.mrb[0].mxu0 %v1312
    %v1347 = vpop.f32.mrb[0].mxu0
    %v1348 = vadd.f32 %v1130, %v1347
    %v1349 = vpop.f32.mrb[0].mxu0
    %v1350 = vpop.f32.mrb[0].mxu0
    %v1351 = vpop.f32.mrb[0].mxu0
    %1352 = vdwg.mxu0
    %v1353 = vpack.c.bf16 %v1220, %v1220
    %v1370 = vunpack.c.l.b16 %v1073
    %v1371 = vunpack.c.l.b16 %v1074
    %v1372 = vunpack.c.l.b16 %v1075
    %v1373 = vunpack.c.l.b16 %v1076
    %v1374 = vunpack.c.l.b16 %v1077
    %v1375 = vunpack.c.l.b16 %v1078
    %v1376 = vunpack.c.l.b16 %v1079
    %v1377 = vunpack.c.l.b16 %v1080
    %v1378 = vunpack.c.l.b16 %v1081
    %v1379 = vunpack.c.l.b16 %v1082
    %v1380 = vunpack.c.l.b16 %v1083
    %v1381 = vunpack.c.l.b16 %v1084
    %v1382 = vunpack.c.l.b16 %v1085
    %v1383 = vunpack.c.l.b16 %v1086
    %v1384 = vunpack.c.l.b16 %v1087
    %v1385 = vunpack.c.l.b16 %v1088
    %v1386 = vpack.c.b16 %v1371, %v1370
    %v1387 = vpack.c.b16 %v1373, %v1372
    %v1388 = vpack.c.b16 %v1375, %v1374
    %v1389 = vpack.c.b16 %v1377, %v1376
    %v1390 = vpack.c.b16 %v1379, %v1378
    %v1391 = vpack.c.b16 %v1381, %v1380
    %v1392 = vpack.c.b16 %v1383, %v1382
    %v1393 = vpack.c.b16 %v1385, %v1384
    %1402 = vmatprep.subr.bf16.mxu0 0
    %1403 = vmatpush1.bf16.msra.mxu0 %v1386
    %1404 = vmatprep.subr.bf16.mxu0 0
    %1405 = vmatpush1.bf16.msra.mxu0 %v1387
    %1406 = vmatprep.subr.bf16.mxu0 0
    %1407 = vmatpush1.bf16.msra.mxu0 %v1388
    %1408 = vmatprep.subr.bf16.mxu0 0
    %1409 = vmatpush1.bf16.msra.mxu0 %v1389
    %1410 = vmatprep.subr.bf16.mxu0 0
    %1411 = vmatpush1.bf16.msra.mxu0 %v1390
    %1412 = vmatprep.subr.bf16.mxu0 0
    %1413 = vmatpush1.bf16.msra.mxu0 %v1391
    %1414 = vmatprep.subr.bf16.mxu0 0
    %1415 = vmatpush1.bf16.msra.mxu0 %v1392
    %1416 = vmatprep.subr.bf16.mxu0 0
    %1417 = vmatpush1.bf16.msra.mxu0 %v1393
    %1418 = vmatprep.subr.bf16.mxu0 0
    %1419 = vmatpush1.bf16.msra.mxu0 0
    %1420 = vmatprep.subr.bf16.mxu0 0
    %1421 = vmatpush1.bf16.msra.mxu0 0
    %1422 = vmatprep.subr.bf16.mxu0 0
    %1423 = vmatpush1.bf16.msra.mxu0 0
    %1424 = vmatprep.subr.bf16.mxu0 0
    %1425 = vmatpush1.bf16.msra.mxu0 0
    %1426 = vmatprep.subr.bf16.mxu0 0
    %1427 = vmatpush1.bf16.msra.mxu0 0
    %1428 = vmatprep.subr.bf16.mxu0 0
    %1429 = vmatpush1.bf16.msra.mxu0 0
    %1430 = vmatprep.subr.bf16.mxu0 0
    %1431 = vmatpush1.bf16.msra.mxu0 0
    %1432 = vmatprep.subr.bf16.mxu0 0
    %1433 = vmatpush1.bf16.msra.mxu0 0
    %1434 = vmatprep.mubr.bf16.mxu0 0
    %1435 = vmatmul.mubr.bf16.gmra.mrb[0].mxu0 %v1353
    %v1436 = vpop.f32.mrb[0].mxu0
    %v1437 = vadd.f32 0.0, %v1436
    %v1438 = vpop.f32.mrb[0].mxu0
    %v1439 = vpop.f32.mrb[0].mxu0
    %v1440 = vpop.f32.mrb[0].mxu0
    %1441 = vdwg.mxu0
    %v1442 = vadd.f32 %v1348, %v1437
    %v1443 = vmax.f32 %v1442, 0.0
    %v1445 = vlaneseq
    %v1446 = vshrl.u32 %v1445, 7
    %v1447 = vsub.s32 0, %v1446
    %v1448 = vrot.slane %v1122, %v1447
    %v1466 = vunpack.c.l.b16 %v1090
    %v1467 = vunpack.c.l.b16 %v1091
    %v1468 = vunpack.c.l.b16 %v1092
    %v1469 = vunpack.c.l.b16 %v1093
    %v1470 = vunpack.c.l.b16 %v1094
    %v1471 = vunpack.c.l.b16 %v1095
    %v1472 = vunpack.c.l.b16 %v1096
    %v1473 = vunpack.c.l.b16 %v1097
    %v1474 = vunpack.c.l.b16 %v1098
    %v1475 = vunpack.c.l.b16 %v1099
    %v1476 = vunpack.c.l.b16 %v1100
    %v1477 = vunpack.c.l.b16 %v1101
    %v1478 = vunpack.c.l.b16 %v1102
    %v1479 = vunpack.c.l.b16 %v1103
    %v1480 = vunpack.c.l.b16 %v1104
    %v1481 = vunpack.c.l.b16 %v1105
    %v1482 = vpack.c.b16 %v1467, %v1466
    %v1483 = vpack.c.b16 %v1469, %v1468
    %v1484 = vpack.c.b16 %v1471, %v1470
    %v1485 = vpack.c.b16 %v1473, %v1472
    %v1486 = vpack.c.b16 %v1475, %v1474
    %v1487 = vpack.c.b16 %v1477, %v1476
    %v1488 = vpack.c.b16 %v1479, %v1478
    %v1489 = vpack.c.b16 %v1481, %v1480
    %1498 = vmatprep.subr.bf16.mxu0 0
    %1499 = vmatpush1.bf16.msra.mxu0 %v1482
    %1500 = vmatprep.subr.bf16.mxu0 0
    %1501 = vmatpush1.bf16.msra.mxu0 %v1483
    %1502 = vmatprep.subr.bf16.mxu0 0
    %1503 = vmatpush1.bf16.msra.mxu0 %v1484
    %1504 = vmatprep.subr.bf16.mxu0 0
    %1505 = vmatpush1.bf16.msra.mxu0 %v1485
    %1506 = vmatprep.subr.bf16.mxu0 0
    %1507 = vmatpush1.bf16.msra.mxu0 %v1486
    %1508 = vmatprep.subr.bf16.mxu0 0
    %1509 = vmatpush1.bf16.msra.mxu0 %v1487
    %1510 = vmatprep.subr.bf16.mxu0 0
    %1511 = vmatpush1.bf16.msra.mxu0 %v1488
    %1512 = vmatprep.subr.bf16.mxu0 0
    %1513 = vmatpush1.bf16.msra.mxu0 %v1489
    %1514 = vmatprep.subr.bf16.mxu0 0
    %1515 = vmatpush1.bf16.msra.mxu0 0
    %1516 = vmatprep.subr.bf16.mxu0 0
    %1517 = vmatpush1.bf16.msra.mxu0 0
    %1518 = vmatprep.subr.bf16.mxu0 0
    %1519 = vmatpush1.bf16.msra.mxu0 0
    %1520 = vmatprep.subr.bf16.mxu0 0
    %1521 = vmatpush1.bf16.msra.mxu0 0
    %1522 = vmatprep.subr.bf16.mxu0 0
    %1523 = vmatpush1.bf16.msra.mxu0 0
    %1524 = vmatprep.subr.bf16.mxu0 0
    %1525 = vmatpush1.bf16.msra.mxu0 0
    %1526 = vmatprep.subr.bf16.mxu0 0
    %1527 = vmatpush1.bf16.msra.mxu0 0
    %1528 = vmatprep.subr.bf16.mxu0 0
    %1529 = vmatpush1.bf16.msra.mxu0 0
    %1530 = vmatprep.mubr.bf16.mxu0 0
    %1531 = vmatmul.mubr.bf16.gmra.mrb[0].mxu0 %v1353
    %v1532 = vpop.f32.mrb[0].mxu0
    %v1533 = vadd.f32 %v1448, %v1532
    %v1534 = vpop.f32.mrb[0].mxu0
    %v1535 = vpop.f32.mrb[0].mxu0
    %v1536 = vpop.f32.mrb[0].mxu0
    %1537 = vdwg.mxu0
    %v1538 = vmax.f32 %v1533, 0.0
    %v1539 = vld [vmem:[#allocation2 + $0x10] sm:$0xff]
    %1540 = vmatprep.subr.bf16.mxu0 0
    %1541 = vmatpush1.bf16.msra.mxu0 %v1254
    %1542 = vmatprep.subr.bf16.mxu0 0
    %1543 = vmatpush1.bf16.msra.mxu0 %v1255
    %1544 = vmatprep.subr.bf16.mxu0 0
    %1545 = vmatpush1.bf16.msra.mxu0 %v1256
    %1546 = vmatprep.subr.bf16.mxu0 0
    %1547 = vmatpush1.bf16.msra.mxu0 %v1257
    %1548 = vmatprep.subr.bf16.mxu0 0
    %1549 = vmatpush1.bf16.msra.mxu0 %v1258
    %1550 = vmatprep.subr.bf16.mxu0 0
    %1551 = vmatpush1.bf16.msra.mxu0 %v1259
    %1552 = vmatprep.subr.bf16.mxu0 0
    %1553 = vmatpush1.bf16.msra.mxu0 %v1260
    %1554 = vmatprep.subr.bf16.mxu0 0
    %1555 = vmatpush1.bf16.msra.mxu0 %v1261
    %1556 = vmatprep.subr.bf16.mxu0 0
    %1557 = vmatpush1.bf16.msra.mxu0 0
    %1558 = vmatprep.subr.bf16.mxu0 0
    %1559 = vmatpush1.bf16.msra.mxu0 0
    %1560 = vmatprep.subr.bf16.mxu0 0
    %1561 = vmatpush1.bf16.msra.mxu0 0
    %1562 = vmatprep.subr.bf16.mxu0 0
    %1563 = vmatpush1.bf16.msra.mxu0 0
    %1564 = vmatprep.subr.bf16.mxu0 0
    %1565 = vmatpush1.bf16.msra.mxu0 0
    %1566 = vmatprep.subr.bf16.mxu0 0
    %1567 = vmatpush1.bf16.msra.mxu0 0
    %1568 = vmatprep.subr.bf16.mxu0 0
    %1569 = vmatpush1.bf16.msra.mxu0 0
    %1570 = vmatprep.subr.bf16.mxu0 0
    %1571 = vmatpush1.bf16.msra.mxu0 0
    %1572 = vmatprep.mubr.bf16.mxu0 0
    %1573 = vmatmul.mubr.bf16.gmra.mrb[0].mxu0 %v1312
    %v1574 = vpop.f32.mrb[0].mxu0
    %v1575 = vadd.f32 0.0, %v1574
    %v1576 = vpop.f32.mrb[0].mxu0
    %v1577 = vpop.f32.mrb[0].mxu0
    %v1578 = vpop.f32.mrb[0].mxu0
    %1579 = vdwg.mxu0
    %v1580 = vadd.f32 %v1539, %v1575
    %v1581 = vmax.f32 %v1580, 0.0
    %v1582 = vpack.c.bf16 %v1581, %v1581
    %1583 = vmatprep.subr.bf16.mxu0 0
    %1584 = vmatpush1.bf16.msra.mxu0 %v1164
    %1585 = vmatprep.subr.bf16.mxu0 0
    %1586 = vmatpush1.bf16.msra.mxu0 %v1165
    %1587 = vmatprep.subr.bf16.mxu0 0
    %1588 = vmatpush1.bf16.msra.mxu0 %v1166
    %1589 = vmatprep.subr.bf16.mxu0 0
    %1590 = vmatpush1.bf16.msra.mxu0 %v1167
    %1591 = vmatprep.subr.bf16.mxu0 0
    %1592 = vmatpush1.bf16.msra.mxu0 %v1168
    %1593 = vmatprep.subr.bf16.mxu0 0
    %1594 = vmatpush1.bf16.msra.mxu0 %v1169
    %1595 = vmatprep.subr.bf16.mxu0 0
    %1596 = vmatpush1.bf16.msra.mxu0 %v1170
    %1597 = vmatprep.subr.bf16.mxu0 0
    %1598 = vmatpush1.bf16.msra.mxu0 %v1171
    %1599 = vmatprep.subr.bf16.mxu0 0
    %1600 = vmatpush1.bf16.msra.mxu0 0
    %1601 = vmatprep.subr.bf16.mxu0 0
    %1602 = vmatpush1.bf16.msra.mxu0 0
    %1603 = vmatprep.subr.bf16.mxu0 0
    %1604 = vmatpush1.bf16.msra.mxu0 0
    %1605 = vmatprep.subr.bf16.mxu0 0
    %1606 = vmatpush1.bf16.msra.mxu0 0
    %1607 = vmatprep.subr.bf16.mxu0 0
    %1608 = vmatpush1.bf16.msra.mxu0 0
    %1609 = vmatprep.subr.bf16.mxu0 0
    %1610 = vmatpush1.bf16.msra.mxu0 0
    %1611 = vmatprep.subr.bf16.mxu0 0
    %1612 = vmatpush1.bf16.msra.mxu0 0
    %1613 = vmatprep.subr.bf16.mxu0 0
    %1614 = vmatpush1.bf16.msra.mxu0 0
    %1615 = vmatprep.mubr.bf16.mxu0 0
    %1616 = vmatmul.mubr.bf16.gmra.mrb[0].mxu0 %v1582
    %v1617 = vpop.f32.mrb[0].mxu0
    %v1618 = vadd.f32 %v1130, %v1617
    %v1619 = vpop.f32.mrb[0].mxu0
    %v1620 = vpop.f32.mrb[0].mxu0
    %v1621 = vpop.f32.mrb[0].mxu0
    %1622 = vdwg.mxu0
    %v1623 = vpack.c.bf16 %v1443, %v1443
    %1624 = vmatprep.subr.bf16.mxu0 0
    %1625 = vmatpush1.bf16.msra.mxu0 %v1386
    %1626 = vmatprep.subr.bf16.mxu0 0
    %1627 = vmatpush1.bf16.msra.mxu0 %v1387
    %1628 = vmatprep.subr.bf16.mxu0 0
    %1629 = vmatpush1.bf16.msra.mxu0 %v1388
    %1630 = vmatprep.subr.bf16.mxu0 0
    %1631 = vmatpush1.bf16.msra.mxu0 %v1389
    %1632 = vmatprep.subr.bf16.mxu0 0
    %1633 = vmatpush1.bf16.msra.mxu0 %v1390
    %1634 = vmatprep.subr.bf16.mxu0 0
    %1635 = vmatpush1.bf16.msra.mxu0 %v1391
    %1636 = vmatprep.subr.bf16.mxu0 0
    %1637 = vmatpush1.bf16.msra.mxu0 %v1392
    %1638 = vmatprep.subr.bf16.mxu0 0
    %1639 = vmatpush1.bf16.msra.mxu0 %v1393
    %1640 = vmatprep.subr.bf16.mxu0 0
    %1641 = vmatpush1.bf16.msra.mxu0 0
    %1642 = vmatprep.subr.bf16.mxu0 0
    %1643 = vmatpush1.bf16.msra.mxu0 0
    %1644 = vmatprep.subr.bf16.mxu0 0
    %1645 = vmatpush1.bf16.msra.mxu0 0
    %1646 = vmatprep.subr.bf16.mxu0 0
    %1647 = vmatpush1.bf16.msra.mxu0 0
    %1648 = vmatprep.subr.bf16.mxu0 0
    %1649 = vmatpush1.bf16.msra.mxu0 0
    %1650 = vmatprep.subr.bf16.mxu0 0
    %1651 = vmatpush1.bf16.msra.mxu0 0
    %1652 = vmatprep.subr.bf16.mxu0 0
    %1653 = vmatpush1.bf16.msra.mxu0 0
    %1654 = vmatprep.subr.bf16.mxu0 0
    %1655 = vmatpush1.bf16.msra.mxu0 0
    %1656 = vmatprep.mubr.bf16.mxu0 0
    %1657 = vmatmul.mubr.bf16.gmra.mrb[0].mxu0 %v1623
    %v1658 = vpop.f32.mrb[0].mxu0
    %v1659 = vadd.f32 0.0, %v1658
    %v1660 = vpop.f32.mrb[0].mxu0
    %v1661 = vpop.f32.mrb[0].mxu0
    %v1662 = vpop.f32.mrb[0].mxu0
    %1663 = vdwg.mxu0
    %v1664 = vadd.f32 %v1618, %v1659
    %v1665 = vmax.f32 %v1664, 0.0
    %1666 = vmatprep.subr.bf16.mxu0 0
    %1667 = vmatpush1.bf16.msra.mxu0 %v1482
    %1668 = vmatprep.subr.bf16.mxu0 0
    %1669 = vmatpush1.bf16.msra.mxu0 %v1483
    %1670 = vmatprep.subr.bf16.mxu0 0
    %1671 = vmatpush1.bf16.msra.mxu0 %v1484
    %1672 = vmatprep.subr.bf16.mxu0 0
    %1673 = vmatpush1.bf16.msra.mxu0 %v1485
    %1674 = vmatprep.subr.bf16.mxu0 0
    %1675 = vmatpush1.bf16.msra.mxu0 %v1486
    %1676 = vmatprep.subr.bf16.mxu0 0
    %1677 = vmatpush1.bf16.msra.mxu0 %v1487
    %1678 = vmatprep.subr.bf16.mxu0 0
    %1679 = vmatpush1.bf16.msra.mxu0 %v1488
    %1680 = vmatprep.subr.bf16.mxu0 0
    %1681 = vmatpush1.bf16.msra.mxu0 %v1489
    %1682 = vmatprep.subr.bf16.mxu0 0
    %1683 = vmatpush1.bf16.msra.mxu0 0
    %1684 = vmatprep.subr.bf16.mxu0 0
    %1685 = vmatpush1.bf16.msra.mxu0 0
    %1686 = vmatprep.subr.bf16.mxu0 0
    %1687 = vmatpush1.bf16.msra.mxu0 0
    %1688 = vmatprep.subr.bf16.mxu0 0
    %1689 = vmatpush1.bf16.msra.mxu0 0
    %1690 = vmatprep.subr.bf16.mxu0 0
    %1691 = vmatpush1.bf16.msra.mxu0 0
    %1692 = vmatprep.subr.bf16.mxu0 0
    %1693 = vmatpush1.bf16.msra.mxu0 0
    %1694 = vmatprep.subr.bf16.mxu0 0
    %1695 = vmatpush1.bf16.msra.mxu0 0
    %1696 = vmatprep.subr.bf16.mxu0 0
    %1697 = vmatpush1.bf16.msra.mxu0 0
    %1698 = vmatprep.mubr.bf16.mxu0 0
    %1699 = vmatmul.mubr.bf16.gmra.mrb[0].mxu0 %v1623
    %v1700 = vpop.f32.mrb[0].mxu0
    %v1701 = vadd.f32 %v1448, %v1700
    %v1702 = vpop.f32.mrb[0].mxu0
    %v1703 = vpop.f32.mrb[0].mxu0
    %v1704 = vpop.f32.mrb[0].mxu0
    %1705 = vdwg.mxu0
    %v1706 = vpack.c.bf16 %v1538, %v1538
    %v1723 = vunpack.c.l.b16 %v1106
    %v1724 = vunpack.c.l.b16 %v1107
    %v1725 = vunpack.c.l.b16 %v1108
    %v1726 = vunpack.c.l.b16 %v1109
    %v1727 = vunpack.c.l.b16 %v1110
    %v1728 = vunpack.c.l.b16 %v1111
    %v1729 = vunpack.c.l.b16 %v1112
    %v1730 = vunpack.c.l.b16 %v1113
    %v1731 = vunpack.c.l.b16 %v1114
    %v1732 = vunpack.c.l.b16 %v1115
    %v1733 = vunpack.c.l.b16 %v1116
    %v1734 = vunpack.c.l.b16 %v1117
    %v1735 = vunpack.c.l.b16 %v1118
    %v1736 = vunpack.c.l.b16 %v1119
    %v1737 = vunpack.c.l.b16 %v1120
    %v1738 = vunpack.c.l.b16 %v1121
    %v1739 = vpack.c.b16 %v1724, %v1723
    %v1740 = vpack.c.b16 %v1726, %v1725
    %v1741 = vpack.c.b16 %v1728, %v1727
    %v1742 = vpack.c.b16 %v1730, %v1729
    %v1743 = vpack.c.b16 %v1732, %v1731
    %v1744 = vpack.c.b16 %v1734, %v1733
    %v1745 = vpack.c.b16 %v1736, %v1735
    %v1746 = vpack.c.b16 %v1738, %v1737
    %1755 = vmatprep.subr.bf16.mxu0 0
    %1756 = vmatpush1.bf16.msra.mxu0 %v1739
    %1757 = vmatprep.subr.bf16.mxu0 0
    %1758 = vmatpush1.bf16.msra.mxu0 %v1740
    %1759 = vmatprep.subr.bf16.mxu0 0
    %1760 = vmatpush1.bf16.msra.mxu0 %v1741
    %1761 = vmatprep.subr.bf16.mxu0 0
    %1762 = vmatpush1.bf16.msra.mxu0 %v1742
    %1763 = vmatprep.subr.bf16.mxu0 0
    %1764 = vmatpush1.bf16.msra.mxu0 %v1743
    %1765 = vmatprep.subr.bf16.mxu0 0
    %1766 = vmatpush1.bf16.msra.mxu0 %v1744
    %1767 = vmatprep.subr.bf16.mxu0 0
    %1768 = vmatpush1.bf16.msra.mxu0 %v1745
    %1769 = vmatprep.subr.bf16.mxu0 0
    %1770 = vmatpush1.bf16.msra.mxu0 %v1746
    %1771 = vmatprep.subr.bf16.mxu0 0
    %1772 = vmatpush1.bf16.msra.mxu0 0
    %1773 = vmatprep.subr.bf16.mxu0 0
    %1774 = vmatpush1.bf16.msra.mxu0 0
    %1775 = vmatprep.subr.bf16.mxu0 0
    %1776 = vmatpush1.bf16.msra.mxu0 0
    %1777 = vmatprep.subr.bf16.mxu0 0
    %1778 = vmatpush1.bf16.msra.mxu0 0
    %1779 = vmatprep.subr.bf16.mxu0 0
    %1780 = vmatpush1.bf16.msra.mxu0 0
    %1781 = vmatprep.subr.bf16.mxu0 0
    %1782 = vmatpush1.bf16.msra.mxu0 0
    %1783 = vmatprep.subr.bf16.mxu0 0
    %1784 = vmatpush1.bf16.msra.mxu0 0
    %1785 = vmatprep.subr.bf16.mxu0 0
    %1786 = vmatpush1.bf16.msra.mxu0 0
    %1787 = vmatprep.mubr.bf16.mxu0 0
    %1788 = vmatmul.mubr.bf16.gmra.mrb[0].mxu0 %v1706
    %v1789 = vpop.f32.mrb[0].mxu0
    %v1790 = vadd.f32 0.0, %v1789
    %v1791 = vpop.f32.mrb[0].mxu0
    %v1792 = vpop.f32.mrb[0].mxu0
    %v1793 = vpop.f32.mrb[0].mxu0
    %1794 = vdwg.mxu0
    %v1795 = vadd.f32 %v1701, %v1790
    %v1796 = vmax.f32 %v1795, 0.0
    %v1797 = vld [vmem:[#allocation2 + $0x18] sm:$0xff]
    %1798 = vmatprep.subr.bf16.mxu0 0
    %1799 = vmatpush1.bf16.msra.mxu0 %v1254
    %1800 = vmatprep.subr.bf16.mxu0 0
    %1801 = vmatpush1.bf16.msra.mxu0 %v1255
    %1802 = vmatprep.subr.bf16.mxu0 0
    %1803 = vmatpush1.bf16.msra.mxu0 %v1256
    %1804 = vmatprep.subr.bf16.mxu0 0
    %1805 = vmatpush1.bf16.msra.mxu0 %v1257
    %1806 = vmatprep.subr.bf16.mxu0 0
    %1807 = vmatpush1.bf16.msra.mxu0 %v1258
    %1808 = vmatprep.subr.bf16.mxu0 0
    %1809 = vmatpush1.bf16.msra.mxu0 %v1259
    %1810 = vmatprep.subr.bf16.mxu0 0
    %1811 = vmatpush1.bf16.msra.mxu0 %v1260
    %1812 = vmatprep.subr.bf16.mxu0 0
    %1813 = vmatpush1.bf16.msra.mxu0 %v1261
    %1814 = vmatprep.subr.bf16.mxu0 0
    %1815 = vmatpush1.bf16.msra.mxu0 0
    %1816 = vmatprep.subr.bf16.mxu0 0
    %1817 = vmatpush1.bf16.msra.mxu0 0
    %1818 = vmatprep.subr.bf16.mxu0 0
    %1819 = vmatpush1.bf16.msra.mxu0 0
    %1820 = vmatprep.subr.bf16.mxu0 0
    %1821 = vmatpush1.bf16.msra.mxu0 0
    %1822 = vmatprep.subr.bf16.mxu0 0
    %1823 = vmatpush1.bf16.msra.mxu0 0
    %1824 = vmatprep.subr.bf16.mxu0 0
    %1825 = vmatpush1.bf16.msra.mxu0 0
    %1826 = vmatprep.subr.bf16.mxu0 0
    %1827 = vmatpush1.bf16.msra.mxu0 0
    %1828 = vmatprep.subr.bf16.mxu0 0
    %1829 = vmatpush1.bf16.msra.mxu0 0
    %1830 = vmatprep.mubr.bf16.mxu0 0
    %1831 = vmatmul.mubr.bf16.gmra.mrb[0].mxu0 %v1582
    %v1832 = vpop.f32.mrb[0].mxu0
    %v1833 = vadd.f32 0.0, %v1832
    %v1834 = vpop.f32.mrb[0].mxu0
    %v1835 = vpop.f32.mrb[0].mxu0
    %v1836 = vpop.f32.mrb[0].mxu0
    %1837 = vdwg.mxu0
    %v1838 = vadd.f32 %v1797, %v1833
    %v1839 = vmax.f32 %v1838, 0.0
    %v1840 = vpack.c.bf16 %v1839, %v1839
    %1841 = vmatprep.subr.bf16.mxu0 0
    %1842 = vmatpush1.bf16.msra.mxu0 %v1164
    %1843 = vmatprep.subr.bf16.mxu0 0
    %1844 = vmatpush1.bf16.msra.mxu0 %v1165
    %1845 = vmatprep.subr.bf16.mxu0 0
    %1846 = vmatpush1.bf16.msra.mxu0 %v1166
    %1847 = vmatprep.subr.bf16.mxu0 0
    %1848 = vmatpush1.bf16.msra.mxu0 %v1167
    %1849 = vmatprep.subr.bf16.mxu0 0
    %1850 = vmatpush1.bf16.msra.mxu0 %v1168
    %1851 = vmatprep.subr.bf16.mxu0 0
    %1852 = vmatpush1.bf16.msra.mxu0 %v1169
    %1853 = vmatprep.subr.bf16.mxu0 0
    %1854 = vmatpush1.bf16.msra.mxu0 %v1170
    %1855 = vmatprep.subr.bf16.mxu0 0
    %1856 = vmatpush1.bf16.msra.mxu0 %v1171
    %1857 = vmatprep.subr.bf16.mxu0 0
    %1858 = vmatpush1.bf16.msra.mxu0 0
    %1859 = vmatprep.subr.bf16.mxu0 0
    %1860 = vmatpush1.bf16.msra.mxu0 0
    %1861 = vmatprep.subr.bf16.mxu0 0
    %1862 = vmatpush1.bf16.msra.mxu0 0
    %1863 = vmatprep.subr.bf16.mxu0 0
    %1864 = vmatpush1.bf16.msra.mxu0 0
    %1865 = vmatprep.subr.bf16.mxu0 0
    %1866 = vmatpush1.bf16.msra.mxu0 0
    %1867 = vmatprep.subr.bf16.mxu0 0
    %1868 = vmatpush1.bf16.msra.mxu0 0
    %1869 = vmatprep.subr.bf16.mxu0 0
    %1870 = vmatpush1.bf16.msra.mxu0 0
    %1871 = vmatprep.subr.bf16.mxu0 0
    %1872 = vmatpush1.bf16.msra.mxu0 0
    %1873 = vmatprep.mubr.bf16.mxu0 0
    %1874 = vmatmul.mubr.bf16.gmra.mrb[0].mxu0 %v1840
    %v1875 = vpop.f32.mrb[0].mxu0
    %v1876 = vadd.f32 %v1130, %v1875
    %v1877 = vpop.f32.mrb[0].mxu0
    %v1878 = vpop.f32.mrb[0].mxu0
    %v1879 = vpop.f32.mrb[0].mxu0
    %1880 = vdwg.mxu0
    %v1881 = vpack.c.bf16 %v1665, %v1665
    %1882 = vmatprep.subr.bf16.mxu0 0
    %1883 = vmatpush1.bf16.msra.mxu0 %v1386
    %1884 = vmatprep.subr.bf16.mxu0 0
    %1885 = vmatpush1.bf16.msra.mxu0 %v1387
    %1886 = vmatprep.subr.bf16.mxu0 0
    %1887 = vmatpush1.bf16.msra.mxu0 %v1388
    %1888 = vmatprep.subr.bf16.mxu0 0
    %1889 = vmatpush1.bf16.msra.mxu0 %v1389
    %1890 = vmatprep.subr.bf16.mxu0 0
    %1891 = vmatpush1.bf16.msra.mxu0 %v1390
    %1892 = vmatprep.subr.bf16.mxu0 0
    %1893 = vmatpush1.bf16.msra.mxu0 %v1391
    %1894 = vmatprep.subr.bf16.mxu0 0
    %1895 = vmatpush1.bf16.msra.mxu0 %v1392
    %1896 = vmatprep.subr.bf16.mxu0 0
    %1897 = vmatpush1.bf16.msra.mxu0 %v1393
    %1898 = vmatprep.subr.bf16.mxu0 0
    %1899 = vmatpush1.bf16.msra.mxu0 0
    %1900 = vmatprep.subr.bf16.mxu0 0
    %1901 = vmatpush1.bf16.msra.mxu0 0
    %1902 = vmatprep.subr.bf16.mxu0 0
    %1903 = vmatpush1.bf16.msra.mxu0 0
    %1904 = vmatprep.subr.bf16.mxu0 0
    %1905 = vmatpush1.bf16.msra.mxu0 0
    %1906 = vmatprep.subr.bf16.mxu0 0
    %1907 = vmatpush1.bf16.msra.mxu0 0
    %1908 = vmatprep.subr.bf16.mxu0 0
    %1909 = vmatpush1.bf16.msra.mxu0 0
    %1910 = vmatprep.subr.bf16.mxu0 0
    %1911 = vmatpush1.bf16.msra.mxu0 0
    %1912 = vmatprep.subr.bf16.mxu0 0
    %1913 = vmatpush1.bf16.msra.mxu0 0
    %1914 = vmatprep.mubr.bf16.mxu0 0
    %1915 = vmatmul.mubr.bf16.gmra.mrb[0].mxu0 %v1881
    %v1916 = vpop.f32.mrb[0].mxu0
    %v1917 = vadd.f32 0.0, %v1916
    %v1918 = vpop.f32.mrb[0].mxu0
    %v1919 = vpop.f32.mrb[0].mxu0
    %v1920 = vpop.f32.mrb[0].mxu0
    %1921 = vdwg.mxu0
    %v1922 = vadd.f32 %v1876, %v1917
    %v1923 = vmax.f32 %v1922, 0.0
    %1924 = vmatprep.subr.bf16.mxu0 0
    %1925 = vmatpush1.bf16.msra.mxu0 %v1482
    %1926 = vmatprep.subr.bf16.mxu0 0
    %1927 = vmatpush1.bf16.msra.mxu0 %v1483
    %1928 = vmatprep.subr.bf16.mxu0 0
    %1929 = vmatpush1.bf16.msra.mxu0 %v1484
    %1930 = vmatprep.subr.bf16.mxu0 0
    %1931 = vmatpush1.bf16.msra.mxu0 %v1485
    %1932 = vmatprep.subr.bf16.mxu0 0
    %1933 = vmatpush1.bf16.msra.mxu0 %v1486
    %1934 = vmatprep.subr.bf16.mxu0 0
    %1935 = vmatpush1.bf16.msra.mxu0 %v1487
    %1936 = vmatprep.subr.bf16.mxu0 0
    %1937 = vmatpush1.bf16.msra.mxu0 %v1488
    %1938 = vmatprep.subr.bf16.mxu0 0
    %1939 = vmatpush1.bf16.msra.mxu0 %v1489
    %1940 = vmatprep.subr.bf16.mxu0 0
    %1941 = vmatpush1.bf16.msra.mxu0 0
    %1942 = vmatprep.subr.bf16.mxu0 0
    %1943 = vmatpush1.bf16.msra.mxu0 0
    %1944 = vmatprep.subr.bf16.mxu0 0
    %1945 = vmatpush1.bf16.msra.mxu0 0
    %1946 = vmatprep.subr.bf16.mxu0 0
    %1947 = vmatpush1.bf16.msra.mxu0 0
    %1948 = vmatprep.subr.bf16.mxu0 0
    %1949 = vmatpush1.bf16.msra.mxu0 0
    %1950 = vmatprep.subr.bf16.mxu0 0
    %1951 = vmatpush1.bf16.msra.mxu0 0
    %1952 = vmatprep.subr.bf16.mxu0 0
    %1953 = vmatpush1.bf16.msra.mxu0 0
    %1954 = vmatprep.subr.bf16.mxu0 0
    %1955 = vmatpush1.bf16.msra.mxu0 0
    %1956 = vmatprep.mubr.bf16.mxu0 0
    %1957 = vmatmul.mubr.bf16.gmra.mrb[0].mxu0 %v1881
    %v1958 = vpop.f32.mrb[0].mxu0
    %v1959 = vadd.f32 %v1448, %v1958
    %v1960 = vpop.f32.mrb[0].mxu0
    %v1961 = vpop.f32.mrb[0].mxu0
    %v1962 = vpop.f32.mrb[0].mxu0
    %1963 = vdwg.mxu0
    %v1964 = vpack.c.bf16 %v1796, %v1796
    %1965 = vmatprep.subr.bf16.mxu0 0
    %1966 = vmatpush1.bf16.msra.mxu0 %v1739
    %1967 = vmatprep.subr.bf16.mxu0 0
    %1968 = vmatpush1.bf16.msra.mxu0 %v1740
    %1969 = vmatprep.subr.bf16.mxu0 0
    %1970 = vmatpush1.bf16.msra.mxu0 %v1741
    %1971 = vmatprep.subr.bf16.mxu0 0
    %1972 = vmatpush1.bf16.msra.mxu0 %v1742
    %1973 = vmatprep.subr.bf16.mxu0 0
    %1974 = vmatpush1.bf16.msra.mxu0 %v1743
    %1975 = vmatprep.subr.bf16.mxu0 0
    %1976 = vmatpush1.bf16.msra.mxu0 %v1744
    %1977 = vmatprep.subr.bf16.mxu0 0
    %1978 = vmatpush1.bf16.msra.mxu0 %v1745
    %1979 = vmatprep.subr.bf16.mxu0 0
    %1980 = vmatpush1.bf16.msra.mxu0 %v1746
    %1981 = vmatprep.subr.bf16.mxu0 0
    %1982 = vmatpush1.bf16.msra.mxu0 0
    %1983 = vmatprep.subr.bf16.mxu0 0
    %1984 = vmatpush1.bf16.msra.mxu0 0
    %1985 = vmatprep.subr.bf16.mxu0 0
    %1986 = vmatpush1.bf16.msra.mxu0 0
    %1987 = vmatprep.subr.bf16.mxu0 0
    %1988 = vmatpush1.bf16.msra.mxu0 0
    %1989 = vmatprep.subr.bf16.mxu0 0
    %1990 = vmatpush1.bf16.msra.mxu0 0
    %1991 = vmatprep.subr.bf16.mxu0 0
    %1992 = vmatpush1.bf16.msra.mxu0 0
    %1993 = vmatprep.subr.bf16.mxu0 0
    %1994 = vmatpush1.bf16.msra.mxu0 0
    %1995 = vmatprep.subr.bf16.mxu0 0
    %1996 = vmatpush1.bf16.msra.mxu0 0
    %1997 = vmatprep.mubr.bf16.mxu0 0
    %1998 = vmatmul.mubr.bf16.gmra.mrb[0].mxu0 %v1964
    %v1999 = vpop.f32.mrb[0].mxu0
    %v2000 = vadd.f32 0.0, %v1999
    %v2001 = vpop.f32.mrb[0].mxu0
    %v2002 = vpop.f32.mrb[0].mxu0
    %v2003 = vpop.f32.mrb[0].mxu0
    %2004 = vdwg.mxu0
    %v2005 = vadd.f32 %v1959, %v2000
    %v2006 = vmax.f32 %v2005, 0.0
    %v2007 = vld [vmem:[#allocation2 + $0x20] sm:$0xff]
    %2008 = vmatprep.subr.bf16.mxu0 0
    %2009 = vmatpush1.bf16.msra.mxu0 %v1254
    %2010 = vmatprep.subr.bf16.mxu0 0
    %2011 = vmatpush1.bf16.msra.mxu0 %v1255
    %2012 = vmatprep.subr.bf16.mxu0 0
    %2013 = vmatpush1.bf16.msra.mxu0 %v1256
    %2014 = vmatprep.subr.bf16.mxu0 0
    %2015 = vmatpush1.bf16.msra.mxu0 %v1257
    %2016 = vmatprep.subr.bf16.mxu0 0
    %2017 = vmatpush1.bf16.msra.mxu0 %v1258
    %2018 = vmatprep.subr.bf16.mxu0 0
    %2019 = vmatpush1.bf16.msra.mxu0 %v1259
    %2020 = vmatprep.subr.bf16.mxu0 0
    %2021 = vmatpush1.bf16.msra.mxu0 %v1260
    %2022 = vmatprep.subr.bf16.mxu0 0
    %2023 = vmatpush1.bf16.msra.mxu0 %v1261
    %2024 = vmatprep.subr.bf16.mxu0 0
    %2025 = vmatpush1.bf16.msra.mxu0 0
    %2026 = vmatprep.subr.bf16.mxu0 0
    %2027 = vmatpush1.bf16.msra.mxu0 0
    %2028 = vmatprep.subr.bf16.mxu0 0
    %2029 = vmatpush1.bf16.msra.mxu0 0
    %2030 = vmatprep.subr.bf16.mxu0 0
    %2031 = vmatpush1.bf16.msra.mxu0 0
    %2032 = vmatprep.subr.bf16.mxu0 0
    %2033 = vmatpush1.bf16.msra.mxu0 0
    %2034 = vmatprep.subr.bf16.mxu0 0
    %2035 = vmatpush1.bf16.msra.mxu0 0
    %2036 = vmatprep.subr.bf16.mxu0 0
    %2037 = vmatpush1.bf16.msra.mxu0 0
    %2038 = vmatprep.subr.bf16.mxu0 0
    %2039 = vmatpush1.bf16.msra.mxu0 0
    %2040 = vmatprep.mubr.bf16.mxu0 0
    %2041 = vmatmul.mubr.bf16.gmra.mrb[0].mxu0 %v1840
    %v2042 = vpop.f32.mrb[0].mxu0
    %v2043 = vadd.f32 0.0, %v2042
    %v2044 = vpop.f32.mrb[0].mxu0
    %v2045 = vpop.f32.mrb[0].mxu0
    %v2046 = vpop.f32.mrb[0].mxu0
    %2047 = vdwg.mxu0
    %v2048 = vadd.f32 %v2007, %v2043
    %v2049 = vmax.f32 %v2048, 0.0
    %v2050 = vpack.c.bf16 %v2049, %v2049
    %2051 = vmatprep.subr.bf16.mxu0 0
    %2052 = vmatpush1.bf16.msra.mxu0 %v1164
    %2053 = vmatprep.subr.bf16.mxu0 0
    %2054 = vmatpush1.bf16.msra.mxu0 %v1165
    %2055 = vmatprep.subr.bf16.mxu0 0
    %2056 = vmatpush1.bf16.msra.mxu0 %v1166
    %2057 = vmatprep.subr.bf16.mxu0 0
    %2058 = vmatpush1.bf16.msra.mxu0 %v1167
    %2059 = vmatprep.subr.bf16.mxu0 0
    %2060 = vmatpush1.bf16.msra.mxu0 %v1168
    %2061 = vmatprep.subr.bf16.mxu0 0
    %2062 = vmatpush1.bf16.msra.mxu0 %v1169
    %2063 = vmatprep.subr.bf16.mxu0 0
    %2064 = vmatpush1.bf16.msra.mxu0 %v1170
    %2065 = vmatprep.subr.bf16.mxu0 0
    %2066 = vmatpush1.bf16.msra.mxu0 %v1171
    %2067 = vmatprep.subr.bf16.mxu0 0
    %2068 = vmatpush1.bf16.msra.mxu0 0
    %2069 = vmatprep.subr.bf16.mxu0 0
    %2070 = vmatpush1.bf16.msra.mxu0 0
    %2071 = vmatprep.subr.bf16.mxu0 0
    %2072 = vmatpush1.bf16.msra.mxu0 0
    %2073 = vmatprep.subr.bf16.mxu0 0
    %2074 = vmatpush1.bf16.msra.mxu0 0
    %2075 = vmatprep.subr.bf16.mxu0 0
    %2076 = vmatpush1.bf16.msra.mxu0 0
    %2077 = vmatprep.subr.bf16.mxu0 0
    %2078 = vmatpush1.bf16.msra.mxu0 0
    %2079 = vmatprep.subr.bf16.mxu0 0
    %2080 = vmatpush1.bf16.msra.mxu0 0
    %2081 = vmatprep.subr.bf16.mxu0 0
    %2082 = vmatpush1.bf16.msra.mxu0 0
    %2083 = vmatprep.mubr.bf16.mxu0 0
    %2084 = vmatmul.mubr.bf16.gmra.mrb[0].mxu0 %v2050
    %v2085 = vpop.f32.mrb[0].mxu0
    %v2086 = vadd.f32 %v1130, %v2085
    %v2087 = vpop.f32.mrb[0].mxu0
    %v2088 = vpop.f32.mrb[0].mxu0
    %v2089 = vpop.f32.mrb[0].mxu0
    %2090 = vdwg.mxu0
    %v2091 = vpack.c.bf16 %v1923, %v1923
    %2092 = vmatprep.subr.bf16.mxu0 0
    %2093 = vmatpush1.bf16.msra.mxu0 %v1386
    %2094 = vmatprep.subr.bf16.mxu0 0
    %2095 = vmatpush1.bf16.msra.mxu0 %v1387
    %2096 = vmatprep.subr.bf16.mxu0 0
    %2097 = vmatpush1.bf16.msra.mxu0 %v1388
    %2098 = vmatprep.subr.bf16.mxu0 0
    %2099 = vmatpush1.bf16.msra.mxu0 %v1389
    %2100 = vmatprep.subr.bf16.mxu0 0
    %2101 = vmatpush1.bf16.msra.mxu0 %v1390
    %2102 = vmatprep.subr.bf16.mxu0 0
    %2103 = vmatpush1.bf16.msra.mxu0 %v1391
    %2104 = vmatprep.subr.bf16.mxu0 0
    %2105 = vmatpush1.bf16.msra.mxu0 %v1392
    %2106 = vmatprep.subr.bf16.mxu0 0
    %2107 = vmatpush1.bf16.msra.mxu0 %v1393
    %2108 = vmatprep.subr.bf16.mxu0 0
    %2109 = vmatpush1.bf16.msra.mxu0 0
    %2110 = vmatprep.subr.bf16.mxu0 0
    %2111 = vmatpush1.bf16.msra.mxu0 0
    %2112 = vmatprep.subr.bf16.mxu0 0
    %2113 = vmatpush1.bf16.msra.mxu0 0
    %2114 = vmatprep.subr.bf16.mxu0 0
    %2115 = vmatpush1.bf16.msra.mxu0 0
    %2116 = vmatprep.subr.bf16.mxu0 0
    %2117 = vmatpush1.bf16.msra.mxu0 0
    %2118 = vmatprep.subr.bf16.mxu0 0
    %2119 = vmatpush1.bf16.msra.mxu0 0
    %2120 = vmatprep.subr.bf16.mxu0 0
    %2121 = vmatpush1.bf16.msra.mxu0 0
    %2122 = vmatprep.subr.bf16.mxu0 0
    %2123 = vmatpush1.bf16.msra.mxu0 0
    %2124 = vmatprep.mubr.bf16.mxu0 0
    %2125 = vmatmul.mubr.bf16.gmra.mrb[0].mxu0 %v2091
    %v2126 = vpop.f32.mrb[0].mxu0
    %v2127 = vadd.f32 0.0, %v2126
    %v2128 = vpop.f32.mrb[0].mxu0
    %v2129 = vpop.f32.mrb[0].mxu0
    %v2130 = vpop.f32.mrb[0].mxu0
    %2131 = vdwg.mxu0
    %v2132 = vadd.f32 %v2086, %v2127
    %v2133 = vmax.f32 %v2132, 0.0
    %2134 = vmatprep.subr.bf16.mxu0 0
    %2135 = vmatpush1.bf16.msra.mxu0 %v1482
    %2136 = vmatprep.subr.bf16.mxu0 0
    %2137 = vmatpush1.bf16.msra.mxu0 %v1483
    %2138 = vmatprep.subr.bf16.mxu0 0
    %2139 = vmatpush1.bf16.msra.mxu0 %v1484
    %2140 = vmatprep.subr.bf16.mxu0 0
    %2141 = vmatpush1.bf16.msra.mxu0 %v1485
    %2142 = vmatprep.subr.bf16.mxu0 0
    %2143 = vmatpush1.bf16.msra.mxu0 %v1486
    %2144 = vmatprep.subr.bf16.mxu0 0
    %2145 = vmatpush1.bf16.msra.mxu0 %v1487
    %2146 = vmatprep.subr.bf16.mxu0 0
    %2147 = vmatpush1.bf16.msra.mxu0 %v1488
    %2148 = vmatprep.subr.bf16.mxu0 0
    %2149 = vmatpush1.bf16.msra.mxu0 %v1489
    %2150 = vmatprep.subr.bf16.mxu0 0
    %2151 = vmatpush1.bf16.msra.mxu0 0
    %2152 = vmatprep.subr.bf16.mxu0 0
    %2153 = vmatpush1.bf16.msra.mxu0 0
    %2154 = vmatprep.subr.bf16.mxu0 0
    %2155 = vmatpush1.bf16.msra.mxu0 0
    %2156 = vmatprep.subr.bf16.mxu0 0
    %2157 = vmatpush1.bf16.msra.mxu0 0
    %2158 = vmatprep.subr.bf16.mxu0 0
    %2159 = vmatpush1.bf16.msra.mxu0 0
    %2160 = vmatprep.subr.bf16.mxu0 0
    %2161 = vmatpush1.bf16.msra.mxu0 0
    %2162 = vmatprep.subr.bf16.mxu0 0
    %2163 = vmatpush1.bf16.msra.mxu0 0
    %2164 = vmatprep.subr.bf16.mxu0 0
    %2165 = vmatpush1.bf16.msra.mxu0 0
    %2166 = vmatprep.mubr.bf16.mxu0 0
    %2167 = vmatmul.mubr.bf16.gmra.mrb[0].mxu0 %v2091
    %v2168 = vpop.f32.mrb[0].mxu0
    %v2169 = vadd.f32 %v1448, %v2168
    %v2170 = vpop.f32.mrb[0].mxu0
    %v2171 = vpop.f32.mrb[0].mxu0
    %v2172 = vpop.f32.mrb[0].mxu0
    %2173 = vdwg.mxu0
    %v2174 = vpack.c.bf16 %v2006, %v2006
    %2175 = vmatprep.subr.bf16.mxu0 0
    %2176 = vmatpush1.bf16.msra.mxu0 %v1739
    %2177 = vmatprep.subr.bf16.mxu0 0
    %2178 = vmatpush1.bf16.msra.mxu0 %v1740
    %2179 = vmatprep.subr.bf16.mxu0 0
    %2180 = vmatpush1.bf16.msra.mxu0 %v1741
    %2181 = vmatprep.subr.bf16.mxu0 0
    %2182 = vmatpush1.bf16.msra.mxu0 %v1742
    %2183 = vmatprep.subr.bf16.mxu0 0
    %2184 = vmatpush1.bf16.msra.mxu0 %v1743
    %2185 = vmatprep.subr.bf16.mxu0 0
    %2186 = vmatpush1.bf16.msra.mxu0 %v1744
    %2187 = vmatprep.subr.bf16.mxu0 0
    %2188 = vmatpush1.bf16.msra.mxu0 %v1745
    %2189 = vmatprep.subr.bf16.mxu0 0
    %2190 = vmatpush1.bf16.msra.mxu0 %v1746
    %2191 = vmatprep.subr.bf16.mxu0 0
    %2192 = vmatpush1.bf16.msra.mxu0 0
    %2193 = vmatprep.subr.bf16.mxu0 0
    %2194 = vmatpush1.bf16.msra.mxu0 0
    %2195 = vmatprep.subr.bf16.mxu0 0
    %2196 = vmatpush1.bf16.msra.mxu0 0
    %2197 = vmatprep.subr.bf16.mxu0 0
    %2198 = vmatpush1.bf16.msra.mxu0 0
    %2199 = vmatprep.subr.bf16.mxu0 0
    %2200 = vmatpush1.bf16.msra.mxu0 0
    %2201 = vmatprep.subr.bf16.mxu0 0
    %2202 = vmatpush1.bf16.msra.mxu0 0
    %2203 = vmatprep.subr.bf16.mxu0 0
    %2204 = vmatpush1.bf16.msra.mxu0 0
    %2205 = vmatprep.subr.bf16.mxu0 0
    %2206 = vmatpush1.bf16.msra.mxu0 0
    %2207 = vmatprep.mubr.bf16.mxu0 0
    %2208 = vmatmul.mubr.bf16.gmra.mrb[0].mxu0 %v2174
    %v2209 = vpop.f32.mrb[0].mxu0
    %v2210 = vadd.f32 0.0, %v2209
    %v2211 = vpop.f32.mrb[0].mxu0
    %v2212 = vpop.f32.mrb[0].mxu0
    %v2213 = vpop.f32.mrb[0].mxu0
    %2214 = vdwg.mxu0
    %v2215 = vadd.f32 %v2169, %v2210
    %v2216 = vmax.f32 %v2215, 0.0
    %v2217 = vld [vmem:[#allocation2 + $0x28] sm:$0xff]
    %2218 = vmatprep.subr.bf16.mxu0 0
    %2219 = vmatpush1.bf16.msra.mxu0 %v1254
    %2220 = vmatprep.subr.bf16.mxu0 0
    %2221 = vmatpush1.bf16.msra.mxu0 %v1255
    %2222 = vmatprep.subr.bf16.mxu0 0
    %2223 = vmatpush1.bf16.msra.mxu0 %v1256
    %2224 = vmatprep.subr.bf16.mxu0 0
    %2225 = vmatpush1.bf16.msra.mxu0 %v1257
    %2226 = vmatprep.subr.bf16.mxu0 0
    %2227 = vmatpush1.bf16.msra.mxu0 %v1258
    %2228 = vmatprep.subr.bf16.mxu0 0
    %2229 = vmatpush1.bf16.msra.mxu0 %v1259
    %2230 = vmatprep.subr.bf16.mxu0 0
    %2231 = vmatpush1.bf16.msra.mxu0 %v1260
    %2232 = vmatprep.subr.bf16.mxu0 0
    %2233 = vmatpush1.bf16.msra.mxu0 %v1261
    %2234 = vmatprep.subr.bf16.mxu0 0
    %2235 = vmatpush1.bf16.msra.mxu0 0
    %2236 = vmatprep.subr.bf16.mxu0 0
    %2237 = vmatpush1.bf16.msra.mxu0 0
    %2238 = vmatprep.subr.bf16.mxu0 0
    %2239 = vmatpush1.bf16.msra.mxu0 0
    %2240 = vmatprep.subr.bf16.mxu0 0
    %2241 = vmatpush1.bf16.msra.mxu0 0
    %2242 = vmatprep.subr.bf16.mxu0 0
    %2243 = vmatpush1.bf16.msra.mxu0 0
    %2244 = vmatprep.subr.bf16.mxu0 0
    %2245 = vmatpush1.bf16.msra.mxu0 0
    %2246 = vmatprep.subr.bf16.mxu0 0
    %2247 = vmatpush1.bf16.msra.mxu0 0
    %2248 = vmatprep.subr.bf16.mxu0 0
    %2249 = vmatpush1.bf16.msra.mxu0 0
    %2250 = vmatprep.mubr.bf16.mxu0 0
    %2251 = vmatmul.mubr.bf16.gmra.mrb[0].mxu0 %v2050
    %v2252 = vpop.f32.mrb[0].mxu0
    %v2253 = vadd.f32 0.0, %v2252
    %v2254 = vpop.f32.mrb[0].mxu0
    %v2255 = vpop.f32.mrb[0].mxu0
    %v2256 = vpop.f32.mrb[0].mxu0
    %2257 = vdwg.mxu0
    %v2258 = vadd.f32 %v2217, %v2253
    %v2259 = vmax.f32 %v2258, 0.0
    %v2260 = vpack.c.bf16 %v2259, %v2259
    %2261 = vmatprep.subr.bf16.mxu0 0
    %2262 = vmatpush1.bf16.msra.mxu0 %v1164
    %2263 = vmatprep.subr.bf16.mxu0 0
    %2264 = vmatpush1.bf16.msra.mxu0 %v1165
    %2265 = vmatprep.subr.bf16.mxu0 0
    %2266 = vmatpush1.bf16.msra.mxu0 %v1166
    %2267 = vmatprep.subr.bf16.mxu0 0
    %2268 = vmatpush1.bf16.msra.mxu0 %v1167
    %2269 = vmatprep.subr.bf16.mxu0 0
    %2270 = vmatpush1.bf16.msra.mxu0 %v1168
    %2271 = vmatprep.subr.bf16.mxu0 0
    %2272 = vmatpush1.bf16.msra.mxu0 %v1169
    %2273 = vmatprep.subr.bf16.mxu0 0
    %2274 = vmatpush1.bf16.msra.mxu0 %v1170
    %2275 = vmatprep.subr.bf16.mxu0 0
    %2276 = vmatpush1.bf16.msra.mxu0 %v1171
    %2277 = vmatprep.subr.bf16.mxu0 0
    %2278 = vmatpush1.bf16.msra.mxu0 0
    %2279 = vmatprep.subr.bf16.mxu0 0
    %2280 = vmatpush1.bf16.msra.mxu0 0
    %2281 = vmatprep.subr.bf16.mxu0 0
    %2282 = vmatpush1.bf16.msra.mxu0 0
    %2283 = vmatprep.subr.bf16.mxu0 0
    %2284 = vmatpush1.bf16.msra.mxu0 0
    %2285 = vmatprep.subr.bf16.mxu0 0
    %2286 = vmatpush1.bf16.msra.mxu0 0
    %2287 = vmatprep.subr.bf16.mxu0 0
    %2288 = vmatpush1.bf16.msra.mxu0 0
    %2289 = vmatprep.subr.bf16.mxu0 0
    %2290 = vmatpush1.bf16.msra.mxu0 0
    %2291 = vmatprep.subr.bf16.mxu0 0
    %2292 = vmatpush1.bf16.msra.mxu0 0
    %2293 = vmatprep.mubr.bf16.mxu0 0
    %2294 = vmatmul.mubr.bf16.gmra.mrb[0].mxu0 %v2260
    %v2295 = vpop.f32.mrb[0].mxu0
    %v2296 = vadd.f32 %v1130, %v2295
    %v2297 = vpop.f32.mrb[0].mxu0
    %v2298 = vpop.f32.mrb[0].mxu0
    %v2299 = vpop.f32.mrb[0].mxu0
    %2300 = vdwg.mxu0
    %v2301 = vpack.c.bf16 %v2133, %v2133
    %2302 = vmatprep.subr.bf16.mxu0 0
    %2303 = vmatpush1.bf16.msra.mxu0 %v1386
    %2304 = vmatprep.subr.bf16.mxu0 0
    %2305 = vmatpush1.bf16.msra.mxu0 %v1387
    %2306 = vmatprep.subr.bf16.mxu0 0
    %2307 = vmatpush1.bf16.msra.mxu0 %v1388
    %2308 = vmatprep.subr.bf16.mxu0 0
    %2309 = vmatpush1.bf16.msra.mxu0 %v1389
    %2310 = vmatprep.subr.bf16.mxu0 0
    %2311 = vmatpush1.bf16.msra.mxu0 %v1390
    %2312 = vmatprep.subr.bf16.mxu0 0
    %2313 = vmatpush1.bf16.msra.mxu0 %v1391
    %2314 = vmatprep.subr.bf16.mxu0 0
    %2315 = vmatpush1.bf16.msra.mxu0 %v1392
    %2316 = vmatprep.subr.bf16.mxu0 0
    %2317 = vmatpush1.bf16.msra.mxu0 %v1393
    %2318 = vmatprep.subr.bf16.mxu0 0
    %2319 = vmatpush1.bf16.msra.mxu0 0
    %2320 = vmatprep.subr.bf16.mxu0 0
    %2321 = vmatpush1.bf16.msra.mxu0 0
    %2322 = vmatprep.subr.bf16.mxu0 0
    %2323 = vmatpush1.bf16.msra.mxu0 0
    %2324 = vmatprep.subr.bf16.mxu0 0
    %2325 = vmatpush1.bf16.msra.mxu0 0
    %2326 = vmatprep.subr.bf16.mxu0 0
    %2327 = vmatpush1.bf16.msra.mxu0 0
    %2328 = vmatprep.subr.bf16.mxu0 0
    %2329 = vmatpush1.bf16.msra.mxu0 0
    %2330 = vmatprep.subr.bf16.mxu0 0
    %2331 = vmatpush1.bf16.msra.mxu0 0
    %2332 = vmatprep.subr.bf16.mxu0 0
    %2333 = vmatpush1.bf16.msra.mxu0 0
    %2334 = vmatprep.mubr.bf16.mxu0 0
    %2335 = vmatmul.mubr.bf16.gmra.mrb[0].mxu0 %v2301
    %v2336 = vpop.f32.mrb[0].mxu0
    %v2337 = vadd.f32 0.0, %v2336
    %v2338 = vpop.f32.mrb[0].mxu0
    %v2339 = vpop.f32.mrb[0].mxu0
    %v2340 = vpop.f32.mrb[0].mxu0
    %2341 = vdwg.mxu0
    %v2342 = vadd.f32 %v2296, %v2337
    %v2343 = vmax.f32 %v2342, 0.0
    %2344 = vmatprep.subr.bf16.mxu0 0
    %2345 = vmatpush1.bf16.msra.mxu0 %v1482
    %2346 = vmatprep.subr.bf16.mxu0 0
    %2347 = vmatpush1.bf16.msra.mxu0 %v1483
    %2348 = vmatprep.subr.bf16.mxu0 0
    %2349 = vmatpush1.bf16.msra.mxu0 %v1484
    %2350 = vmatprep.subr.bf16.mxu0 0
    %2351 = vmatpush1.bf16.msra.mxu0 %v1485
    %2352 = vmatprep.subr.bf16.mxu0 0
    %2353 = vmatpush1.bf16.msra.mxu0 %v1486
    %2354 = vmatprep.subr.bf16.mxu0 0
    %2355 = vmatpush1.bf16.msra.mxu0 %v1487
    %2356 = vmatprep.subr.bf16.mxu0 0
    %2357 = vmatpush1.bf16.msra.mxu0 %v1488
    %2358 = vmatprep.subr.bf16.mxu0 0
    %2359 = vmatpush1.bf16.msra.mxu0 %v1489
    %2360 = vmatprep.subr.bf16.mxu0 0
    %2361 = vmatpush1.bf16.msra.mxu0 0
    %2362 = vmatprep.subr.bf16.mxu0 0
    %2363 = vmatpush1.bf16.msra.mxu0 0
    %2364 = vmatprep.subr.bf16.mxu0 0
    %2365 = vmatpush1.bf16.msra.mxu0 0
    %2366 = vmatprep.subr.bf16.mxu0 0
    %2367 = vmatpush1.bf16.msra.mxu0 0
    %2368 = vmatprep.subr.bf16.mxu0 0
    %2369 = vmatpush1.bf16.msra.mxu0 0
    %2370 = vmatprep.subr.bf16.mxu0 0
    %2371 = vmatpush1.bf16.msra.mxu0 0
    %2372 = vmatprep.subr.bf16.mxu0 0
    %2373 = vmatpush1.bf16.msra.mxu0 0
    %2374 = vmatprep.subr.bf16.mxu0 0
    %2375 = vmatpush1.bf16.msra.mxu0 0
    %2376 = vmatprep.mubr.bf16.mxu0 0
    %2377 = vmatmul.mubr.bf16.gmra.mrb[0].mxu0 %v2301
    %v2378 = vpop.f32.mrb[0].mxu0
    %v2379 = vadd.f32 %v1448, %v2378
    %v2380 = vpop.f32.mrb[0].mxu0
    %v2381 = vpop.f32.mrb[0].mxu0
    %v2382 = vpop.f32.mrb[0].mxu0
    %2383 = vdwg.mxu0
    %v2384 = vpack.c.bf16 %v2216, %v2216
    %2385 = vmatprep.subr.bf16.mxu0 0
    %2386 = vmatpush1.bf16.msra.mxu0 %v1739
    %2387 = vmatprep.subr.bf16.mxu0 0
    %2388 = vmatpush1.bf16.msra.mxu0 %v1740
    %2389 = vmatprep.subr.bf16.mxu0 0
    %2390 = vmatpush1.bf16.msra.mxu0 %v1741
    %2391 = vmatprep.subr.bf16.mxu0 0
    %2392 = vmatpush1.bf16.msra.mxu0 %v1742
    %2393 = vmatprep.subr.bf16.mxu0 0
    %2394 = vmatpush1.bf16.msra.mxu0 %v1743
    %2395 = vmatprep.subr.bf16.mxu0 0
    %2396 = vmatpush1.bf16.msra.mxu0 %v1744
    %2397 = vmatprep.subr.bf16.mxu0 0
    %2398 = vmatpush1.bf16.msra.mxu0 %v1745
    %2399 = vmatprep.subr.bf16.mxu0 0
    %2400 = vmatpush1.bf16.msra.mxu0 %v1746
    %2401 = vmatprep.subr.bf16.mxu0 0
    %2402 = vmatpush1.bf16.msra.mxu0 0
    %2403 = vmatprep.subr.bf16.mxu0 0
    %2404 = vmatpush1.bf16.msra.mxu0 0
    %2405 = vmatprep.subr.bf16.mxu0 0
    %2406 = vmatpush1.bf16.msra.mxu0 0
    %2407 = vmatprep.subr.bf16.mxu0 0
    %2408 = vmatpush1.bf16.msra.mxu0 0
    %2409 = vmatprep.subr.bf16.mxu0 0
    %2410 = vmatpush1.bf16.msra.mxu0 0
    %2411 = vmatprep.subr.bf16.mxu0 0
    %2412 = vmatpush1.bf16.msra.mxu0 0
    %2413 = vmatprep.subr.bf16.mxu0 0
    %2414 = vmatpush1.bf16.msra.mxu0 0
    %2415 = vmatprep.subr.bf16.mxu0 0
    %2416 = vmatpush1.bf16.msra.mxu0 0
    %2417 = vmatprep.mubr.bf16.mxu0 0
    %2418 = vmatmul.mubr.bf16.gmra.mrb[0].mxu0 %v2384
    %v2419 = vpop.f32.mrb[0].mxu0
    %v2420 = vadd.f32 0.0, %v2419
    %v2421 = vpop.f32.mrb[0].mxu0
    %v2422 = vpop.f32.mrb[0].mxu0
    %v2423 = vpop.f32.mrb[0].mxu0
    %2424 = vdwg.mxu0
    %v2425 = vadd.f32 %v2379, %v2420
    %v2426 = vmax.f32 %v2425, 0.0
    %v2427 = vld [vmem:[#allocation2 + $0x30] sm:$0xff]
    %2428 = vmatprep.subr.bf16.mxu0 0
    %2429 = vmatpush1.bf16.msra.mxu0 %v1254
    %2430 = vmatprep.subr.bf16.mxu0 0
    %2431 = vmatpush1.bf16.msra.mxu0 %v1255
    %2432 = vmatprep.subr.bf16.mxu0 0
    %2433 = vmatpush1.bf16.msra.mxu0 %v1256
    %2434 = vmatprep.subr.bf16.mxu0 0
    %2435 = vmatpush1.bf16.msra.mxu0 %v1257
    %2436 = vmatprep.subr.bf16.mxu0 0
    %2437 = vmatpush1.bf16.msra.mxu0 %v1258
    %2438 = vmatprep.subr.bf16.mxu0 0
    %2439 = vmatpush1.bf16.msra.mxu0 %v1259
    %2440 = vmatprep.subr.bf16.mxu0 0
    %2441 = vmatpush1.bf16.msra.mxu0 %v1260
    %2442 = vmatprep.subr.bf16.mxu0 0
    %2443 = vmatpush1.bf16.msra.mxu0 %v1261
    %2444 = vmatprep.subr.bf16.mxu0 0
    %2445 = vmatpush1.bf16.msra.mxu0 0
    %2446 = vmatprep.subr.bf16.mxu0 0
    %2447 = vmatpush1.bf16.msra.mxu0 0
    %2448 = vmatprep.subr.bf16.mxu0 0
    %2449 = vmatpush1.bf16.msra.mxu0 0
    %2450 = vmatprep.subr.bf16.mxu0 0
    %2451 = vmatpush1.bf16.msra.mxu0 0
    %2452 = vmatprep.subr.bf16.mxu0 0
    %2453 = vmatpush1.bf16.msra.mxu0 0
    %2454 = vmatprep.subr.bf16.mxu0 0
    %2455 = vmatpush1.bf16.msra.mxu0 0
    %2456 = vmatprep.subr.bf16.mxu0 0
    %2457 = vmatpush1.bf16.msra.mxu0 0
    %2458 = vmatprep.subr.bf16.mxu0 0
    %2459 = vmatpush1.bf16.msra.mxu0 0
    %2460 = vmatprep.mubr.bf16.mxu0 0
    %2461 = vmatmul.mubr.bf16.gmra.mrb[0].mxu0 %v2260
    %v2462 = vpop.f32.mrb[0].mxu0
    %v2463 = vadd.f32 0.0, %v2462
    %v2464 = vpop.f32.mrb[0].mxu0
    %v2465 = vpop.f32.mrb[0].mxu0
    %v2466 = vpop.f32.mrb[0].mxu0
    %2467 = vdwg.mxu0
    %v2468 = vadd.f32 %v2427, %v2463
    %v2469 = vmax.f32 %v2468, 0.0
    %v2470 = vpack.c.bf16 %v2469, %v2469
    %2471 = vmatprep.subr.bf16.mxu0 0
    %2472 = vmatpush1.bf16.msra.mxu0 %v1164
    %2473 = vmatprep.subr.bf16.mxu0 0
    %2474 = vmatpush1.bf16.msra.mxu0 %v1165
    %2475 = vmatprep.subr.bf16.mxu0 0
    %2476 = vmatpush1.bf16.msra.mxu0 %v1166
    %2477 = vmatprep.subr.bf16.mxu0 0
    %2478 = vmatpush1.bf16.msra.mxu0 %v1167
    %2479 = vmatprep.subr.bf16.mxu0 0
    %2480 = vmatpush1.bf16.msra.mxu0 %v1168
    %2481 = vmatprep.subr.bf16.mxu0 0
    %2482 = vmatpush1.bf16.msra.mxu0 %v1169
    %2483 = vmatprep.subr.bf16.mxu0 0
    %2484 = vmatpush1.bf16.msra.mxu0 %v1170
    %2485 = vmatprep.subr.bf16.mxu0 0
    %2486 = vmatpush1.bf16.msra.mxu0 %v1171
    %2487 = vmatprep.subr.bf16.mxu0 0
    %2488 = vmatpush1.bf16.msra.mxu0 0
    %2489 = vmatprep.subr.bf16.mxu0 0
    %2490 = vmatpush1.bf16.msra.mxu0 0
    %2491 = vmatprep.subr.bf16.mxu0 0
    %2492 = vmatpush1.bf16.msra.mxu0 0
    %2493 = vmatprep.subr.bf16.mxu0 0
    %2494 = vmatpush1.bf16.msra.mxu0 0
    %2495 = vmatprep.subr.bf16.mxu0 0
    %2496 = vmatpush1.bf16.msra.mxu0 0
    %2497 = vmatprep.subr.bf16.mxu0 0
    %2498 = vmatpush1.bf16.msra.mxu0 0
    %2499 = vmatprep.subr.bf16.mxu0 0
    %2500 = vmatpush1.bf16.msra.mxu0 0
    %2501 = vmatprep.subr.bf16.mxu0 0
    %2502 = vmatpush1.bf16.msra.mxu0 0
    %2503 = vmatprep.mubr.bf16.mxu0 0
    %2504 = vmatmul.mubr.bf16.gmra.mrb[0].mxu0 %v2470
    %v2505 = vpop.f32.mrb[0].mxu0
    %v2506 = vadd.f32 %v1130, %v2505
    %v2507 = vpop.f32.mrb[0].mxu0
    %v2508 = vpop.f32.mrb[0].mxu0
    %v2509 = vpop.f32.mrb[0].mxu0
    %2510 = vdwg.mxu0
    %v2511 = vpack.c.bf16 %v2343, %v2343
    %2512 = vmatprep.subr.bf16.mxu0 0
    %2513 = vmatpush1.bf16.msra.mxu0 %v1386
    %2514 = vmatprep.subr.bf16.mxu0 0
    %2515 = vmatpush1.bf16.msra.mxu0 %v1387
    %2516 = vmatprep.subr.bf16.mxu0 0
    %2517 = vmatpush1.bf16.msra.mxu0 %v1388
    %2518 = vmatprep.subr.bf16.mxu0 0
    %2519 = vmatpush1.bf16.msra.mxu0 %v1389
    %2520 = vmatprep.subr.bf16.mxu0 0
    %2521 = vmatpush1.bf16.msra.mxu0 %v1390
    %2522 = vmatprep.subr.bf16.mxu0 0
    %2523 = vmatpush1.bf16.msra.mxu0 %v1391
    %2524 = vmatprep.subr.bf16.mxu0 0
    %2525 = vmatpush1.bf16.msra.mxu0 %v1392
    %2526 = vmatprep.subr.bf16.mxu0 0
    %2527 = vmatpush1.bf16.msra.mxu0 %v1393
    %2528 = vmatprep.subr.bf16.mxu0 0
    %2529 = vmatpush1.bf16.msra.mxu0 0
    %2530 = vmatprep.subr.bf16.mxu0 0
    %2531 = vmatpush1.bf16.msra.mxu0 0
    %2532 = vmatprep.subr.bf16.mxu0 0
    %2533 = vmatpush1.bf16.msra.mxu0 0
    %2534 = vmatprep.subr.bf16.mxu0 0
    %2535 = vmatpush1.bf16.msra.mxu0 0
    %2536 = vmatprep.subr.bf16.mxu0 0
    %2537 = vmatpush1.bf16.msra.mxu0 0
    %2538 = vmatprep.subr.bf16.mxu0 0
    %2539 = vmatpush1.bf16.msra.mxu0 0
    %2540 = vmatprep.subr.bf16.mxu0 0
    %2541 = vmatpush1.bf16.msra.mxu0 0
    %2542 = vmatprep.subr.bf16.mxu0 0
    %2543 = vmatpush1.bf16.msra.mxu0 0
    %2544 = vmatprep.mubr.bf16.mxu0 0
    %2545 = vmatmul.mubr.bf16.gmra.mrb[0].mxu0 %v2511
    %v2546 = vpop.f32.mrb[0].mxu0
    %v2547 = vadd.f32 0.0, %v2546
    %v2548 = vpop.f32.mrb[0].mxu0
    %v2549 = vpop.f32.mrb[0].mxu0
    %v2550 = vpop.f32.mrb[0].mxu0
    %2551 = vdwg.mxu0
    %v2552 = vadd.f32 %v2506, %v2547
    %v2553 = vmax.f32 %v2552, 0.0
    %2554 = vmatprep.subr.bf16.mxu0 0
    %2555 = vmatpush1.bf16.msra.mxu0 %v1482
    %2556 = vmatprep.subr.bf16.mxu0 0
    %2557 = vmatpush1.bf16.msra.mxu0 %v1483
    %2558 = vmatprep.subr.bf16.mxu0 0
    %2559 = vmatpush1.bf16.msra.mxu0 %v1484
    %2560 = vmatprep.subr.bf16.mxu0 0
    %2561 = vmatpush1.bf16.msra.mxu0 %v1485
    %2562 = vmatprep.subr.bf16.mxu0 0
    %2563 = vmatpush1.bf16.msra.mxu0 %v1486
    %2564 = vmatprep.subr.bf16.mxu0 0
    %2565 = vmatpush1.bf16.msra.mxu0 %v1487
    %2566 = vmatprep.subr.bf16.mxu0 0
    %2567 = vmatpush1.bf16.msra.mxu0 %v1488
    %2568 = vmatprep.subr.bf16.mxu0 0
    %2569 = vmatpush1.bf16.msra.mxu0 %v1489
    %2570 = vmatprep.subr.bf16.mxu0 0
    %2571 = vmatpush1.bf16.msra.mxu0 0
    %2572 = vmatprep.subr.bf16.mxu0 0
    %2573 = vmatpush1.bf16.msra.mxu0 0
    %2574 = vmatprep.subr.bf16.mxu0 0
    %2575 = vmatpush1.bf16.msra.mxu0 0
    %2576 = vmatprep.subr.bf16.mxu0 0
    %2577 = vmatpush1.bf16.msra.mxu0 0
    %2578 = vmatprep.subr.bf16.mxu0 0
    %2579 = vmatpush1.bf16.msra.mxu0 0
    %2580 = vmatprep.subr.bf16.mxu0 0
    %2581 = vmatpush1.bf16.msra.mxu0 0
    %2582 = vmatprep.subr.bf16.mxu0 0
    %2583 = vmatpush1.bf16.msra.mxu0 0
    %2584 = vmatprep.subr.bf16.mxu0 0
    %2585 = vmatpush1.bf16.msra.mxu0 0
    %2586 = vmatprep.mubr.bf16.mxu0 0
    %2587 = vmatmul.mubr.bf16.gmra.mrb[0].mxu0 %v2511
    %v2588 = vpop.f32.mrb[0].mxu0
    %v2589 = vadd.f32 %v1448, %v2588
    %v2590 = vpop.f32.mrb[0].mxu0
    %v2591 = vpop.f32.mrb[0].mxu0
    %v2592 = vpop.f32.mrb[0].mxu0
    %2593 = vdwg.mxu0
    %v2594 = vpack.c.bf16 %v2426, %v2426
    %2595 = vmatprep.subr.bf16.mxu0 0
    %2596 = vmatpush1.bf16.msra.mxu0 %v1739
    %2597 = vmatprep.subr.bf16.mxu0 0
    %2598 = vmatpush1.bf16.msra.mxu0 %v1740
    %2599 = vmatprep.subr.bf16.mxu0 0
    %2600 = vmatpush1.bf16.msra.mxu0 %v1741
    %2601 = vmatprep.subr.bf16.mxu0 0
    %2602 = vmatpush1.bf16.msra.mxu0 %v1742
    %2603 = vmatprep.subr.bf16.mxu0 0
    %2604 = vmatpush1.bf16.msra.mxu0 %v1743
    %2605 = vmatprep.subr.bf16.mxu0 0
    %2606 = vmatpush1.bf16.msra.mxu0 %v1744
    %2607 = vmatprep.subr.bf16.mxu0 0
    %2608 = vmatpush1.bf16.msra.mxu0 %v1745
    %2609 = vmatprep.subr.bf16.mxu0 0
    %2610 = vmatpush1.bf16.msra.mxu0 %v1746
    %2611 = vmatprep.subr.bf16.mxu0 0
    %2612 = vmatpush1.bf16.msra.mxu0 0
    %2613 = vmatprep.subr.bf16.mxu0 0
    %2614 = vmatpush1.bf16.msra.mxu0 0
    %2615 = vmatprep.subr.bf16.mxu0 0
    %2616 = vmatpush1.bf16.msra.mxu0 0
    %2617 = vmatprep.subr.bf16.mxu0 0
    %2618 = vmatpush1.bf16.msra.mxu0 0
    %2619 = vmatprep.subr.bf16.mxu0 0
    %2620 = vmatpush1.bf16.msra.mxu0 0
    %2621 = vmatprep.subr.bf16.mxu0 0
    %2622 = vmatpush1.bf16.msra.mxu0 0
    %2623 = vmatprep.subr.bf16.mxu0 0
    %2624 = vmatpush1.bf16.msra.mxu0 0
    %2625 = vmatprep.subr.bf16.mxu0 0
    %2626 = vmatpush1.bf16.msra.mxu0 0
    %2627 = vmatprep.mubr.bf16.mxu0 0
    %2628 = vmatmul.mubr.bf16.gmra.mrb[0].mxu0 %v2594
    %v2629 = vpop.f32.mrb[0].mxu0
    %v2630 = vadd.f32 0.0, %v2629
    %v2631 = vpop.f32.mrb[0].mxu0
    %v2632 = vpop.f32.mrb[0].mxu0
    %v2633 = vpop.f32.mrb[0].mxu0
    %2634 = vdwg.mxu0
    %v2635 = vadd.f32 %v2589, %v2630
    %v2636 = vmax.f32 %v2635, 0.0
    %v2637 = vld [vmem:[#allocation2 + $0x38] sm:$0xff]
    %2638 = vmatprep.subr.bf16.mxu0 0
    %2639 = vmatpush1.bf16.msra.mxu0 %v1254
    %2640 = vmatprep.subr.bf16.mxu0 0
    %2641 = vmatpush1.bf16.msra.mxu0 %v1255
    %2642 = vmatprep.subr.bf16.mxu0 0
    %2643 = vmatpush1.bf16.msra.mxu0 %v1256
    %2644 = vmatprep.subr.bf16.mxu0 0
    %2645 = vmatpush1.bf16.msra.mxu0 %v1257
    %2646 = vmatprep.subr.bf16.mxu0 0
    %2647 = vmatpush1.bf16.msra.mxu0 %v1258
    %2648 = vmatprep.subr.bf16.mxu0 0
    %2649 = vmatpush1.bf16.msra.mxu0 %v1259
    %2650 = vmatprep.subr.bf16.mxu0 0
    %2651 = vmatpush1.bf16.msra.mxu0 %v1260
    %2652 = vmatprep.subr.bf16.mxu0 0
    %2653 = vmatpush1.bf16.msra.mxu0 %v1261
    %2654 = vmatprep.subr.bf16.mxu0 0
    %2655 = vmatpush1.bf16.msra.mxu0 0
    %2656 = vmatprep.subr.bf16.mxu0 0
    %2657 = vmatpush1.bf16.msra.mxu0 0
    %2658 = vmatprep.subr.bf16.mxu0 0
    %2659 = vmatpush1.bf16.msra.mxu0 0
    %2660 = vmatprep.subr.bf16.mxu0 0
    %2661 = vmatpush1.bf16.msra.mxu0 0
    %2662 = vmatprep.subr.bf16.mxu0 0
    %2663 = vmatpush1.bf16.msra.mxu0 0
    %2664 = vmatprep.subr.bf16.mxu0 0
    %2665 = vmatpush1.bf16.msra.mxu0 0
    %2666 = vmatprep.subr.bf16.mxu0 0
    %2667 = vmatpush1.bf16.msra.mxu0 0
    %2668 = vmatprep.subr.bf16.mxu0 0
    %2669 = vmatpush1.bf16.msra.mxu0 0
    %2670 = vmatprep.mubr.bf16.mxu0 0
    %2671 = vmatmul.mubr.bf16.gmra.mrb[0].mxu0 %v2470
    %v2672 = vpop.f32.mrb[0].mxu0
    %v2673 = vadd.f32 0.0, %v2672
    %v2674 = vpop.f32.mrb[0].mxu0
    %v2675 = vpop.f32.mrb[0].mxu0
    %v2676 = vpop.f32.mrb[0].mxu0
    %2677 = vdwg.mxu0
    %v2678 = vadd.f32 %v2637, %v2673
    %v2679 = vmax.f32 %v2678, 0.0
    %v2680 = vpack.c.bf16 %v2679, %v2679
    %2681 = vmatprep.subr.bf16.mxu0 0
    %2682 = vmatpush1.bf16.msra.mxu0 %v1164
    %2683 = vmatprep.subr.bf16.mxu0 0
    %2684 = vmatpush1.bf16.msra.mxu0 %v1165
    %2685 = vmatprep.subr.bf16.mxu0 0
    %2686 = vmatpush1.bf16.msra.mxu0 %v1166
    %2687 = vmatprep.subr.bf16.mxu0 0
    %2688 = vmatpush1.bf16.msra.mxu0 %v1167
    %2689 = vmatprep.subr.bf16.mxu0 0
    %2690 = vmatpush1.bf16.msra.mxu0 %v1168
    %2691 = vmatprep.subr.bf16.mxu0 0
    %2692 = vmatpush1.bf16.msra.mxu0 %v1169
    %2693 = vmatprep.subr.bf16.mxu0 0
    %2694 = vmatpush1.bf16.msra.mxu0 %v1170
    %2695 = vmatprep.subr.bf16.mxu0 0
    %2696 = vmatpush1.bf16.msra.mxu0 %v1171
    %2697 = vmatprep.subr.bf16.mxu0 0
    %2698 = vmatpush1.bf16.msra.mxu0 0
    %2699 = vmatprep.subr.bf16.mxu0 0
    %2700 = vmatpush1.bf16.msra.mxu0 0
    %2701 = vmatprep.subr.bf16.mxu0 0
    %2702 = vmatpush1.bf16.msra.mxu0 0
    %2703 = vmatprep.subr.bf16.mxu0 0
    %2704 = vmatpush1.bf16.msra.mxu0 0
    %2705 = vmatprep.subr.bf16.mxu0 0
    %2706 = vmatpush1.bf16.msra.mxu0 0
    %2707 = vmatprep.subr.bf16.mxu0 0
    %2708 = vmatpush1.bf16.msra.mxu0 0
    %2709 = vmatprep.subr.bf16.mxu0 0
    %2710 = vmatpush1.bf16.msra.mxu0 0
    %2711 = vmatprep.subr.bf16.mxu0 0
    %2712 = vmatpush1.bf16.msra.mxu0 0
    %2713 = vmatprep.mubr.bf16.mxu0 0
    %2714 = vmatmul.mubr.bf16.gmra.mrb[0].mxu0 %v2680
    %v2715 = vpop.f32.mrb[0].mxu0
    %v2716 = vadd.f32 %v1130, %v2715
    %v2717 = vpop.f32.mrb[0].mxu0
    %v2718 = vpop.f32.mrb[0].mxu0
    %v2719 = vpop.f32.mrb[0].mxu0
    %2720 = vdwg.mxu0
    %v2721 = vpack.c.bf16 %v2553, %v2553
    %2722 = vmatprep.subr.bf16.mxu0 0
    %2723 = vmatpush1.bf16.msra.mxu0 %v1386
    %2724 = vmatprep.subr.bf16.mxu0 0
    %2725 = vmatpush1.bf16.msra.mxu0 %v1387
    %2726 = vmatprep.subr.bf16.mxu0 0
    %2727 = vmatpush1.bf16.msra.mxu0 %v1388
    %2728 = vmatprep.subr.bf16.mxu0 0
    %2729 = vmatpush1.bf16.msra.mxu0 %v1389
    %2730 = vmatprep.subr.bf16.mxu0 0
    %2731 = vmatpush1.bf16.msra.mxu0 %v1390
    %2732 = vmatprep.subr.bf16.mxu0 0
    %2733 = vmatpush1.bf16.msra.mxu0 %v1391
    %2734 = vmatprep.subr.bf16.mxu0 0
    %2735 = vmatpush1.bf16.msra.mxu0 %v1392
    %2736 = vmatprep.subr.bf16.mxu0 0
    %2737 = vmatpush1.bf16.msra.mxu0 %v1393
    %2738 = vmatprep.subr.bf16.mxu0 0
    %2739 = vmatpush1.bf16.msra.mxu0 0
    %2740 = vmatprep.subr.bf16.mxu0 0
    %2741 = vmatpush1.bf16.msra.mxu0 0
    %2742 = vmatprep.subr.bf16.mxu0 0
    %2743 = vmatpush1.bf16.msra.mxu0 0
    %2744 = vmatprep.subr.bf16.mxu0 0
    %2745 = vmatpush1.bf16.msra.mxu0 0
    %2746 = vmatprep.subr.bf16.mxu0 0
    %2747 = vmatpush1.bf16.msra.mxu0 0
    %2748 = vmatprep.subr.bf16.mxu0 0
    %2749 = vmatpush1.bf16.msra.mxu0 0
    %2750 = vmatprep.subr.bf16.mxu0 0
    %2751 = vmatpush1.bf16.msra.mxu0 0
    %2752 = vmatprep.subr.bf16.mxu0 0
    %2753 = vmatpush1.bf16.msra.mxu0 0
    %2754 = vmatprep.mubr.bf16.mxu0 0
    %2755 = vmatmul.mubr.bf16.gmra.mrb[0].mxu0 %v2721
    %v2756 = vpop.f32.mrb[0].mxu0
    %v2757 = vadd.f32 0.0, %v2756
    %v2758 = vpop.f32.mrb[0].mxu0
    %v2759 = vpop.f32.mrb[0].mxu0
    %v2760 = vpop.f32.mrb[0].mxu0
    %2761 = vdwg.mxu0
    %v2762 = vadd.f32 %v2716, %v2757
    %v2763 = vmax.f32 %v2762, 0.0
    %2764 = vmatprep.subr.bf16.mxu0 0
    %2765 = vmatpush1.bf16.msra.mxu0 %v1482
    %2766 = vmatprep.subr.bf16.mxu0 0
    %2767 = vmatpush1.bf16.msra.mxu0 %v1483
    %2768 = vmatprep.subr.bf16.mxu0 0
    %2769 = vmatpush1.bf16.msra.mxu0 %v1484
    %2770 = vmatprep.subr.bf16.mxu0 0
    %2771 = vmatpush1.bf16.msra.mxu0 %v1485
    %2772 = vmatprep.subr.bf16.mxu0 0
    %2773 = vmatpush1.bf16.msra.mxu0 %v1486
    %2774 = vmatprep.subr.bf16.mxu0 0
    %2775 = vmatpush1.bf16.msra.mxu0 %v1487
    %2776 = vmatprep.subr.bf16.mxu0 0
    %2777 = vmatpush1.bf16.msra.mxu0 %v1488
    %2778 = vmatprep.subr.bf16.mxu0 0
    %2779 = vmatpush1.bf16.msra.mxu0 %v1489
    %2780 = vmatprep.subr.bf16.mxu0 0
    %2781 = vmatpush1.bf16.msra.mxu0 0
    %2782 = vmatprep.subr.bf16.mxu0 0
    %2783 = vmatpush1.bf16.msra.mxu0 0
    %2784 = vmatprep.subr.bf16.mxu0 0
    %2785 = vmatpush1.bf16.msra.mxu0 0
    %2786 = vmatprep.subr.bf16.mxu0 0
    %2787 = vmatpush1.bf16.msra.mxu0 0
    %2788 = vmatprep.subr.bf16.mxu0 0
    %2789 = vmatpush1.bf16.msra.mxu0 0
    %2790 = vmatprep.subr.bf16.mxu0 0
    %2791 = vmatpush1.bf16.msra.mxu0 0
    %2792 = vmatprep.subr.bf16.mxu0 0
    %2793 = vmatpush1.bf16.msra.mxu0 0
    %2794 = vmatprep.subr.bf16.mxu0 0
    %2795 = vmatpush1.bf16.msra.mxu0 0
    %2796 = vmatprep.mubr.bf16.mxu0 0
    %2797 = vmatmul.mubr.bf16.gmra.mrb[0].mxu0 %v2721
    %v2798 = vpop.f32.mrb[0].mxu0
    %v2799 = vadd.f32 %v1448, %v2798
    %v2800 = vpop.f32.mrb[0].mxu0
    %v2801 = vpop.f32.mrb[0].mxu0
    %v2802 = vpop.f32.mrb[0].mxu0
    %2803 = vdwg.mxu0
    %v2804 = vpack.c.bf16 %v2636, %v2636
    %2805 = vmatprep.subr.bf16.mxu0 0
    %2806 = vmatpush1.bf16.msra.mxu0 %v1739
    %2807 = vmatprep.subr.bf16.mxu0 0
    %2808 = vmatpush1.bf16.msra.mxu0 %v1740
    %2809 = vmatprep.subr.bf16.mxu0 0
    %2810 = vmatpush1.bf16.msra.mxu0 %v1741
    %2811 = vmatprep.subr.bf16.mxu0 0
    %2812 = vmatpush1.bf16.msra.mxu0 %v1742
    %2813 = vmatprep.subr.bf16.mxu0 0
    %2814 = vmatpush1.bf16.msra.mxu0 %v1743
    %2815 = vmatprep.subr.bf16.mxu0 0
    %2816 = vmatpush1.bf16.msra.mxu0 %v1744
    %2817 = vmatprep.subr.bf16.mxu0 0
    %2818 = vmatpush1.bf16.msra.mxu0 %v1745
    %2819 = vmatprep.subr.bf16.mxu0 0
    %2820 = vmatpush1.bf16.msra.mxu0 %v1746
    %2821 = vmatprep.subr.bf16.mxu0 0
    %2822 = vmatpush1.bf16.msra.mxu0 0
    %2823 = vmatprep.subr.bf16.mxu0 0
    %2824 = vmatpush1.bf16.msra.mxu0 0
    %2825 = vmatprep.subr.bf16.mxu0 0
    %2826 = vmatpush1.bf16.msra.mxu0 0
    %2827 = vmatprep.subr.bf16.mxu0 0
    %2828 = vmatpush1.bf16.msra.mxu0 0
    %2829 = vmatprep.subr.bf16.mxu0 0
    %2830 = vmatpush1.bf16.msra.mxu0 0
    %2831 = vmatprep.subr.bf16.mxu0 0
    %2832 = vmatpush1.bf16.msra.mxu0 0
    %2833 = vmatprep.subr.bf16.mxu0 0
    %2834 = vmatpush1.bf16.msra.mxu0 0
    %2835 = vmatprep.subr.bf16.mxu0 0
    %2836 = vmatpush1.bf16.msra.mxu0 0
    %2837 = vmatprep.mubr.bf16.mxu0 0
    %2838 = vmatmul.mubr.bf16.gmra.mrb[0].mxu0 %v2804
    %v2839 = vpop.f32.mrb[0].mxu0
    %v2840 = vadd.f32 0.0, %v2839
    %v2841 = vpop.f32.mrb[0].mxu0
    %v2842 = vpop.f32.mrb[0].mxu0
    %v2843 = vpop.f32.mrb[0].mxu0
    %2844 = vdwg.mxu0
    %v2845 = vadd.f32 %v2799, %v2840
    %v2846 = vmax.f32 %v2845, 0.0
    %v2847 = vpack.c.bf16 %v2763, %v2763
    %2848 = vmatprep.subr.bf16.mxu0 0
    %2849 = vmatpush1.bf16.msra.mxu0 %v1482
    %2850 = vmatprep.subr.bf16.mxu0 0
    %2851 = vmatpush1.bf16.msra.mxu0 %v1483
    %2852 = vmatprep.subr.bf16.mxu0 0
    %2853 = vmatpush1.bf16.msra.mxu0 %v1484
    %2854 = vmatprep.subr.bf16.mxu0 0
    %2855 = vmatpush1.bf16.msra.mxu0 %v1485
    %2856 = vmatprep.subr.bf16.mxu0 0
    %2857 = vmatpush1.bf16.msra.mxu0 %v1486
    %2858 = vmatprep.subr.bf16.mxu0 0
    %2859 = vmatpush1.bf16.msra.mxu0 %v1487
    %2860 = vmatprep.subr.bf16.mxu0 0
    %2861 = vmatpush1.bf16.msra.mxu0 %v1488
    %2862 = vmatprep.subr.bf16.mxu0 0
    %2863 = vmatpush1.bf16.msra.mxu0 %v1489
    %2864 = vmatprep.subr.bf16.mxu0 0
    %2865 = vmatpush1.bf16.msra.mxu0 0
    %2866 = vmatprep.subr.bf16.mxu0 0
    %2867 = vmatpush1.bf16.msra.mxu0 0
    %2868 = vmatprep.subr.bf16.mxu0 0
    %2869 = vmatpush1.bf16.msra.mxu0 0
    %2870 = vmatprep.subr.bf16.mxu0 0
    %2871 = vmatpush1.bf16.msra.mxu0 0
    %2872 = vmatprep.subr.bf16.mxu0 0
    %2873 = vmatpush1.bf16.msra.mxu0 0
    %2874 = vmatprep.subr.bf16.mxu0 0
    %2875 = vmatpush1.bf16.msra.mxu0 0
    %2876 = vmatprep.subr.bf16.mxu0 0
    %2877 = vmatpush1.bf16.msra.mxu0 0
    %2878 = vmatprep.subr.bf16.mxu0 0
    %2879 = vmatpush1.bf16.msra.mxu0 0
    %2880 = vmatprep.mubr.bf16.mxu0 0
    %2881 = vmatmul.mubr.bf16.gmra.mrb[0].mxu0 %v2847
    %v2882 = vpop.f32.mrb[0].mxu0
    %v2883 = vadd.f32 %v1448, %v2882
    %v2884 = vpop.f32.mrb[0].mxu0
    %v2885 = vpop.f32.mrb[0].mxu0
    %v2886 = vpop.f32.mrb[0].mxu0
    %2887 = vdwg.mxu0
    %v2888 = vpack.c.bf16 %v2846, %v2846
    %2889 = vmatprep.subr.bf16.mxu0 0
    %2890 = vmatpush1.bf16.msra.mxu0 %v1739
    %2891 = vmatprep.subr.bf16.mxu0 0
    %2892 = vmatpush1.bf16.msra.mxu0 %v1740
    %2893 = vmatprep.subr.bf16.mxu0 0
    %2894 = vmatpush1.bf16.msra.mxu0 %v1741
    %2895 = vmatprep.subr.bf16.mxu0 0
    %2896 = vmatpush1.bf16.msra.mxu0 %v1742
    %2897 = vmatprep.subr.bf16.mxu0 0
    %2898 = vmatpush1.bf16.msra.mxu0 %v1743
    %2899 = vmatprep.subr.bf16.mxu0 0
    %2900 = vmatpush1.bf16.msra.mxu0 %v1744
    %2901 = vmatprep.subr.bf16.mxu0 0
    %2902 = vmatpush1.bf16.msra.mxu0 %v1745
    %2903 = vmatprep.subr.bf16.mxu0 0
    %2904 = vmatpush1.bf16.msra.mxu0 %v1746
    %2905 = vmatprep.subr.bf16.mxu0 0
    %2906 = vmatpush1.bf16.msra.mxu0 0
    %2907 = vmatprep.subr.bf16.mxu0 0
    %2908 = vmatpush1.bf16.msra.mxu0 0
    %2909 = vmatprep.subr.bf16.mxu0 0
    %2910 = vmatpush1.bf16.msra.mxu0 0
    %2911 = vmatprep.subr.bf16.mxu0 0
    %2912 = vmatpush1.bf16.msra.mxu0 0
    %2913 = vmatprep.subr.bf16.mxu0 0
    %2914 = vmatpush1.bf16.msra.mxu0 0
    %2915 = vmatprep.subr.bf16.mxu0 0
    %2916 = vmatpush1.bf16.msra.mxu0 0
    %2917 = vmatprep.subr.bf16.mxu0 0
    %2918 = vmatpush1.bf16.msra.mxu0 0
    %2919 = vmatprep.subr.bf16.mxu0 0
    %2920 = vmatpush1.bf16.msra.mxu0 0
    %2921 = vmatprep.mubr.bf16.mxu0 0
    %2922 = vmatmul.mubr.bf16.gmra.mrb[0].mxu0 %v2888
    %v2923 = vpop.f32.mrb[0].mxu0
    %v2924 = vadd.f32 0.0, %v2923
    %v2925 = vpop.f32.mrb[0].mxu0
    %v2926 = vpop.f32.mrb[0].mxu0
    %v2927 = vpop.f32.mrb[0].mxu0
    %2928 = vdwg.mxu0
    %v2929 = vadd.f32 %v2883, %v2924
    %v2930 = vmax.f32 %v2929, 0.0
    %v2931 = vld [vmem:[#allocation11] sm:$0xf]
    %v2932 = vld [vmem:[#allocation11 + $0x4] sm:$0xf]
    %v2933 = vld [vmem:[#allocation11 + $0x8] sm:$0xf]
    %v2934 = vld [vmem:[#allocation11 + $0xc] sm:$0xf]
    %v2935 = vld [vmem:[#allocation11 + $0x10] sm:$0xf]
    %v2936 = vld [vmem:[#allocation11 + $0x14] sm:$0xf]
    %v2937 = vld [vmem:[#allocation11 + $0x18] sm:$0xf]
    %v2938 = vld [vmem:[#allocation11 + $0x1c] sm:$0xf]
    %v2939 = vld [vmem:[#allocation11 + $0x20] sm:$0xf]
    %v2940 = vld [vmem:[#allocation11 + $0x24] sm:$0xf]
    %v2941 = vld [vmem:[#allocation11 + $0x28] sm:$0xf]
    %v2942 = vld [vmem:[#allocation11 + $0x2c] sm:$0xf]
    %v2943 = vld [vmem:[#allocation11 + $0x30] sm:$0xf]
    %v2944 = vld [vmem:[#allocation11 + $0x34] sm:$0xf]
    %v2945 = vld [vmem:[#allocation11 + $0x38] sm:$0xf]
    %v2946 = vld [vmem:[#allocation11 + $0x3c] sm:$0xf]
    %v2947 = vld [vmem:[#allocation13] sm:$0xf]
    %v2948 = vld [vmem:[#allocation13 + $0x4] sm:$0xf]
    %v2949 = vld [vmem:[#allocation13 + $0x8] sm:$0xf]
    %v2950 = vld [vmem:[#allocation13 + $0xc] sm:$0xf]
    %v2951 = vld [vmem:[#allocation13 + $0x10] sm:$0xf]
    %v2952 = vld [vmem:[#allocation13 + $0x14] sm:$0xf]
    %v2953 = vld [vmem:[#allocation13 + $0x18] sm:$0xf]
    %v2954 = vld [vmem:[#allocation13 + $0x1c] sm:$0xf]
    %v2955 = vld [vmem:[#allocation13 + $0x20] sm:$0xf]
    %v2956 = vld [vmem:[#allocation13 + $0x24] sm:$0xf]
    %v2957 = vld [vmem:[#allocation13 + $0x28] sm:$0xf]
    %v2958 = vld [vmem:[#allocation13 + $0x2c] sm:$0xf]
    %v2959 = vld [vmem:[#allocation13 + $0x30] sm:$0xf]
    %v2960 = vld [vmem:[#allocation13 + $0x34] sm:$0xf]
    %v2961 = vld [vmem:[#allocation13 + $0x38] sm:$0xf]
    %v2962 = vld [vmem:[#allocation13 + $0x3c] sm:$0xf]
    %v2963 = vld [vmem:[%s12] sm:$0x1]
    %v2965 = vlaneseq
    %v2966 = vshrl.u32 %v2965, 7
    %v2967 = vsub.s32 0, %v2966
    %v2968 = vrot.slane %v2963, %v2967
    %v2986 = vunpack.c.l.b16 %v2931
    %v2987 = vunpack.c.l.b16 %v2932
    %v2988 = vunpack.c.l.b16 %v2933
    %v2989 = vunpack.c.l.b16 %v2934
    %v2990 = vunpack.c.l.b16 %v2935
    %v2991 = vunpack.c.l.b16 %v2936
    %v2992 = vunpack.c.l.b16 %v2937
    %v2993 = vunpack.c.l.b16 %v2938
    %v2994 = vunpack.c.l.b16 %v2939
    %v2995 = vunpack.c.l.b16 %v2940
    %v2996 = vunpack.c.l.b16 %v2941
    %v2997 = vunpack.c.l.b16 %v2942
    %v2998 = vunpack.c.l.b16 %v2943
    %v2999 = vunpack.c.l.b16 %v2944
    %v3000 = vunpack.c.l.b16 %v2945
    %v3001 = vunpack.c.l.b16 %v2946
    %v3002 = vpack.c.b16 %v2987, %v2986
    %v3003 = vpack.c.b16 %v2989, %v2988
    %v3004 = vpack.c.b16 %v2991, %v2990
    %v3005 = vpack.c.b16 %v2993, %v2992
    %v3006 = vpack.c.b16 %v2995, %v2994
    %v3007 = vpack.c.b16 %v2997, %v2996
    %v3008 = vpack.c.b16 %v2999, %v2998
    %v3009 = vpack.c.b16 %v3001, %v3000
    %3018 = vmatprep.subr.bf16.mxu0 0
    %3019 = vmatpush1.bf16.msra.mxu0 %v3002
    %3020 = vmatprep.subr.bf16.mxu0 0
    %3021 = vmatpush1.bf16.msra.mxu0 %v3003
    %3022 = vmatprep.subr.bf16.mxu0 0
    %3023 = vmatpush1.bf16.msra.mxu0 %v3004
    %3024 = vmatprep.subr.bf16.mxu0 0
    %3025 = vmatpush1.bf16.msra.mxu0 %v3005
    %3026 = vmatprep.subr.bf16.mxu0 0
    %3027 = vmatpush1.bf16.msra.mxu0 %v3006
    %3028 = vmatprep.subr.bf16.mxu0 0
    %3029 = vmatpush1.bf16.msra.mxu0 %v3007
    %3030 = vmatprep.subr.bf16.mxu0 0
    %3031 = vmatpush1.bf16.msra.mxu0 %v3008
    %3032 = vmatprep.subr.bf16.mxu0 0
    %3033 = vmatpush1.bf16.msra.mxu0 %v3009
    %3034 = vmatprep.subr.bf16.mxu0 0
    %3035 = vmatpush1.bf16.msra.mxu0 0
    %3036 = vmatprep.subr.bf16.mxu0 0
    %3037 = vmatpush1.bf16.msra.mxu0 0
    %3038 = vmatprep.subr.bf16.mxu0 0
    %3039 = vmatpush1.bf16.msra.mxu0 0
    %3040 = vmatprep.subr.bf16.mxu0 0
    %3041 = vmatpush1.bf16.msra.mxu0 0
    %3042 = vmatprep.subr.bf16.mxu0 0
    %3043 = vmatpush1.bf16.msra.mxu0 0
    %3044 = vmatprep.subr.bf16.mxu0 0
    %3045 = vmatpush1.bf16.msra.mxu0 0
    %3046 = vmatprep.subr.bf16.mxu0 0
    %3047 = vmatpush1.bf16.msra.mxu0 0
    %3048 = vmatprep.subr.bf16.mxu0 0
    %3049 = vmatpush1.bf16.msra.mxu0 0
    %3050 = vmatprep.mubr.bf16.mxu0 0
    %3051 = vmatmul.mubr.bf16.gmra.mrb[0].mxu0 %v2680
    %v3052 = vpop.f32.mrb[0].mxu0
    %v3053 = vadd.f32 %v2968, %v3052
    %v3054 = vpop.f32.mrb[0].mxu0
    %v3055 = vpop.f32.mrb[0].mxu0
    %v3056 = vpop.f32.mrb[0].mxu0
    %3057 = vdwg.mxu0
    %3058 = vmatprep.subr.bf16.mxu0 0
    %3059 = vmatpush1.bf16.msra.mxu0 %v3002
    %3060 = vmatprep.subr.bf16.mxu0 0
    %3061 = vmatpush1.bf16.msra.mxu0 %v3003
    %3062 = vmatprep.subr.bf16.mxu0 0
    %3063 = vmatpush1.bf16.msra.mxu0 %v3004
    %3064 = vmatprep.subr.bf16.mxu0 0
    %3065 = vmatpush1.bf16.msra.mxu0 %v3005
    %3066 = vmatprep.subr.bf16.mxu0 0
    %3067 = vmatpush1.bf16.msra.mxu0 %v3006
    %3068 = vmatprep.subr.bf16.mxu0 0
    %3069 = vmatpush1.bf16.msra.mxu0 %v3007
    %3070 = vmatprep.subr.bf16.mxu0 0
    %3071 = vmatpush1.bf16.msra.mxu0 %v3008
    %3072 = vmatprep.subr.bf16.mxu0 0
    %3073 = vmatpush1.bf16.msra.mxu0 %v3009
    %3074 = vmatprep.subr.bf16.mxu0 0
    %3075 = vmatpush1.bf16.msra.mxu0 0
    %3076 = vmatprep.subr.bf16.mxu0 0
    %3077 = vmatpush1.bf16.msra.mxu0 0
    %3078 = vmatprep.subr.bf16.mxu0 0
    %3079 = vmatpush1.bf16.msra.mxu0 0
    %3080 = vmatprep.subr.bf16.mxu0 0
    %3081 = vmatpush1.bf16.msra.mxu0 0
    %3082 = vmatprep.subr.bf16.mxu0 0
    %3083 = vmatpush1.bf16.msra.mxu0 0
    %3084 = vmatprep.subr.bf16.mxu0 0
    %3085 = vmatpush1.bf16.msra.mxu0 0
    %3086 = vmatprep.subr.bf16.mxu0 0
    %3087 = vmatpush1.bf16.msra.mxu0 0
    %3088 = vmatprep.subr.bf16.mxu0 0
    %3089 = vmatpush1.bf16.msra.mxu0 0
    %3090 = vmatprep.mubr.bf16.mxu0 0
    %3091 = vmatmul.mubr.bf16.gmra.mrb[0].mxu0 %v2847
    %v3092 = vpop.f32.mrb[0].mxu0
    %v3093 = vadd.f32 %v2968, %v3092
    %v3094 = vpop.f32.mrb[0].mxu0
    %v3095 = vpop.f32.mrb[0].mxu0
    %v3096 = vpop.f32.mrb[0].mxu0
    %3097 = vdwg.mxu0
    %v3098 = vpack.c.bf16 %v2930, %v2930
    %3099 = vmatprep.subr.bf16.mxu0 0
    %3100 = vmatpush1.bf16.msra.mxu0 %v3002
    %3101 = vmatprep.subr.bf16.mxu0 0
    %3102 = vmatpush1.bf16.msra.mxu0 %v3003
    %3103 = vmatprep.subr.bf16.mxu0 0
    %3104 = vmatpush1.bf16.msra.mxu0 %v3004
    %3105 = vmatprep.subr.bf16.mxu0 0
    %3106 = vmatpush1.bf16.msra.mxu0 %v3005
    %3107 = vmatprep.subr.bf16.mxu0 0
    %3108 = vmatpush1.bf16.msra.mxu0 %v3006
    %3109 = vmatprep.subr.bf16.mxu0 0
    %3110 = vmatpush1.bf16.msra.mxu0 %v3007
    %3111 = vmatprep.subr.bf16.mxu0 0
    %3112 = vmatpush1.bf16.msra.mxu0 %v3008
    %3113 = vmatprep.subr.bf16.mxu0 0
    %3114 = vmatpush1.bf16.msra.mxu0 %v3009
    %3115 = vmatprep.subr.bf16.mxu0 0
    %3116 = vmatpush1.bf16.msra.mxu0 0
    %3117 = vmatprep.subr.bf16.mxu0 0
    %3118 = vmatpush1.bf16.msra.mxu0 0
    %3119 = vmatprep.subr.bf16.mxu0 0
    %3120 = vmatpush1.bf16.msra.mxu0 0
    %3121 = vmatprep.subr.bf16.mxu0 0
    %3122 = vmatpush1.bf16.msra.mxu0 0
    %3123 = vmatprep.subr.bf16.mxu0 0
    %3124 = vmatpush1.bf16.msra.mxu0 0
    %3125 = vmatprep.subr.bf16.mxu0 0
    %3126 = vmatpush1.bf16.msra.mxu0 0
    %3127 = vmatprep.subr.bf16.mxu0 0
    %3128 = vmatpush1.bf16.msra.mxu0 0
    %3129 = vmatprep.subr.bf16.mxu0 0
    %3130 = vmatpush1.bf16.msra.mxu0 0
    %3131 = vmatprep.mubr.bf16.mxu0 0
    %3132 = vmatmul.mubr.bf16.gmra.mrb[0].mxu0 %v3098
    %v3133 = vpop.f32.mrb[0].mxu0
    %v3134 = vadd.f32 %v2968, %v3133
    %v3135 = vpop.f32.mrb[0].mxu0
    %v3136 = vpop.f32.mrb[0].mxu0
    %v3137 = vpop.f32.mrb[0].mxu0
    %3138 = vdwg.mxu0
    %v3139 = vmax.f32 %v3053, 0.0
    %v3140 = vpack.c.bf16 %v3139, %v3139
    %v3157 = vunpack.c.l.b16 %v2947
    %v3158 = vunpack.c.l.b16 %v2948
    %v3159 = vunpack.c.l.b16 %v2949
    %v3160 = vunpack.c.l.b16 %v2950
    %v3161 = vunpack.c.l.b16 %v2951
    %v3162 = vunpack.c.l.b16 %v2952
    %v3163 = vunpack.c.l.b16 %v2953
    %v3164 = vunpack.c.l.b16 %v2954
    %v3165 = vunpack.c.l.b16 %v2955
    %v3166 = vunpack.c.l.b16 %v2956
    %v3167 = vunpack.c.l.b16 %v2957
    %v3168 = vunpack.c.l.b16 %v2958
    %v3169 = vunpack.c.l.b16 %v2959
    %v3170 = vunpack.c.l.b16 %v2960
    %v3171 = vunpack.c.l.b16 %v2961
    %v3172 = vunpack.c.l.b16 %v2962
    %v3173 = vpack.c.b16 %v3158, %v3157
    %v3174 = vpack.c.b16 %v3160, %v3159
    %v3175 = vpack.c.b16 %v3162, %v3161
    %v3176 = vpack.c.b16 %v3164, %v3163
    %v3177 = vpack.c.b16 %v3166, %v3165
    %v3178 = vpack.c.b16 %v3168, %v3167
    %v3179 = vpack.c.b16 %v3170, %v3169
    %v3180 = vpack.c.b16 %v3172, %v3171
    %3189 = vmatprep.subr.bf16.mxu0 0
    %3190 = vmatpush1.bf16.msra.mxu0 %v3173
    %3191 = vmatprep.subr.bf16.mxu0 0
    %3192 = vmatpush1.bf16.msra.mxu0 %v3174
    %3193 = vmatprep.subr.bf16.mxu0 0
    %3194 = vmatpush1.bf16.msra.mxu0 %v3175
    %3195 = vmatprep.subr.bf16.mxu0 0
    %3196 = vmatpush1.bf16.msra.mxu0 %v3176
    %3197 = vmatprep.subr.bf16.mxu0 0
    %3198 = vmatpush1.bf16.msra.mxu0 %v3177
    %3199 = vmatprep.subr.bf16.mxu0 0
    %3200 = vmatpush1.bf16.msra.mxu0 %v3178
    %3201 = vmatprep.subr.bf16.mxu0 0
    %3202 = vmatpush1.bf16.msra.mxu0 %v3179
    %3203 = vmatprep.subr.bf16.mxu0 0
    %3204 = vmatpush1.bf16.msra.mxu0 %v3180
    %3205 = vmatprep.subr.bf16.mxu0 0
    %3206 = vmatpush1.bf16.msra.mxu0 0
    %3207 = vmatprep.subr.bf16.mxu0 0
    %3208 = vmatpush1.bf16.msra.mxu0 0
    %3209 = vmatprep.subr.bf16.mxu0 0
    %3210 = vmatpush1.bf16.msra.mxu0 0
    %3211 = vmatprep.subr.bf16.mxu0 0
    %3212 = vmatpush1.bf16.msra.mxu0 0
    %3213 = vmatprep.subr.bf16.mxu0 0
    %3214 = vmatpush1.bf16.msra.mxu0 0
    %3215 = vmatprep.subr.bf16.mxu0 0
    %3216 = vmatpush1.bf16.msra.mxu0 0
    %3217 = vmatprep.subr.bf16.mxu0 0
    %3218 = vmatpush1.bf16.msra.mxu0 0
    %3219 = vmatprep.subr.bf16.mxu0 0
    %3220 = vmatpush1.bf16.msra.mxu0 0
    %3221 = vmatprep.mubr.bf16.mxu0 0
    %3222 = vmatmul.mubr.bf16.gmra.mrb[0].mxu0 %v3140
    %v3223 = vpop.f32.mrb[0].mxu0
    %v3224 = vadd.f32 0.0, %v3223
    %v3225 = vpop.f32.mrb[0].mxu0
    %v3226 = vpop.f32.mrb[0].mxu0
    %v3227 = vpop.f32.mrb[0].mxu0
    %3228 = vdwg.mxu0
    %v3229 = vadd.f32 %v3093, %v3224
    %v3230 = vmax.f32 %v3229, 0.0
    %v3231 = vpack.c.bf16 %v3230, %v3230
    %3232 = vmatprep.subr.bf16.mxu0 0
    %3233 = vmatpush1.bf16.msra.mxu0 %v3173
    %3234 = vmatprep.subr.bf16.mxu0 0
    %3235 = vmatpush1.bf16.msra.mxu0 %v3174
    %3236 = vmatprep.subr.bf16.mxu0 0
    %3237 = vmatpush1.bf16.msra.mxu0 %v3175
    %3238 = vmatprep.subr.bf16.mxu0 0
    %3239 = vmatpush1.bf16.msra.mxu0 %v3176
    %3240 = vmatprep.subr.bf16.mxu0 0
    %3241 = vmatpush1.bf16.msra.mxu0 %v3177
    %3242 = vmatprep.subr.bf16.mxu0 0
    %3243 = vmatpush1.bf16.msra.mxu0 %v3178
    %3244 = vmatprep.subr.bf16.mxu0 0
    %3245 = vmatpush1.bf16.msra.mxu0 %v3179
    %3246 = vmatprep.subr.bf16.mxu0 0
    %3247 = vmatpush1.bf16.msra.mxu0 %v3180
    %3248 = vmatprep.subr.bf16.mxu0 0
    %3249 = vmatpush1.bf16.msra.mxu0 0
    %3250 = vmatprep.subr.bf16.mxu0 0
    %3251 = vmatpush1.bf16.msra.mxu0 0
    %3252 = vmatprep.subr.bf16.mxu0 0
    %3253 = vmatpush1.bf16.msra.mxu0 0
    %3254 = vmatprep.subr.bf16.mxu0 0
    %3255 = vmatpush1.bf16.msra.mxu0 0
    %3256 = vmatprep.subr.bf16.mxu0 0
    %3257 = vmatpush1.bf16.msra.mxu0 0
    %3258 = vmatprep.subr.bf16.mxu0 0
    %3259 = vmatpush1.bf16.msra.mxu0 0
    %3260 = vmatprep.subr.bf16.mxu0 0
    %3261 = vmatpush1.bf16.msra.mxu0 0
    %3262 = vmatprep.subr.bf16.mxu0 0
    %3263 = vmatpush1.bf16.msra.mxu0 0
    %3264 = vmatprep.mubr.bf16.mxu0 0
    %3265 = vmatmul.mubr.bf16.gmra.mrb[0].mxu0 %v3231
    %v3266 = vpop.f32.mrb[0].mxu0
    %v3267 = vadd.f32 0.0, %v3266
    %v3268 = vpop.f32.mrb[0].mxu0
    %v3269 = vpop.f32.mrb[0].mxu0
    %v3270 = vpop.f32.mrb[0].mxu0
    %3271 = vdwg.mxu0
    %v3272 = vadd.f32 %v3134, %v3267
    %v3273 = vmax.f32 %v3272, 0.0
    %3274 = vst [vmem:[%s13] sm:$0xff] %v3139
    %3275 = vst [vmem:[%s13 + $0x8] sm:$0xff] %v3230
    %3276 = vst [vmem:[%s13 + $0x10] sm:$0xff] %v3273
    %3277 = vst [vmem:[%s14] sm:$0xff] %v3273
    // Predicated region
    $region82: #{rnn_model_forward.1} parent=1 // pred_check
      _
    $region83: #{rnn_model_forward.1} parent=1 // pred_check_branch
      %3279 = sbr.rel (0) target = $region85
    $region84: #{rnn_model_forward.1} parent=1 // pred_region
      _
    $region85: #{rnn_model_forward.1} parent=1 // pred_fallthru
      _
    // Predicated region
    $region86: #{rnn_model_forward.1} parent=1 // pred_check
      _
    $region87: #{rnn_model_forward.1} parent=1 // pred_check_branch
      %3281 = sbr.rel (0) target = $region89
    $region88: #{rnn_model_forward.1} parent=1 // pred_region
      _
    $region89: #{rnn_model_forward.1} parent=1 // pred_fallthru
      _
    // Predicated region
    $region90: #{rnn_model_forward.1} parent=1 // pred_check
      _
    $region91: #{rnn_model_forward.1} parent=1 // pred_check_branch
      %3283 = sbr.rel (0) target = $region93
    $region92: #{rnn_model_forward.1} parent=1 // pred_region
      _
    $region93: #{rnn_model_forward.1} parent=1 // pred_fallthru
      _
    // Predicated region
    $region94: #{rnn_model_forward.1} parent=1 // pred_check
      _
    $region95: #{rnn_model_forward.1} parent=1 // pred_check_branch
      %3285 = sbr.rel (0) target = $region97
    $region96: #{rnn_model_forward.1} parent=1 // pred_region
      _
    $region97: #{rnn_model_forward.1} parent=1 // pred_fallthru
      _
    %3286 = vsyncpa [#allocation4], 1
    %3287 = vsyncpa [#allocation6], 1
    %3288 = vsyncpa [#allocation9], 1
    %3289 = vsyncpa [#allocation12], 1

</llo_original>
